<compile_context>
chip_gen: v6e
topology: v6e:2x2x1
jax: 0.10.0
libtpu: 0.0.40
codegen_flags: <defaults>
</compile_context>

<pallas_src>
import functools
import math

import jax
import jax.numpy as jnp
import numpy as np
from jax.experimental import pallas as pl
from jax.experimental.pallas import tpu as pltpu

_VMEM_LIMIT = 48 * 1024 * 1024  # explicit scoped-VMEM budget (headroom on v7x)


# ----------------------------------------------------------------------------
# tiling helpers
# ----------------------------------------------------------------------------
def _round_up(n, m):
    return ((n + m - 1) // m) * m


def _row_plan(n, max_tile=256):
    """Row tile (<=256, multiple of 8) and padded row count."""
    tile = min(max_tile, _round_up(n, 8))
    return tile, _round_up(n, tile)


def _col_tile(m, max_tile=512):
    if m <= max_tile:
        return m
    for t in (512, 256, 128):
        if m % t == 0:
            return t
    return m


def _h4_chunk(h4):
    """Chunk size for the 4H axis of the FFN (keeps weight slices in VMEM)."""
    for t in (512, 256, 128):
        if t < h4 and h4 % t == 0:
            return t
    return h4


def _attn_q_tile(s):
    """Query tile for the attention grid (full S if no clean divisor)."""
    for t in (256, 128):
        if s > t and s % t == 0:
            return t
    return s


def _pad_rows(x, n_pad):
    n = x.shape[0]
    if n_pad == n:
        return x
    return jnp.pad(x, ((0, n_pad - n), (0, 0)))


def _elu(x):
    return jnp.where(x > 0, x, jnp.exp(x) - 1.0)


# ----------------------------------------------------------------------------
# kernel bodies
# ----------------------------------------------------------------------------
def _dense_kernel(x_ref, w_ref, b_ref, o_ref, *, activation):
    """o = act(x @ W + b); W is bf16, accumulate in f32 on the MXU."""
    y = jnp.dot(x_ref[...].astype(jnp.bfloat16), w_ref[...],
                preferred_element_type=jnp.float32)
    y = y + b_ref[...]
    if activation == "elu_plus_one":
        y = _elu(y) + 1.0
    o_ref[...] = y


def _dense_res_ln_kernel(x_ref, r_ref, w_ref, b_ref, g_ref, beta_ref, o_ref,
                         *, eps):
    """o = LayerNorm(x @ W + b + residual); one-pass stats + rsqrt."""
    y = jnp.dot(x_ref[...].astype(jnp.bfloat16), w_ref[...],
                preferred_element_type=jnp.float32)
    z = y + b_ref[...] + r_ref[...]
    mu = jnp.mean(z, axis=-1, keepdims=True)
    m2 = jnp.mean(z * z, axis=-1, keepdims=True)
    zn = (z - mu) * jax.lax.rsqrt((m2 - mu * mu) + eps)
    o_ref[...] = g_ref[...] * zn + beta_ref[...]


def _ffn_kernel(x_ref, w1_ref, b1_ref, w2_ref, b2_ref, g_ref, beta_ref, o_ref,
                y_acc, *, eps, final_elu):
    """DistIntermediate with the 4H dimension chunked over grid axis 1."""
    c = pl.program_id(1)
    nc = pl.num_programs(1)

    @pl.when(c == 0)
    def _():
        y_acc[...] = jnp.zeros_like(y_acc)

    x = x_ref[...]                                            # (tile_n, H) f32

    # dense_1 chunk: H -> tile_c  (bf16 MXU, f32 accumulate), then ELU
    h = jnp.dot(x.astype(jnp.bfloat16), w1_ref[...],
                preferred_element_type=jnp.float32) + b1_ref[...]
    h = _elu(h)

    # dense_2 chunk: tile_c -> H, accumulated in VMEM f32 scratch
    y_acc[...] += jnp.dot(h.astype(jnp.bfloat16), w2_ref[...],
                          preferred_element_type=jnp.float32)

    @pl.when(c == nc - 1)
    def _():
        # dropout is identity at inference; residual + LayerNorm epilogue (f32)
        z = y_acc[...] + b2_ref[...] + x
        mu = jnp.mean(z, axis=-1, keepdims=True)
        m2 = jnp.mean(z * z, axis=-1, keepdims=True)
        zn = (z - mu) * jax.lax.rsqrt((m2 - mu * mu) + eps)
        out = g_ref[...] * zn + beta_ref[...]
        if final_elu:                       # DistLayer cov branch: ELU(.) + 1
            out = _elu(out) + 1.0
        o_ref[...] = out


def _dist_attn_kernel(mask_ref, mq_ref, cq_ref, mk_ref, ck_ref, mv_ref, cv_ref,
                      mc_ref, cc_ref, p_ref, *, scale):
    """One (batch, head, q-tile) block of distribution attention (wasserstein)."""
    mq = mq_ref[0, 0]                                          # (tq, D)
    cq = cq_ref[0, 0]
    mk = mk_ref[0, 0]                                          # (S, D)
    ck = ck_ref[0, 0]
    mv = mv_ref[0, 0]
    cv = cv_ref[0, 0]
    mask = mask_ref[0, 0]                                      # (1, S)

    d = mq.shape[-1]
    dn = (((1,), (1,)), ((), ()))          # contract last dims: (tq,D)x(S,D)->(tq,S)
    ones_row = jnp.ones((1, d), jnp.float32)

    # wasserstein_distance_matmul, all f32
    mean_dot = jax.lax.dot_general(mq, mk, dn, preferred_element_type=jnp.float32)
    q_sq = jnp.sum(mq * mq, axis=-1, keepdims=True)                        # (tq,1)
    k_sq = jax.lax.dot_general(ones_row, mk * mk, dn,
                               preferred_element_type=jnp.float32)         # (1,S)
    dist = -2.0 * mean_dot + q_sq + k_sq

    cq_s = jnp.sqrt(jnp.maximum(cq, 1e-24))
    ck_s = jnp.sqrt(jnp.maximum(ck, 1e-24))
    cov_dot = jax.lax.dot_general(cq_s, ck_s, dn, preferred_element_type=jnp.float32)
    q_c = jnp.sum(cq, axis=-1, keepdims=True)                              # (tq,1)
    k_c = jax.lax.dot_general(ones_row, ck, dn,
                              preferred_element_type=jnp.float32)          # (1,S)
    dist = dist + (-2.0 * cov_dot + q_c + k_c)

    scores = -dist * scale + mask
    scores = scores - jnp.max(scores, axis=-1, keepdims=True)
    e = jnp.exp(scores)
    denom = jnp.sum(e, axis=-1, keepdims=True)
    probs = e * pl.reciprocal(denom, approx=True)              # attn dropout = id

    p_ref[0, 0] = probs
    mc_ref[0, 0] = jnp.dot(probs, mv, preferred_element_type=jnp.float32)
    cc_ref[0, 0] = jnp.dot(probs * probs, cv, preferred_element_type=jnp.float32)


# ----------------------------------------------------------------------------
# pallas_call wrappers
# ----------------------------------------------------------------------------
def _dense(x, w, b, *, activation=None):
    n, h = x.shape
    m = w.shape[1]
    tile_n, n_pad = _row_plan(n)
    tile_m = _col_tile(m)
    xp = _pad_rows(x, n_pad)
    out = pl.pallas_call(
        functools.partial(_dense_kernel, activation=activation),
        out_shape=jax.ShapeDtypeStruct((n_pad, m), jnp.float32),
        grid_spec=pltpu.PrefetchScalarGridSpec(
            num_scalar_prefetch=0,
            grid=(n_pad // tile_n, m // tile_m),
            in_specs=[
                pl.BlockSpec((tile_n, h), lambda i, j: (i, 0)),
                pl.BlockSpec((h, tile_m), lambda i, j: (0, j)),
                pl.BlockSpec((1, tile_m), lambda i, j: (0, j)),
            ],
            out_specs=pl.BlockSpec((tile_n, tile_m), lambda i, j: (i, j)),
        ),
        compiler_params=pltpu.CompilerParams(
            dimension_semantics=("parallel", "parallel"),
            vmem_limit_bytes=_VMEM_LIMIT),
    )(xp, w.astype(jnp.bfloat16), b.reshape(1, m))
    return out[:n]


def _dense_res_ln(x, resid, w, b, gamma, beta, *, eps):
    n, h = x.shape
    tile_n, n_pad = _row_plan(n)
    xp = _pad_rows(x, n_pad)
    rp = _pad_rows(resid, n_pad)
    out = pl.pallas_call(
        functools.partial(_dense_res_ln_kernel, eps=eps),
        out_shape=jax.ShapeDtypeStruct((n_pad, h), jnp.float32),
        grid_spec=pltpu.PrefetchScalarGridSpec(
            num_scalar_prefetch=0,
            grid=(n_pad // tile_n,),
            in_specs=[
                pl.BlockSpec((tile_n, h), lambda i: (i, 0)),
                pl.BlockSpec((tile_n, h), lambda i: (i, 0)),
                pl.BlockSpec((h, h), lambda i: (0, 0)),
                pl.BlockSpec((1, h), lambda i: (0, 0)),
                pl.BlockSpec((1, h), lambda i: (0, 0)),
                pl.BlockSpec((1, h), lambda i: (0, 0)),
            ],
            out_specs=pl.BlockSpec((tile_n, h), lambda i: (i, 0)),
        ),
        compiler_params=pltpu.CompilerParams(
            dimension_semantics=("parallel",),
            vmem_limit_bytes=_VMEM_LIMIT),
    )(xp, rp, w.astype(jnp.bfloat16), b.reshape(1, h),
      gamma.reshape(1, h), beta.reshape(1, h))
    return out[:n]


def dist_intermediate(x, w1, b1, w2, b2, gamma, beta, *, eps=1e-12,
                      final_elu=False):
    """DistIntermediate on flattened rows [N, H]; 4H axis chunked in the grid."""
    n, h = x.shape
    h4 = w1.shape[1]
    tile_n, n_pad = _row_plan(n)
    tile_c = _h4_chunk(h4)
    xp = _pad_rows(x, n_pad)
    out = pl.pallas_call(
        functools.partial(_ffn_kernel, eps=eps, final_elu=final_elu),
        out_shape=jax.ShapeDtypeStruct((n_pad, h), jnp.float32),
        grid_spec=pltpu.PrefetchScalarGridSpec(
            num_scalar_prefetch=0,
            grid=(n_pad // tile_n, h4 // tile_c),
            in_specs=[
                pl.BlockSpec((tile_n, h), lambda i, c: (i, 0)),   # x (resident)
                pl.BlockSpec((h, tile_c), lambda i, c: (0, c)),   # W1 chunk
                pl.BlockSpec((1, tile_c), lambda i, c: (0, c)),   # b1 chunk
                pl.BlockSpec((tile_c, h), lambda i, c: (c, 0)),   # W2 chunk
                pl.BlockSpec((1, h), lambda i, c: (0, 0)),        # b2
                pl.BlockSpec((1, h), lambda i, c: (0, 0)),        # gamma
                pl.BlockSpec((1, h), lambda i, c: (0, 0)),        # beta
            ],
            out_specs=pl.BlockSpec((tile_n, h), lambda i, c: (i, 0)),
            scratch_shapes=[pltpu.VMEM((tile_n, h), jnp.float32)],
        ),
        compiler_params=pltpu.CompilerParams(
            dimension_semantics=("parallel", "arbitrary"),
            vmem_limit_bytes=_VMEM_LIMIT),
    )(xp, w1.astype(jnp.bfloat16), b1.reshape(1, h4),
      w2.astype(jnp.bfloat16), b2.reshape(1, h),
      gamma.reshape(1, h), beta.reshape(1, h))
    return out[:n]


def _dist_attention(mq, cq, mk, ck, mv, cv, mask, *, scale):
    b, nh, s, d = mq.shape
    tq = _attn_q_tile(s)
    q_spec = pl.BlockSpec((1, 1, tq, d), lambda bi, hi, qi: (bi, hi, qi, 0))
    kv_spec = pl.BlockSpec((1, 1, s, d), lambda bi, hi, qi: (bi, hi, 0, 0))
    mask_spec = pl.BlockSpec((1, 1, 1, s), lambda bi, hi, qi: (bi, 0, 0, 0))
    ctx_spec = pl.BlockSpec((1, 1, tq, d), lambda bi, hi, qi: (bi, hi, qi, 0))
    prob_spec = pl.BlockSpec((1, 1, tq, s), lambda bi, hi, qi: (bi, hi, qi, 0))
    return pl.pallas_call(
        functools.partial(_dist_attn_kernel, scale=scale),
        out_shape=(
            jax.ShapeDtypeStruct((b, nh, s, d), jnp.float32),
            jax.ShapeDtypeStruct((b, nh, s, d), jnp.float32),
            jax.ShapeDtypeStruct((b, nh, s, s), jnp.float32),
        ),
        grid_spec=pltpu.PrefetchScalarGridSpec(
            num_scalar_prefetch=0,
            grid=(b, nh, s // tq),
            in_specs=[mask_spec, q_spec, q_spec, kv_spec, kv_spec,
                      kv_spec, kv_spec],
            out_specs=(ctx_spec, ctx_spec, prob_spec),
        ),
        compiler_params=pltpu.CompilerParams(
            dimension_semantics=("parallel", "parallel", "parallel"),
            vmem_limit_bytes=_VMEM_LIMIT),
    )(mask, mq, cq, mk, ck, mv, cv)


def dist_layer_forward(params, mean_hidden_states, cov_hidden_states,
                       attention_mask, *, num_heads, eps=1e-12):
    """Forward pass of DistLayer.  Returns (mean_out, cov_out, attention_probs)."""
    B, S, H = mean_hidden_states.shape
    assert H % num_heads == 0
    D = H // num_heads
    N = B * S
    scale = 1.0 / math.sqrt(D)

    mean2 = mean_hidden_states.reshape(N, H)
    cov2 = cov_hidden_states.reshape(N, H)

    # ---- DistSelfAttention ------------------------------------------------
    mean_qkv = _dense(mean2, params["mean_qkv_w"], params["mean_qkv_b"],
                      activation=None)
    cov_qkv = _dense(cov2, params["cov_qkv_w"], params["cov_qkv_b"],
                     activation="elu_plus_one")

    def split_heads(x):
        return x.reshape(B, S, num_heads, D).transpose(0, 2, 1, 3)

    mq, mk, mv = (split_heads(mean_qkv[:, i * H:(i + 1) * H]) for i in range(3))
    cq, ck, cv = (split_heads(cov_qkv[:, i * H:(i + 1) * H]) for i in range(3))

    mean_ctx, cov_ctx, probs = _dist_attention(mq, cq, mk, ck, mv, cv,
                                               attention_mask, scale=scale)

    def merge_heads(x):
        return x.transpose(0, 2, 1, 3).reshape(N, H)

    mean_attn = _dense_res_ln(merge_heads(mean_ctx), mean2,
                              params["mean_dense_w"], params["mean_dense_b"],
                              params["attn_ln_g"], params["attn_ln_b"], eps=eps)
    cov_attn = _dense_res_ln(merge_heads(cov_ctx), cov2,
                             params["cov_dense_w"], params["cov_dense_b"],
                             params["attn_ln_g"], params["attn_ln_b"], eps=eps)

    # ---- DistIntermediate (mean) / DistIntermediate + ELU + 1 (cov) -------
    mean_out = dist_intermediate(
        mean_attn, params["mean_ffn_w1"], params["mean_ffn_b1"],
        params["mean_ffn_w2"], params["mean_ffn_b2"],
        params["mean_ffn_ln_g"], params["mean_ffn_ln_b"],
        eps=eps, final_elu=False)
    cov_out = dist_intermediate(
        cov_attn, params["cov_ffn_w1"], params["cov_ffn_b1"],
        params["cov_ffn_w2"], params["cov_ffn_b2"],
        params["cov_ffn_ln_g"], params["cov_ffn_ln_b"],
        eps=eps, final_elu=True)

    return mean_out.reshape(B, S, H), cov_out.reshape(B, S, H), probs


# ----------------------------------------------------------------------------
# pure-JAX reference (same bf16-matmul / f32-accumulate precision policy)
# ----------------------------------------------------------------------------
def _bf16_dot(a, w):
    return jnp.dot(a.astype(jnp.bfloat16), w.astype(jnp.bfloat16),
                   preferred_element_type=jnp.float32)


def _layer_norm_ref(x, g, b, eps):
    u = jnp.mean(x, -1, keepdims=True)
    s = jnp.mean((x - u) ** 2, -1, keepdims=True)
    return g * ((x - u) / jnp.sqrt(s + eps)) + b


def _wasserstein_ref(m1, c1, m2, c2):
    m1_2 = jnp.sum(m1 ** 2, -1, keepdims=True)
    m2_2 = jnp.sum(m2 ** 2, -1, keepdims=True)
    ret = (-2.0 * jnp.einsum("bhqd,bhkd->bhqk", m1, m2)
           + m1_2 + jnp.swapaxes(m2_2, -1, -2))
    c1_2 = jnp.sum(c1, -1, keepdims=True)
    c2_2 = jnp.sum(c2, -1, keepdims=True)
    cov_ret = (-2.0 * jnp.einsum("bhqd,bhkd->bhqk",
                                 jnp.sqrt(jnp.maximum(c1, 1e-24)),
                                 jnp.sqrt(jnp.maximum(c2, 1e-24)))
               + c1_2 + jnp.swapaxes(c2_2, -1, -2))
    return ret + cov_ret


def reference_dist_layer(p, mean_in, cov_in, mask, *, num_heads, eps=1e-12):
    B, S, H = mean_in.shape
    D = H // num_heads
    N = B * S
    m2d = mean_in.reshape(N, H)
    c2d = cov_in.reshape(N, H)

    mqkv = _bf16_dot(m2d, p["mean_qkv_w"]) + p["mean_qkv_b"]
    cqkv = _elu(_bf16_dot(c2d, p["cov_qkv_w"]) + p["cov_qkv_b"]) + 1.0

    def heads(x):
        return x.reshape(B, S, num_heads, D).transpose(0, 2, 1, 3)

    mq, mk, mv = (heads(mqkv[:, i * H:(i + 1) * H]) for i in range(3))
    cq, ck, cv = (heads(cqkv[:, i * H:(i + 1) * H]) for i in range(3))

    scores = -_wasserstein_ref(mq, cq, mk, ck) * (1.0 / math.sqrt(D)) + mask
    probs = jax.nn.softmax(scores, -1)
    mean_ctx = jnp.einsum("bhqk,bhkd->bhqd", probs, mv)
    cov_ctx = jnp.einsum("bhqk,bhkd->bhqd", probs ** 2, cv)

    def merge(x):
        return x.transpose(0, 2, 1, 3).reshape(N, H)

    mean_attn = _layer_norm_ref(
        _bf16_dot(merge(mean_ctx), p["mean_dense_w"]) + p["mean_dense_b"] + m2d,
        p["attn_ln_g"], p["attn_ln_b"], eps)
    cov_attn = _layer_norm_ref(
        _bf16_dot(merge(cov_ctx), p["cov_dense_w"]) + p["cov_dense_b"] + c2d,
        p["attn_ln_g"], p["attn_ln_b"], eps)

    def ffn(x, w1, b1, w2, b2, g, b):
        h = _elu(_bf16_dot(x, w1) + b1)
        y = _bf16_dot(h, w2) + b2
        return _layer_norm_ref(y + x, g, b, eps)

    mean_out = ffn(mean_attn, p["mean_ffn_w1"], p["mean_ffn_b1"],
                   p["mean_ffn_w2"], p["mean_ffn_b2"],
                   p["mean_ffn_ln_g"], p["mean_ffn_ln_b"])
    cov_out = _elu(ffn(cov_attn, p["cov_ffn_w1"], p["cov_ffn_b1"],
                       p["cov_ffn_w2"], p["cov_ffn_b2"],
                       p["cov_ffn_ln_g"], p["cov_ffn_ln_b"])) + 1.0
    return mean_out.reshape(B, S, H), cov_out.reshape(B, S, H), probs


# ----------------------------------------------------------------------------
if __name__ == "__main__":
    B, S, H, NH = 2, 8, 128, 4
    H4 = 4 * H

    def linear_params(key, fan_in, fan_out):
        kw, kb = jax.random.split(key)
        lim = 1.0 / math.sqrt(fan_in)
        w = jax.random.uniform(kw, (fan_in, fan_out), jnp.float32, -lim, lim)
        b = jax.random.uniform(kb, (fan_out,), jnp.float32, -lim, lim)
        return w, b

    keys = jax.random.split(jax.random.PRNGKey(0), 12)
    p = {}
    p["mean_qkv_w"], p["mean_qkv_b"] = linear_params(keys[0], H, 3 * H)
    p["cov_qkv_w"], p["cov_qkv_b"] = linear_params(keys[1], H, 3 * H)
    p["mean_dense_w"], p["mean_dense_b"] = linear_params(keys[2], H, H)
    p["cov_dense_w"], p["cov_dense_b"] = linear_params(keys[3], H, H)
    p["attn_ln_g"] = jnp.ones((H,), jnp.float32)
    p["attn_ln_b"] = jnp.zeros((H,), jnp.float32)
    p["mean_ffn_w1"], p["mean_ffn_b1"] = linear_params(keys[4], H, H4)
    p["mean_ffn_w2"], p["mean_ffn_b2"] = linear_params(keys[5], H4, H)
    p["mean_ffn_ln_g"] = jnp.ones((H,), jnp.float32)
    p["mean_ffn_ln_b"] = jnp.zeros((H,), jnp.float32)
    p["cov_ffn_w1"], p["cov_ffn_b1"] = linear_params(keys[6], H, H4)
    p["cov_ffn_w2"], p["cov_ffn_b2"] = linear_params(keys[7], H4, H)
    p["cov_ffn_ln_g"] = jnp.ones((H,), jnp.float32)
    p["cov_ffn_ln_b"] = jnp.zeros((H,), jnp.float32)

    mean_in = jax.random.normal(keys[8], (B, S, H), jnp.float32)
    cov_in = jax.random.normal(keys[9], (B, S, H), jnp.float32)
    # BERT-style additive attention mask (mask out last 2 keys of batch 1)
    mask = jnp.zeros((B, 1, 1, S), jnp.float32)
    mask = mask.at[1, :, :, S - 2:].set(-10000.0)

    fwd = jax.jit(functools.partial(dist_layer_forward, num_heads=NH))
    mean_out, cov_out, probs = fwd(p, mean_in, cov_in, mask)
    (mean_out, cov_out, probs) = jax.block_until_ready((mean_out, cov_out, probs))

    ref_mean, ref_cov, ref_probs = reference_dist_layer(
        p, mean_in, cov_in, mask, num_heads=NH)

    assert mean_out.shape == (B, S, H)
    assert cov_out.shape == (B, S, H)
    assert probs.shape == (B, NH, S, S)
    for got, want, name in ((mean_out, ref_mean, "mean"),
                            (cov_out, ref_cov, "cov"),
                            (probs, ref_probs, "probs")):
        np.testing.assert_allclose(np.asarray(got), np.asarray(want),
                                   atol=1e-2, rtol=1e-2, err_msg=name)

    print("KERNEL_OK")
</pallas_src>

<mosaic_0001>
module attributes {stable_mosaic.version = 11 : i64} {
  func.func @_dense_kernel(%arg0: i32, %arg1: i32, %arg2: memref<16x128xf32, #tpu.memory_space<vmem>>, %arg3: memref<128x384xbf16, #tpu.memory_space<vmem>>, %arg4: memref<1x384xf32, #tpu.memory_space<vmem>>, %arg5: memref<16x384xf32, #tpu.memory_space<vmem>>) attributes {dimension_semantics = [#tpu.dimension_semantics<parallel>, #tpu.dimension_semantics<parallel>], iteration_bounds = array<i64: 1, 1>, scalar_prefetch = 0 : i64, scratch_operands = 0 : i64, tpu.core_type = #tpu.core_type<tc>, window_params = [{transform_indices = @transform_0, window_bounds = array<i64: 16, 128>}, {transform_indices = @transform_1, window_bounds = array<i64: 128, 384>}, {transform_indices = @transform_2, window_bounds = array<i64: 1, 384>}, {transform_indices = @transform_3, window_bounds = array<i64: 16, 384>}]} {
    %c0 = arith.constant 0 : index
    %c0_0 = arith.constant 0 : index
    %0 = vector.load %arg2[%c0, %c0_0] : memref<16x128xf32, #tpu.memory_space<vmem>>, vector<16x128xf32>
    %1 = arith.truncf %0 : vector<16x128xf32> to vector<16x128xbf16>
    %c0_1 = arith.constant 0 : index
    %c0_2 = arith.constant 0 : index
    %2 = vector.load %arg3[%c0_1, %c0_2] : memref<128x384xbf16, #tpu.memory_space<vmem>>, vector<128x384xbf16>
    %cst = arith.constant dense<0.000000e+00> : vector<16x384xf32>
    %3 = tpu.matmul %1, %2, %cst {dimension_numbers = #tpu.dot_dimension_numbers<[1], [0], [0], [1], [0, 0, 1, 1], [], []>} : vector<16x128xbf16>, vector<128x384xbf16>, vector<16x384xf32> -> vector<16x384xf32>
    %c0_3 = arith.constant 0 : index
    %c0_4 = arith.constant 0 : index
    %4 = vector.load %arg4[%c0_3, %c0_4] : memref<1x384xf32, #tpu.memory_space<vmem>>, vector<1x384xf32>
    %5 = vector.broadcast %4 : vector<1x384xf32> to vector<16x384xf32>
    %6 = arith.addf %3, %5 : vector<16x384xf32>
    %c0_5 = arith.constant 0 : index
    %c0_6 = arith.constant 0 : index
    %7 = vector.load %arg5[%c0_5, %c0_6] : memref<16x384xf32, #tpu.memory_space<vmem>>, vector<16x384xf32>
    tpu.vector_store %arg5[%c0_5, %c0_6], %6 {strides = array<i32>} : memref<16x384xf32, #tpu.memory_space<vmem>>, vector<16x384xf32>,
    return
  }
  func.func @transform_0(%arg0: i32, %arg1: i32) -> (i32, i32) {
    %c0_i32 = arith.constant 0 : i32
    %c0_i32_0 = arith.constant 0 : i32
    return %arg0, %c0_i32 : i32, i32
  }
  func.func @transform_1(%arg0: i32, %arg1: i32) -> (i32, i32) {
    %c0_i32 = arith.constant 0 : i32
    %c0_i32_0 = arith.constant 0 : i32
    return %c0_i32, %arg1 : i32, i32
  }
  func.func @transform_2(%arg0: i32, %arg1: i32) -> (i32, i32) {
    %c0_i32 = arith.constant 0 : i32
    %c0_i32_0 = arith.constant 0 : i32
    return %c0_i32, %arg1 : i32, i32
  }
  func.func @transform_3(%arg0: i32, %arg1: i32) -> (i32, i32) {
    %c0_i32 = arith.constant 0 : i32
    return %arg0, %arg1 : i32, i32
  }
}

module attributes {stable_mosaic.version = 11 : i64} {
  func.func @_dense_kernel(%arg0: i32, %arg1: i32, %arg2: memref<16x128xf32, #tpu.memory_space<vmem>>, %arg3: memref<128x384xbf16, #tpu.memory_space<vmem>>, %arg4: memref<1x384xf32, #tpu.memory_space<vmem>>, %arg5: memref<16x384xf32, #tpu.memory_space<vmem>>) attributes {dimension_semantics = [#tpu.dimension_semantics<parallel>, #tpu.dimension_semantics<parallel>], iteration_bounds = array<i64: 1, 1>, scalar_prefetch = 0 : i64, scratch_operands = 0 : i64, tpu.core_type = #tpu.core_type<tc>, window_params = [{transform_indices = @transform_0, window_bounds = array<i64: 16, 128>}, {transform_indices = @transform_1, window_bounds = array<i64: 128, 384>}, {transform_indices = @transform_2, window_bounds = array<i64: 1, 384>}, {transform_indices = @transform_3, window_bounds = array<i64: 16, 384>}]} {
    %c0 = arith.constant 0 : index
    %c0_0 = arith.constant 0 : index
    %0 = vector.load %arg2[%c0, %c0_0] : memref<16x128xf32, #tpu.memory_space<vmem>>, vector<16x128xf32>
    %1 = arith.truncf %0 : vector<16x128xf32> to vector<16x128xbf16>
    %c0_1 = arith.constant 0 : index
    %c0_2 = arith.constant 0 : index
    %2 = vector.load %arg3[%c0_1, %c0_2] : memref<128x384xbf16, #tpu.memory_space<vmem>>, vector<128x384xbf16>
    %cst = arith.constant dense<0.000000e+00> : vector<16x384xf32>
    %3 = tpu.matmul %1, %2, %cst {dimension_numbers = #tpu.dot_dimension_numbers<[1], [0], [0], [1], [0, 0, 1, 1], [], []>} : vector<16x128xbf16>, vector<128x384xbf16>, vector<16x384xf32> -> vector<16x384xf32>
    %c0_3 = arith.constant 0 : index
    %c0_4 = arith.constant 0 : index
    %4 = vector.load %arg4[%c0_3, %c0_4] : memref<1x384xf32, #tpu.memory_space<vmem>>, vector<1x384xf32>
    %5 = vector.broadcast %4 : vector<1x384xf32> to vector<16x384xf32>
    %6 = arith.addf %3, %5 : vector<16x384xf32>
    %cst_5 = arith.constant 0.000000e+00 : f32
    %7 = vector.broadcast %cst_5 : f32 to vector<16x384xf32>
    %8 = arith.cmpf ogt, %6, %7 : vector<16x384xf32>
    %9 = math.exp %6 : vector<16x384xf32>
    %cst_6 = arith.constant 1.000000e+00 : f32
    %10 = vector.broadcast %cst_6 : f32 to vector<16x384xf32>
    %11 = arith.subf %9, %10 : vector<16x384xf32>
    %12 = arith.select %8, %6, %11 : vector<16x384xi1>, vector<16x384xf32>
    %cst_7 = arith.constant 1.000000e+00 : f32
    %13 = vector.broadcast %cst_7 : f32 to vector<16x384xf32>
    %14 = arith.addf %12, %13 : vector<16x384xf32>
    %c0_8 = arith.constant 0 : index
    %c0_9 = arith.constant 0 : index
    %15 = vector.load %arg5[%c0_8, %c0_9] : memref<16x384xf32, #tpu.memory_space<vmem>>, vector<16x384xf32>
    tpu.vector_store %arg5[%c0_8, %c0_9], %14 {strides = array<i32>} : memref<16x384xf32, #tpu.memory_space<vmem>>, vector<16x384xf32>,
    return
  }
  func.func @transform_0(%arg0: i32, %arg1: i32) -> (i32, i32) {
    %c0_i32 = arith.constant 0 : i32
    %c0_i32_0 = arith.constant 0 : i32
    return %arg0, %c0_i32 : i32, i32
  }
  func.func @transform_1(%arg0: i32, %arg1: i32) -> (i32, i32) {
    %c0_i32 = arith.constant 0 : i32
    %c0_i32_0 = arith.constant 0 : i32
    return %c0_i32, %arg1 : i32, i32
  }
  func.func @transform_2(%arg0: i32, %arg1: i32) -> (i32, i32) {
    %c0_i32 = arith.constant 0 : i32
    %c0_i32_0 = arith.constant 0 : i32
    return %c0_i32, %arg1 : i32, i32
  }
  func.func @transform_3(%arg0: i32, %arg1: i32) -> (i32, i32) {
    %c0_i32 = arith.constant 0 : i32
    return %arg0, %arg1 : i32, i32
  }
}

module attributes {stable_mosaic.version = 11 : i64} {
  func.func @_dist_attn_kernel(%arg0: i32, %arg1: i32, %arg2: i32, %arg3: memref<1x1x1x8xf32, #tpu.memory_space<vmem>>, %arg4: memref<1x1x8x32xf32, #tpu.memory_space<vmem>>, %arg5: memref<1x1x8x32xf32, #tpu.memory_space<vmem>>, %arg6: memref<1x1x8x32xf32, #tpu.memory_space<vmem>>, %arg7: memref<1x1x8x32xf32, #tpu.memory_space<vmem>>, %arg8: memref<1x1x8x32xf32, #tpu.memory_space<vmem>>, %arg9: memref<1x1x8x32xf32, #tpu.memory_space<vmem>>, %arg10: memref<1x1x8x32xf32, #tpu.memory_space<vmem>>, %arg11: memref<1x1x8x32xf32, #tpu.memory_space<vmem>>, %arg12: memref<1x1x8x8xf32, #tpu.memory_space<vmem>>) attributes {dimension_semantics = [#tpu.dimension_semantics<parallel>, #tpu.dimension_semantics<parallel>, #tpu.dimension_semantics<parallel>], iteration_bounds = array<i64: 2, 4, 1>, scalar_prefetch = 0 : i64, scratch_operands = 0 : i64, tpu.core_type = #tpu.core_type<tc>, window_params = [{transform_indices = @transform_0, window_bounds = array<i64: 1, 1, 1, 8>}, {transform_indices = @transform_1, window_bounds = array<i64: 1, 1, 8, 32>}, {transform_indices = @transform_2, window_bounds = array<i64: 1, 1, 8, 32>}, {transform_indices = @transform_3, window_bounds = array<i64: 1, 1, 8, 32>}, {transform_indices = @transform_4, window_bounds = array<i64: 1, 1, 8, 32>}, {transform_indices = @transform_5, window_bounds = array<i64: 1, 1, 8, 32>}, {transform_indices = @transform_6, window_bounds = array<i64: 1, 1, 8, 32>}, {transform_indices = @transform_7, window_bounds = array<i64: 1, 1, 8, 32>}, {transform_indices = @transform_8, window_bounds = array<i64: 1, 1, 8, 32>}, {transform_indices = @transform_9, window_bounds = array<i64: 1, 1, 8, 8>}]} {
    %c0 = arith.constant 0 : index
    %c0_0 = arith.constant 0 : index
    %c0_1 = arith.constant 0 : index
    %c0_2 = arith.constant 0 : index
    %0 = vector.load %arg4[%c0, %c0_0, %c0_1, %c0_2] : memref<1x1x8x32xf32, #tpu.memory_space<vmem>>, vector<1x1x8x32xf32>
    %1 = vector.shape_cast %0 : vector<1x1x8x32xf32> to vector<8x32xf32>
    %c0_3 = arith.constant 0 : index
    %c0_4 = arith.constant 0 : index
    %c0_5 = arith.constant 0 : index
    %c0_6 = arith.constant 0 : index
    %2 = vector.load %arg5[%c0_3, %c0_4, %c0_5, %c0_6] : memref<1x1x8x32xf32, #tpu.memory_space<vmem>>, vector<1x1x8x32xf32>
    %3 = vector.shape_cast %2 : vector<1x1x8x32xf32> to vector<8x32xf32>
    %c0_7 = arith.constant 0 : index
    %c0_8 = arith.constant 0 : index
    %c0_9 = arith.constant 0 : index
    %c0_10 = arith.constant 0 : index
    %4 = vector.load %arg6[%c0_7, %c0_8, %c0_9, %c0_10] : memref<1x1x8x32xf32, #tpu.memory_space<vmem>>, vector<1x1x8x32xf32>
    %5 = vector.shape_cast %4 : vector<1x1x8x32xf32> to vector<8x32xf32>
    %c0_11 = arith.constant 0 : index
    %c0_12 = arith.constant 0 : index
    %c0_13 = arith.constant 0 : index
    %c0_14 = arith.constant 0 : index
    %6 = vector.load %arg7[%c0_11, %c0_12, %c0_13, %c0_14] : memref<1x1x8x32xf32, #tpu.memory_space<vmem>>, vector<1x1x8x32xf32>
    %7 = vector.shape_cast %6 : vector<1x1x8x32xf32> to vector<8x32xf32>
    %c0_15 = arith.constant 0 : index
    %c0_16 = arith.constant 0 : index
    %c0_17 = arith.constant 0 : index
    %c0_18 = arith.constant 0 : index
    %8 = vector.load %arg8[%c0_15, %c0_16, %c0_17, %c0_18] : memref<1x1x8x32xf32, #tpu.memory_space<vmem>>, vector<1x1x8x32xf32>
    %9 = vector.shape_cast %8 : vector<1x1x8x32xf32> to vector<8x32xf32>
    %c0_19 = arith.constant 0 : index
    %c0_20 = arith.constant 0 : index
    %c0_21 = arith.constant 0 : index
    %c0_22 = arith.constant 0 : index
    %10 = vector.load %arg9[%c0_19, %c0_20, %c0_21, %c0_22] : memref<1x1x8x32xf32, #tpu.memory_space<vmem>>, vector<1x1x8x32xf32>
    %11 = vector.shape_cast %10 : vector<1x1x8x32xf32> to vector<8x32xf32>
    %c0_23 = arith.constant 0 : index
    %c0_24 = arith.constant 0 : index
    %c0_25 = arith.constant 0 : index
    %c0_26 = arith.constant 0 : index
    %12 = vector.load %arg3[%c0_23, %c0_24, %c0_25, %c0_26] : memref<1x1x1x8xf32, #tpu.memory_space<vmem>>, vector<1x1x1x8xf32>
    %13 = vector.shape_cast %12 : vector<1x1x1x8xf32> to vector<1x8xf32>
    %cst = arith.constant 1.000000e+00 : f32
    %14 = vector.broadcast %cst : f32 to vector<1x32xf32>
    %cst_27 = arith.constant dense<0.000000e+00> : vector<8x8xf32>
    %15 = tpu.matmul %1, %5, %cst_27 {dimension_numbers = #tpu.dot_dimension_numbers<[1], [1], [0], [0], [0, 0, 1, 0], [], []>} : vector<8x32xf32>, vector<8x32xf32>, vector<8x8xf32> -> vector<8x8xf32>
    %16 = arith.mulf %1, %1 : vector<8x32xf32>
    %cst_28 = arith.constant dense<0.000000e+00> : vector<8xf32>
    %17 = vector.multi_reduction <add>, %16, %cst_28 [1] : vector<8x32xf32> to vector<8xf32>
    %18 = vector.shape_cast %17 : vector<8xf32> to vector<8x1xf32>
    %19 = arith.mulf %5, %5 : vector<8x32xf32>
    %cst_29 = arith.constant dense<0.000000e+00> : vector<1x8xf32>
    %20 = tpu.matmul %14, %19, %cst_29 {dimension_numbers = #tpu.dot_dimension_numbers<[1], [1], [0], [0], [0, 0, 1, 0], [], []>} : vector<1x32xf32>, vector<8x32xf32>, vector<1x8xf32> -> vector<1x8xf32>
    %cst_30 = arith.constant -2.000000e+00 : f32
    %21 = vector.broadcast %cst_30 : f32 to vector<8x8xf32>
    %22 = arith.mulf %21, %15 : vector<8x8xf32>
    %23 = vector.broadcast %18 : vector<8x1xf32> to vector<8x8xf32>
    %24 = arith.addf %22, %23 : vector<8x8xf32>
    %25 = vector.broadcast %20 : vector<1x8xf32> to vector<8x8xf32>
    %26 = arith.addf %24, %25 : vector<8x8xf32>
    %cst_31 = arith.constant 1.000000e-24 : f32
    %27 = vector.broadcast %cst_31 : f32 to vector<8x32xf32>
    %28 = arith.maximumf %3, %27 : vector<8x32xf32>
    %29 = math.sqrt %28 : vector<8x32xf32>
    %cst_32 = arith.constant 1.000000e-24 : f32
    %30 = vector.broadcast %cst_32 : f32 to vector<8x32xf32>
    %31 = arith.maximumf %7, %30 : vector<8x32xf32>
    %32 = math.sqrt %31 : vector<8x32xf32>
    %cst_33 = arith.constant dense<0.000000e+00> : vector<8x8xf32>
    %33 = tpu.matmul %29, %32, %cst_33 {dimension_numbers = #tpu.dot_dimension_numbers<[1], [1], [0], [0], [0, 0, 1, 0], [], []>} : vector<8x32xf32>, vector<8x32xf32>, vector<8x8xf32> -> vector<8x8xf32>
    %cst_34 = arith.constant dense<0.000000e+00> : vector<8xf32>
    %34 = vector.multi_reduction <add>, %3, %cst_34 [1] : vector<8x32xf32> to vector<8xf32>
    %35 = vector.shape_cast %34 : vector<8xf32> to vector<8x1xf32>
    %cst_35 = arith.constant dense<0.000000e+00> : vector<1x8xf32>
    %36 = tpu.matmul %14, %7, %cst_35 {dimension_numbers = #tpu.dot_dimension_numbers<[1], [1], [0], [0], [0, 0, 1, 0], [], []>} : vector<1x32xf32>, vector<8x32xf32>, vector<1x8xf32> -> vector<1x8xf32>
    %cst_36 = arith.constant -2.000000e+00 : f32
    %37 = vector.broadcast %cst_36 : f32 to vector<8x8xf32>
    %38 = arith.mulf %37, %33 : vector<8x8xf32>
    %39 = vector.broadcast %35 : vector<8x1xf32> to vector<8x8xf32>
    %40 = arith.addf %38, %39 : vector<8x8xf32>
    %41 = vector.broadcast %36 : vector<1x8xf32> to vector<8x8xf32>
    %42 = arith.addf %40, %41 : vector<8x8xf32>
    %43 = arith.addf %26, %42 : vector<8x8xf32>
    %cst_37 = arith.constant 0.000000e+00 : f32
    %44 = vector.broadcast %cst_37 : f32 to vector<8x8xf32>
    %45 = arith.subf %44, %43 : vector<8x8xf32>
    %cst_38 = arith.constant 0.176776692 : f32
    %46 = vector.broadcast %cst_38 : f32 to vector<8x8xf32>
    %47 = arith.mulf %45, %46 : vector<8x8xf32>
    %48 = vector.broadcast %13 : vector<1x8xf32> to vector<8x8xf32>
    %49 = arith.addf %47, %48 : vector<8x8xf32>
    %cst_39 = arith.constant dense<0xFF800000> : vector<8xf32>
    %50 = vector.multi_reduction <maximumf>, %49, %cst_39 [1] : vector<8x8xf32> to vector<8xf32>
    %51 = vector.shape_cast %50 : vector<8xf32> to vector<8x1xf32>
    %52 = vector.broadcast %51 : vector<8x1xf32> to vector<8x8xf32>
    %53 = arith.subf %49, %52 : vector<8x8xf32>
    %54 = math.exp %53 : vector<8x8xf32>
    %cst_40 = arith.constant dense<0.000000e+00> : vector<8xf32>
    %55 = vector.multi_reduction <add>, %54, %cst_40 [1] : vector<8x8xf32> to vector<8xf32>
    %56 = vector.shape_cast %55 : vector<8xf32> to vector<8x1xf32>
    %57 = tpu.reciprocal %56 {approx = true} : vector<8x1xf32> -> vector<8x1xf32>
    %58 = vector.broadcast %57 : vector<8x1xf32> to vector<8x8xf32>
    %59 = arith.mulf %54, %58 : vector<8x8xf32>
    %c0_41 = arith.constant 0 : index
    %c0_42 = arith.constant 0 : index
    %c0_43 = arith.constant 0 : index
    %c0_44 = arith.constant 0 : index
    %60 = vector.load %arg12[%c0_41, %c0_42, %c0_43, %c0_44] : memref<1x1x8x8xf32, #tpu.memory_space<vmem>>, vector<1x1x8x8xf32>
    %61 = vector.shape_cast %60 : vector<1x1x8x8xf32> to vector<8x8xf32>
    %62 = vector.shape_cast %59 : vector<8x8xf32> to vector<1x1x8x8xf32>
    tpu.vector_store %arg12[%c0_41, %c0_42, %c0_43, %c0_44], %62 {strides = array<i32>} : memref<1x1x8x8xf32, #tpu.memory_space<vmem>>, vector<1x1x8x8xf32>,
    %cst_45 = arith.constant dense<0.000000e+00> : vector<8x32xf32>
    %63 = tpu.matmul %59, %9, %cst_45 {dimension_numbers = #tpu.dot_dimension_numbers<[1], [0], [0], [1], [0, 0, 1, 1], [], []>} : vector<8x8xf32>, vector<8x32xf32>, vector<8x32xf32> -> vector<8x32xf32>
    %c0_46 = arith.constant 0 : index
    %c0_47 = arith.constant 0 : index
    %c0_48 = arith.constant 0 : index
    %c0_49 = arith.constant 0 : index
    %64 = vector.load %arg10[%c0_46, %c0_47, %c0_48, %c0_49] : memref<1x1x8x32xf32, #tpu.memory_space<vmem>>, vector<1x1x8x32xf32>
    %65 = vector.shape_cast %64 : vector<1x1x8x32xf32> to vector<8x32xf32>
    %66 = vector.shape_cast %63 : vector<8x32xf32> to vector<1x1x8x32xf32>
    tpu.vector_store %arg10[%c0_46, %c0_47, %c0_48, %c0_49], %66 {strides = array<i32>} : memref<1x1x8x32xf32, #tpu.memory_space<vmem>>, vector<1x1x8x32xf32>,
    %67 = arith.mulf %59, %59 : vector<8x8xf32>
    %cst_50 = arith.constant dense<0.000000e+00> : vector<8x32xf32>
    %68 = tpu.matmul %67, %11, %cst_50 {dimension_numbers = #tpu.dot_dimension_numbers<[1], [0], [0], [1], [0, 0, 1, 1], [], []>} : vector<8x8xf32>, vector<8x32xf32>, vector<8x32xf32> -> vector<8x32xf32>
    %c0_51 = arith.constant 0 : index
    %c0_52 = arith.constant 0 : index
    %c0_53 = arith.constant 0 : index
    %c0_54 = arith.constant 0 : index
    %69 = vector.load %arg11[%c0_51, %c0_52, %c0_53, %c0_54] : memref<1x1x8x32xf32, #tpu.memory_space<vmem>>, vector<1x1x8x32xf32>
    %70 = vector.shape_cast %69 : vector<1x1x8x32xf32> to vector<8x32xf32>
    %71 = vector.shape_cast %68 : vector<8x32xf32> to vector<1x1x8x32xf32>
    tpu.vector_store %arg11[%c0_51, %c0_52, %c0_53, %c0_54], %71 {strides = array<i32>} : memref<1x1x8x32xf32, #tpu.memory_space<vmem>>, vector<1x1x8x32xf32>,
    return
  }
  func.func @transform_0(%arg0: i32, %arg1: i32, %arg2: i32) -> (i32, i32, i32, i32) {
    %c0_i32 = arith.constant 0 : i32
    %c0_i32_0 = arith.constant 0 : i32
    %c0_i32_1 = arith.constant 0 : i32
    %c0_i32_2 = arith.constant 0 : i32
    return %arg0, %c0_i32, %c0_i32_0, %c0_i32_1 : i32, i32, i32, i32
  }
  func.func @transform_1(%arg0: i32, %arg1: i32, %arg2: i32) -> (i32, i32, i32, i32) {
    %c0_i32 = arith.constant 0 : i32
    %c0_i32_0 = arith.constant 0 : i32
    return %arg0, %arg1, %arg2, %c0_i32 : i32, i32, i32, i32
  }
  func.func @transform_2(%arg0: i32, %arg1: i32, %arg2: i32) -> (i32, i32, i32, i32) {
    %c0_i32 = arith.constant 0 : i32
    %c0_i32_0 = arith.constant 0 : i32
    return %arg0, %arg1, %arg2, %c0_i32 : i32, i32, i32, i32
  }
  func.func @transform_3(%arg0: i32, %arg1: i32, %arg2: i32) -> (i32, i32, i32, i32) {
    %c0_i32 = arith.constant 0 : i32
    %c0_i32_0 = arith.constant 0 : i32
    %c0_i32_1 = arith.constant 0 : i32
    return %arg0, %arg1, %c0_i32, %c0_i32_0 : i32, i32, i32, i32
  }
  func.func @transform_4(%arg0: i32, %arg1: i32, %arg2: i32) -> (i32, i32, i32, i32) {
    %c0_i32 = arith.constant 0 : i32
    %c0_i32_0 = arith.constant 0 : i32
    %c0_i32_1 = arith.constant 0 : i32
    return %arg0, %arg1, %c0_i32, %c0_i32_0 : i32, i32, i32, i32
  }
  func.func @transform_5(%arg0: i32, %arg1: i32, %arg2: i32) -> (i32, i32, i32, i32) {
    %c0_i32 = arith.constant 0 : i32
    %c0_i32_0 = arith.constant 0 : i32
    %c0_i32_1 = arith.constant 0 : i32
    return %arg0, %arg1, %c0_i32, %c0_i32_0 : i32, i32, i32, i32
  }
  func.func @transform_6(%arg0: i32, %arg1: i32, %arg2: i32) -> (i32, i32, i32, i32) {
    %c0_i32 = arith.constant 0 : i32
    %c0_i32_0 = arith.constant 0 : i32
    %c0_i32_1 = arith.constant 0 : i32
    return %arg0, %arg1, %c0_i32, %c0_i32_0 : i32, i32, i32, i32
  }
  func.func @transform_7(%arg0: i32, %arg1: i32, %arg2: i32) -> (i32, i32, i32, i32) {
    %c0_i32 = arith.constant 0 : i32
    %c0_i32_0 = arith.constant 0 : i32
    return %arg0, %arg1, %arg2, %c0_i32 : i32, i32, i32, i32
  }
  func.func @transform_8(%arg0: i32, %arg1: i32, %arg2: i32) -> (i32, i32, i32, i32) {
    %c0_i32 = arith.constant 0 : i32
    %c0_i32_0 = arith.constant 0 : i32
    return %arg0, %arg1, %arg2, %c0_i32 : i32, i32, i32, i32
  }
  func.func @transform_9(%arg0: i32, %arg1: i32, %arg2: i32) -> (i32, i32, i32, i32) {
    %c0_i32 = arith.constant 0 : i32
    %c0_i32_0 = arith.constant 0 : i32
    return %arg0, %arg1, %arg2, %c0_i32 : i32, i32, i32, i32
  }
}

module attributes {stable_mosaic.version = 11 : i64} {
  func.func @_dense_res_ln_kernel(%arg0: i32, %arg1: memref<16x128xf32, #tpu.memory_space<vmem>>, %arg2: memref<16x128xf32, #tpu.memory_space<vmem>>, %arg3: memref<128x128xbf16, #tpu.memory_space<vmem>>, %arg4: memref<1x128xf32, #tpu.memory_space<vmem>>, %arg5: memref<1x128xf32, #tpu.memory_space<vmem>>, %arg6: memref<1x128xf32, #tpu.memory_space<vmem>>, %arg7: memref<16x128xf32, #tpu.memory_space<vmem>>) attributes {dimension_semantics = [#tpu.dimension_semantics<parallel>], iteration_bounds = array<i64: 1>, scalar_prefetch = 0 : i64, scratch_operands = 0 : i64, tpu.core_type = #tpu.core_type<tc>, window_params = [{transform_indices = @transform_0, window_bounds = array<i64: 16, 128>}, {transform_indices = @transform_1, window_bounds = array<i64: 16, 128>}, {pipeline_mode = #tpu.pipeline_mode<synchronous>, transform_indices = @transform_2, window_bounds = array<i64: 128, 128>}, {pipeline_mode = #tpu.pipeline_mode<synchronous>, transform_indices = @transform_3, window_bounds = array<i64: 1, 128>}, {pipeline_mode = #tpu.pipeline_mode<synchronous>, transform_indices = @transform_4, window_bounds = array<i64: 1, 128>}, {pipeline_mode = #tpu.pipeline_mode<synchronous>, transform_indices = @transform_5, window_bounds = array<i64: 1, 128>}, {transform_indices = @transform_6, window_bounds = array<i64: 16, 128>}]} {
    %c0 = arith.constant 0 : index
    %c0_0 = arith.constant 0 : index
    %0 = vector.load %arg1[%c0, %c0_0] : memref<16x128xf32, #tpu.memory_space<vmem>>, vector<16x128xf32>
    %1 = arith.truncf %0 : vector<16x128xf32> to vector<16x128xbf16>
    %c0_1 = arith.constant 0 : index
    %c0_2 = arith.constant 0 : index
    %2 = vector.load %arg3[%c0_1, %c0_2] : memref<128x128xbf16, #tpu.memory_space<vmem>>, vector<128x128xbf16>
    %cst = arith.constant dense<0.000000e+00> : vector<16x128xf32>
    %3 = tpu.matmul %1, %2, %cst {dimension_numbers = #tpu.dot_dimension_numbers<[1], [0], [0], [1], [0, 0, 1, 1], [], []>} : vector<16x128xbf16>, vector<128x128xbf16>, vector<16x128xf32> -> vector<16x128xf32>
    %c0_3 = arith.constant 0 : index
    %c0_4 = arith.constant 0 : index
    %4 = vector.load %arg4[%c0_3, %c0_4] : memref<1x128xf32, #tpu.memory_space<vmem>>, vector<1x128xf32>
    %5 = vector.broadcast %4 : vector<1x128xf32> to vector<16x128xf32>
    %6 = arith.addf %3, %5 : vector<16x128xf32>
    %c0_5 = arith.constant 0 : index
    %c0_6 = arith.constant 0 : index
    %7 = vector.load %arg2[%c0_5, %c0_6] : memref<16x128xf32, #tpu.memory_space<vmem>>, vector<16x128xf32>
    %8 = arith.addf %6, %7 : vector<16x128xf32>
    %cst_7 = arith.constant dense<0.000000e+00> : vector<16xf32>
    %9 = vector.multi_reduction <add>, %8, %cst_7 [1] : vector<16x128xf32> to vector<16xf32>
    %10 = vector.shape_cast %9 : vector<16xf32> to vector<16x1xf32>
    %cst_8 = arith.constant 1.280000e+02 : f32
    %11 = vector.broadcast %cst_8 : f32 to vector<16x1xf32>
    %12 = arith.divf %10, %11 : vector<16x1xf32>
    %13 = arith.mulf %8, %8 : vector<16x128xf32>
    %cst_9 = arith.constant dense<0.000000e+00> : vector<16xf32>
    %14 = vector.multi_reduction <add>, %13, %cst_9 [1] : vector<16x128xf32> to vector<16xf32>
    %15 = vector.shape_cast %14 : vector<16xf32> to vector<16x1xf32>
    %cst_10 = arith.constant 1.280000e+02 : f32
    %16 = vector.broadcast %cst_10 : f32 to vector<16x1xf32>
    %17 = arith.divf %15, %16 : vector<16x1xf32>
    %18 = vector.broadcast %12 : vector<16x1xf32> to vector<16x128xf32>
    %19 = arith.subf %8, %18 : vector<16x128xf32>
    %20 = arith.mulf %12, %12 : vector<16x1xf32>
    %21 = arith.subf %17, %20 : vector<16x1xf32>
    %cst_11 = arith.constant 9.99999996E-13 : f32
    %22 = vector.broadcast %cst_11 : f32 to vector<16x1xf32>
    %23 = arith.addf %21, %22 : vector<16x1xf32>
    %24 = math.rsqrt %23 : vector<16x1xf32>
    %25 = vector.broadcast %24 : vector<16x1xf32> to vector<16x128xf32>
    %26 = arith.mulf %19, %25 : vector<16x128xf32>
    %c0_12 = arith.constant 0 : index
    %c0_13 = arith.constant 0 : index
    %27 = vector.load %arg5[%c0_12, %c0_13] : memref<1x128xf32, #tpu.memory_space<vmem>>, vector<1x128xf32>
    %28 = vector.broadcast %27 : vector<1x128xf32> to vector<16x128xf32>
    %29 = arith.mulf %28, %26 : vector<16x128xf32>
    %c0_14 = arith.constant 0 : index
    %c0_15 = arith.constant 0 : index
    %30 = vector.load %arg6[%c0_14, %c0_15] : memref<1x128xf32, #tpu.memory_space<vmem>>, vector<1x128xf32>
    %31 = vector.broadcast %30 : vector<1x128xf32> to vector<16x128xf32>
    %32 = arith.addf %29, %31 : vector<16x128xf32>
    %c0_16 = arith.constant 0 : index
    %c0_17 = arith.constant 0 : index
    %33 = vector.load %arg7[%c0_16, %c0_17] : memref<16x128xf32, #tpu.memory_space<vmem>>, vector<16x128xf32>
    tpu.vector_store %arg7[%c0_16, %c0_17], %32 {strides = array<i32>} : memref<16x128xf32, #tpu.memory_space<vmem>>, vector<16x128xf32>,
    return
  }
  func.func @transform_0(%arg0: i32) -> (i32, i32) {
    %c0_i32 = arith.constant 0 : i32
    %c0_i32_0 = arith.constant 0 : i32
    return %arg0, %c0_i32 : i32, i32
  }
  func.func @transform_1(%arg0: i32) -> (i32, i32) {
    %c0_i32 = arith.constant 0 : i32
    %c0_i32_0 = arith.constant 0 : i32
    return %arg0, %c0_i32 : i32, i32
  }
  func.func @transform_2(%arg0: i32) -> (i32, i32) {
    %c0_i32 = arith.constant 0 : i32
    %c0_i32_0 = arith.constant 0 : i32
    %c0_i32_1 = arith.constant 0 : i32
    return %c0_i32, %c0_i32_0 : i32, i32
  }
  func.func @transform_3(%arg0: i32) -> (i32, i32) {
    %c0_i32 = arith.constant 0 : i32
    %c0_i32_0 = arith.constant 0 : i32
    %c0_i32_1 = arith.constant 0 : i32
    return %c0_i32, %c0_i32_0 : i32, i32
  }
  func.func @transform_4(%arg0: i32) -> (i32, i32) {
    %c0_i32 = arith.constant 0 : i32
    %c0_i32_0 = arith.constant 0 : i32
    %c0_i32_1 = arith.constant 0 : i32
    return %c0_i32, %c0_i32_0 : i32, i32
  }
  func.func @transform_5(%arg0: i32) -> (i32, i32) {
    %c0_i32 = arith.constant 0 : i32
    %c0_i32_0 = arith.constant 0 : i32
    %c0_i32_1 = arith.constant 0 : i32
    return %c0_i32, %c0_i32_0 : i32, i32
  }
  func.func @transform_6(%arg0: i32) -> (i32, i32) {
    %c0_i32 = arith.constant 0 : i32
    %c0_i32_0 = arith.constant 0 : i32
    return %arg0, %c0_i32 : i32, i32
  }
}

module attributes {stable_mosaic.version = 11 : i64} {
  func.func @_ffn_kernel(%arg0: i32, %arg1: i32, %arg2: memref<16x128xf32, #tpu.memory_space<vmem>>, %arg3: memref<128x256xbf16, #tpu.memory_space<vmem>>, %arg4: memref<1x256xf32, #tpu.memory_space<vmem>>, %arg5: memref<256x128xbf16, #tpu.memory_space<vmem>>, %arg6: memref<1x128xf32, #tpu.memory_space<vmem>>, %arg7: memref<1x128xf32, #tpu.memory_space<vmem>>, %arg8: memref<1x128xf32, #tpu.memory_space<vmem>>, %arg9: memref<16x128xf32, #tpu.memory_space<vmem>>, %arg10: memref<16x128xf32, #tpu.memory_space<vmem>>) attributes {dimension_semantics = [#tpu.dimension_semantics<parallel>, #tpu.dimension_semantics<arbitrary>], iteration_bounds = array<i64: 1, 2>, scalar_prefetch = 0 : i64, scratch_operands = 1 : i64, tpu.core_type = #tpu.core_type<tc>, window_params = [{transform_indices = @transform_0, window_bounds = array<i64: 16, 128>}, {transform_indices = @transform_1, window_bounds = array<i64: 128, 256>}, {transform_indices = @transform_2, window_bounds = array<i64: 1, 256>}, {transform_indices = @transform_3, window_bounds = array<i64: 256, 128>}, {pipeline_mode = #tpu.pipeline_mode<synchronous>, transform_indices = @transform_4, window_bounds = array<i64: 1, 128>}, {pipeline_mode = #tpu.pipeline_mode<synchronous>, transform_indices = @transform_5, window_bounds = array<i64: 1, 128>}, {pipeline_mode = #tpu.pipeline_mode<synchronous>, transform_indices = @transform_6, window_bounds = array<i64: 1, 128>}, {transform_indices = @transform_7, window_bounds = array<i64: 16, 128>}]} {
    %c0_i32 = arith.constant 0 : i32
    %0 = arith.cmpi eq, %arg1, %c0_i32 : i32
    %1 = arith.extui %0 : i1 to i32
    %c0_i32_0 = arith.constant 0 : i32
    %2 = arith.cmpi ne, %1, %c0_i32_0 : i32
    scf.if %2 {
      %cst_16 = arith.constant 0.000000e+00 : f32
      %25 = vector.broadcast %cst_16 : f32 to vector<16x128xf32>
      %c0_17 = arith.constant 0 : index
      %c0_18 = arith.constant 0 : index
      %26 = vector.load %arg10[%c0_17, %c0_18] : memref<16x128xf32, #tpu.memory_space<vmem>>, vector<16x128xf32>
      tpu.vector_store %arg10[%c0_17, %c0_18], %25 {strides = array<i32>} : memref<16x128xf32, #tpu.memory_space<vmem>>, vector<16x128xf32>,
    } else {
    }
    %c0 = arith.constant 0 : index
    %c0_1 = arith.constant 0 : index
    %3 = vector.load %arg2[%c0, %c0_1] : memref<16x128xf32, #tpu.memory_space<vmem>>, vector<16x128xf32>
    %4 = arith.truncf %3 : vector<16x128xf32> to vector<16x128xbf16>
    %c0_2 = arith.constant 0 : index
    %c0_3 = arith.constant 0 : index
    %5 = vector.load %arg3[%c0_2, %c0_3] : memref<128x256xbf16, #tpu.memory_space<vmem>>, vector<128x256xbf16>
    %cst = arith.constant dense<0.000000e+00> : vector<16x256xf32>
    %6 = tpu.matmul %4, %5, %cst {dimension_numbers = #tpu.dot_dimension_numbers<[1], [0], [0], [1], [0, 0, 1, 1], [], []>} : vector<16x128xbf16>, vector<128x256xbf16>, vector<16x256xf32> -> vector<16x256xf32>
    %c0_4 = arith.constant 0 : index
    %c0_5 = arith.constant 0 : index
    %7 = vector.load %arg4[%c0_4, %c0_5] : memref<1x256xf32, #tpu.memory_space<vmem>>, vector<1x256xf32>
    %8 = vector.broadcast %7 : vector<1x256xf32> to vector<16x256xf32>
    %9 = arith.addf %6, %8 : vector<16x256xf32>
    %cst_6 = arith.constant 0.000000e+00 : f32
    %10 = vector.broadcast %cst_6 : f32 to vector<16x256xf32>
    %11 = arith.cmpf ogt, %9, %10 : vector<16x256xf32>
    %12 = math.exp %9 : vector<16x256xf32>
    %cst_7 = arith.constant 1.000000e+00 : f32
    %13 = vector.broadcast %cst_7 : f32 to vector<16x256xf32>
    %14 = arith.subf %12, %13 : vector<16x256xf32>
    %15 = arith.select %11, %9, %14 : vector<16x256xi1>, vector<16x256xf32>
    %c0_8 = arith.constant 0 : index
    %c0_9 = arith.constant 0 : index
    %16 = vector.load %arg10[%c0_8, %c0_9] : memref<16x128xf32, #tpu.memory_space<vmem>>, vector<16x128xf32>
    %17 = arith.truncf %15 : vector<16x256xf32> to vector<16x256xbf16>
    %c0_10 = arith.constant 0 : index
    %c0_11 = arith.constant 0 : index
    %18 = vector.load %arg5[%c0_10, %c0_11] : memref<256x128xbf16, #tpu.memory_space<vmem>>, vector<256x128xbf16>
    %cst_12 = arith.constant dense<0.000000e+00> : vector<16x128xf32>
    %19 = tpu.matmul %17, %18, %cst_12 {dimension_numbers = #tpu.dot_dimension_numbers<[1], [0], [0], [1], [0, 0, 1, 1], [], []>} : vector<16x256xbf16>, vector<256x128xbf16>, vector<16x128xf32> -> vector<16x128xf32>
    %20 = arith.addf %16, %19 : vector<16x128xf32>
    %c0_13 = arith.constant 0 : index
    %c0_14 = arith.constant 0 : index
    %21 = vector.load %arg10[%c0_13, %c0_14] : memref<16x128xf32, #tpu.memory_space<vmem>>, vector<16x128xf32>
    tpu.vector_store %arg10[%c0_13, %c0_14], %20 {strides = array<i32>} : memref<16x128xf32, #tpu.memory_space<vmem>>, vector<16x128xf32>,
    %c1_i32 = arith.constant 1 : i32
    %22 = arith.cmpi eq, %arg1, %c1_i32 : i32
    %23 = arith.extui %22 : i1 to i32
    %c0_i32_15 = arith.constant 0 : i32
    %24 = arith.cmpi ne, %23, %c0_i32_15 : i32
    scf.if %24 {
      %c0_16 = arith.constant 0 : index
      %c0_17 = arith.constant 0 : index
      %25 = vector.load %arg10[%c0_16, %c0_17] : memref<16x128xf32, #tpu.memory_space<vmem>>, vector<16x128xf32>
      %c0_18 = arith.constant 0 : index
      %c0_19 = arith.constant 0 : index
      %26 = vector.load %arg6[%c0_18, %c0_19] : memref<1x128xf32, #tpu.memory_space<vmem>>, vector<1x128xf32>
      %27 = vector.broadcast %26 : vector<1x128xf32> to vector<16x128xf32>
      %28 = arith.addf %25, %27 : vector<16x128xf32>
      %29 = arith.addf %28, %3 : vector<16x128xf32>
      %cst_20 = arith.constant dense<0.000000e+00> : vector<16xf32>
      %30 = vector.multi_reduction <add>, %29, %cst_20 [1] : vector<16x128xf32> to vector<16xf32>
      %31 = vector.shape_cast %30 : vector<16xf32> to vector<16x1xf32>
      %cst_21 = arith.constant 1.280000e+02 : f32
      %32 = vector.broadcast %cst_21 : f32 to vector<16x1xf32>
      %33 = arith.divf %31, %32 : vector<16x1xf32>
      %34 = arith.mulf %29, %29 : vector<16x128xf32>
      %cst_22 = arith.constant dense<0.000000e+00> : vector<16xf32>
      %35 = vector.multi_reduction <add>, %34, %cst_22 [1] : vector<16x128xf32> to vector<16xf32>
      %36 = vector.shape_cast %35 : vector<16xf32> to vector<16x1xf32>
      %cst_23 = arith.constant 1.280000e+02 : f32
      %37 = vector.broadcast %cst_23 : f32 to vector<16x1xf32>
      %38 = arith.divf %36, %37 : vector<16x1xf32>
      %39 = vector.broadcast %33 : vector<16x1xf32> to vector<16x128xf32>
      %40 = arith.subf %29, %39 : vector<16x128xf32>
      %41 = arith.mulf %33, %33 : vector<16x1xf32>
      %42 = arith.subf %38, %41 : vector<16x1xf32>
      %cst_24 = arith.constant 9.99999996E-13 : f32
      %43 = vector.broadcast %cst_24 : f32 to vector<16x1xf32>
      %44 = arith.addf %42, %43 : vector<16x1xf32>
      %45 = math.rsqrt %44 : vector<16x1xf32>
      %46 = vector.broadcast %45 : vector<16x1xf32> to vector<16x128xf32>
      %47 = arith.mulf %40, %46 : vector<16x128xf32>
      %c0_25 = arith.constant 0 : index
      %c0_26 = arith.constant 0 : index
      %48 = vector.load %arg7[%c0_25, %c0_26] : memref<1x128xf32, #tpu.memory_space<vmem>>, vector<1x128xf32>
      %49 = vector.broadcast %48 : vector<1x128xf32> to vector<16x128xf32>
      %50 = arith.mulf %49, %47 : vector<16x128xf32>
      %c0_27 = arith.constant 0 : index
      %c0_28 = arith.constant 0 : index
      %51 = vector.load %arg8[%c0_27, %c0_28] : memref<1x128xf32, #tpu.memory_space<vmem>>, vector<1x128xf32>
      %52 = vector.broadcast %51 : vector<1x128xf32> to vector<16x128xf32>
      %53 = arith.addf %50, %52 : vector<16x128xf32>
      %cst_29 = arith.constant 0.000000e+00 : f32
      %54 = vector.broadcast %cst_29 : f32 to vector<16x128xf32>
      %55 = arith.cmpf ogt, %53, %54 : vector<16x128xf32>
      %56 = math.exp %53 : vector<16x128xf32>
      %cst_30 = arith.constant 1.000000e+00 : f32
      %57 = vector.broadcast %cst_30 : f32 to vector<16x128xf32>
      %58 = arith.subf %56, %57 : vector<16x128xf32>
      %59 = arith.select %55, %53, %58 : vector<16x128xi1>, vector<16x128xf32>
      %cst_31 = arith.constant 1.000000e+00 : f32
      %60 = vector.broadcast %cst_31 : f32 to vector<16x128xf32>
      %61 = arith.addf %59, %60 : vector<16x128xf32>
      %c0_32 = arith.constant 0 : index
      %c0_33 = arith.constant 0 : index
      %62 = vector.load %arg9[%c0_32, %c0_33] : memref<16x128xf32, #tpu.memory_space<vmem>>, vector<16x128xf32>
      tpu.vector_store %arg9[%c0_32, %c0_33], %61 {strides = array<i32>} : memref<16x128xf32, #tpu.memory_space<vmem>>, vector<16x128xf32>,
    } else {
    }
    return
  }
  func.func @transform_0(%arg0: i32, %arg1: i32) -> (i32, i32) {
    %c0_i32 = arith.constant 0 : i32
    %c0_i32_0 = arith.constant 0 : i32
    return %arg0, %c0_i32 : i32, i32
  }
  func.func @transform_1(%arg0: i32, %arg1: i32) -> (i32, i32) {
    %c0_i32 = arith.constant 0 : i32
    %c0_i32_0 = arith.constant 0 : i32
    return %c0_i32, %arg1 : i32, i32
  }
  func.func @transform_2(%arg0: i32, %arg1: i32) -> (i32, i32) {
    %c0_i32 = arith.constant 0 : i32
    %c0_i32_0 = arith.constant 0 : i32
    return %c0_i32, %arg1 : i32, i32
  }
  func.func @transform_3(%arg0: i32, %arg1: i32) -> (i32, i32) {
    %c0_i32 = arith.constant 0 : i32
    %c0_i32_0 = arith.constant 0 : i32
    return %arg1, %c0_i32 : i32, i32
  }
  func.func @transform_4(%arg0: i32, %arg1: i32) -> (i32, i32) {
    %c0_i32 = arith.constant 0 : i32
    %c0_i32_0 = arith.constant 0 : i32
    %c0_i32_1 = arith.constant 0 : i32
    return %c0_i32, %c0_i32_0 : i32, i32
  }
  func.func @transform_5(%arg0: i32, %arg1: i32) -> (i32, i32) {
    %c0_i32 = arith.constant 0 : i32
    %c0_i32_0 = arith.constant 0 : i32
    %c0_i32_1 = arith.constant 0 : i32
    return %c0_i32, %c0_i32_0 : i32, i32
  }
  func.func @transform_6(%arg0: i32, %arg1: i32) -> (i32, i32) {
    %c0_i32 = arith.constant 0 : i32
    %c0_i32_0 = arith.constant 0 : i32
    %c0_i32_1 = arith.constant 0 : i32
    return %c0_i32, %c0_i32_0 : i32, i32
  }
  func.func @transform_7(%arg0: i32, %arg1: i32) -> (i32, i32) {
    %c0_i32 = arith.constant 0 : i32
    %c0_i32_0 = arith.constant 0 : i32
    return %arg0, %c0_i32 : i32, i32
  }
}

module attributes {stable_mosaic.version = 11 : i64} {
  func.func @_ffn_kernel(%arg0: i32, %arg1: i32, %arg2: memref<16x128xf32, #tpu.memory_space<vmem>>, %arg3: memref<128x256xbf16, #tpu.memory_space<vmem>>, %arg4: memref<1x256xf32, #tpu.memory_space<vmem>>, %arg5: memref<256x128xbf16, #tpu.memory_space<vmem>>, %arg6: memref<1x128xf32, #tpu.memory_space<vmem>>, %arg7: memref<1x128xf32, #tpu.memory_space<vmem>>, %arg8: memref<1x128xf32, #tpu.memory_space<vmem>>, %arg9: memref<16x128xf32, #tpu.memory_space<vmem>>, %arg10: memref<16x128xf32, #tpu.memory_space<vmem>>) attributes {dimension_semantics = [#tpu.dimension_semantics<parallel>, #tpu.dimension_semantics<arbitrary>], iteration_bounds = array<i64: 1, 2>, scalar_prefetch = 0 : i64, scratch_operands = 1 : i64, tpu.core_type = #tpu.core_type<tc>, window_params = [{transform_indices = @transform_0, window_bounds = array<i64: 16, 128>}, {transform_indices = @transform_1, window_bounds = array<i64: 128, 256>}, {transform_indices = @transform_2, window_bounds = array<i64: 1, 256>}, {transform_indices = @transform_3, window_bounds = array<i64: 256, 128>}, {pipeline_mode = #tpu.pipeline_mode<synchronous>, transform_indices = @transform_4, window_bounds = array<i64: 1, 128>}, {pipeline_mode = #tpu.pipeline_mode<synchronous>, transform_indices = @transform_5, window_bounds = array<i64: 1, 128>}, {pipeline_mode = #tpu.pipeline_mode<synchronous>, transform_indices = @transform_6, window_bounds = array<i64: 1, 128>}, {transform_indices = @transform_7, window_bounds = array<i64: 16, 128>}]} {
    %c0_i32 = arith.constant 0 : i32
    %0 = arith.cmpi eq, %arg1, %c0_i32 : i32
    %1 = arith.extui %0 : i1 to i32
    %c0_i32_0 = arith.constant 0 : i32
    %2 = arith.cmpi ne, %1, %c0_i32_0 : i32
    scf.if %2 {
      %cst_16 = arith.constant 0.000000e+00 : f32
      %25 = vector.broadcast %cst_16 : f32 to vector<16x128xf32>
      %c0_17 = arith.constant 0 : index
      %c0_18 = arith.constant 0 : index
      %26 = vector.load %arg10[%c0_17, %c0_18] : memref<16x128xf32, #tpu.memory_space<vmem>>, vector<16x128xf32>
      tpu.vector_store %arg10[%c0_17, %c0_18], %25 {strides = array<i32>} : memref<16x128xf32, #tpu.memory_space<vmem>>, vector<16x128xf32>,
    } else {
    }
    %c0 = arith.constant 0 : index
    %c0_1 = arith.constant 0 : index
    %3 = vector.load %arg2[%c0, %c0_1] : memref<16x128xf32, #tpu.memory_space<vmem>>, vector<16x128xf32>
    %4 = arith.truncf %3 : vector<16x128xf32> to vector<16x128xbf16>
    %c0_2 = arith.constant 0 : index
    %c0_3 = arith.constant 0 : index
    %5 = vector.load %arg3[%c0_2, %c0_3] : memref<128x256xbf16, #tpu.memory_space<vmem>>, vector<128x256xbf16>
    %cst = arith.constant dense<0.000000e+00> : vector<16x256xf32>
    %6 = tpu.matmul %4, %5, %cst {dimension_numbers = #tpu.dot_dimension_numbers<[1], [0], [0], [1], [0, 0, 1, 1], [], []>} : vector<16x128xbf16>, vector<128x256xbf16>, vector<16x256xf32> -> vector<16x256xf32>
    %c0_4 = arith.constant 0 : index
    %c0_5 = arith.constant 0 : index
    %7 = vector.load %arg4[%c0_4, %c0_5] : memref<1x256xf32, #tpu.memory_space<vmem>>, vector<1x256xf32>
    %8 = vector.broadcast %7 : vector<1x256xf32> to vector<16x256xf32>
    %9 = arith.addf %6, %8 : vector<16x256xf32>
    %cst_6 = arith.constant 0.000000e+00 : f32
    %10 = vector.broadcast %cst_6 : f32 to vector<16x256xf32>
    %11 = arith.cmpf ogt, %9, %10 : vector<16x256xf32>
    %12 = math.exp %9 : vector<16x256xf32>
    %cst_7 = arith.constant 1.000000e+00 : f32
    %13 = vector.broadcast %cst_7 : f32 to vector<16x256xf32>
    %14 = arith.subf %12, %13 : vector<16x256xf32>
    %15 = arith.select %11, %9, %14 : vector<16x256xi1>, vector<16x256xf32>
    %c0_8 = arith.constant 0 : index
    %c0_9 = arith.constant 0 : index
    %16 = vector.load %arg10[%c0_8, %c0_9] : memref<16x128xf32, #tpu.memory_space<vmem>>, vector<16x128xf32>
    %17 = arith.truncf %15 : vector<16x256xf32> to vector<16x256xbf16>
    %c0_10 = arith.constant 0 : index
    %c0_11 = arith.constant 0 : index
    %18 = vector.load %arg5[%c0_10, %c0_11] : memref<256x128xbf16, #tpu.memory_space<vmem>>, vector<256x128xbf16>
    %cst_12 = arith.constant dense<0.000000e+00> : vector<16x128xf32>
    %19 = tpu.matmul %17, %18, %cst_12 {dimension_numbers = #tpu.dot_dimension_numbers<[1], [0], [0], [1], [0, 0, 1, 1], [], []>} : vector<16x256xbf16>, vector<256x128xbf16>, vector<16x128xf32> -> vector<16x128xf32>
    %20 = arith.addf %16, %19 : vector<16x128xf32>
    %c0_13 = arith.constant 0 : index
    %c0_14 = arith.constant 0 : index
    %21 = vector.load %arg10[%c0_13, %c0_14] : memref<16x128xf32, #tpu.memory_space<vmem>>, vector<16x128xf32>
    tpu.vector_store %arg10[%c0_13, %c0_14], %20 {strides = array<i32>} : memref<16x128xf32, #tpu.memory_space<vmem>>, vector<16x128xf32>,
    %c1_i32 = arith.constant 1 : i32
    %22 = arith.cmpi eq, %arg1, %c1_i32 : i32
    %23 = arith.extui %22 : i1 to i32
    %c0_i32_15 = arith.constant 0 : i32
    %24 = arith.cmpi ne, %23, %c0_i32_15 : i32
    scf.if %24 {
      %c0_16 = arith.constant 0 : index
      %c0_17 = arith.constant 0 : index
      %25 = vector.load %arg10[%c0_16, %c0_17] : memref<16x128xf32, #tpu.memory_space<vmem>>, vector<16x128xf32>
      %c0_18 = arith.constant 0 : index
      %c0_19 = arith.constant 0 : index
      %26 = vector.load %arg6[%c0_18, %c0_19] : memref<1x128xf32, #tpu.memory_space<vmem>>, vector<1x128xf32>
      %27 = vector.broadcast %26 : vector<1x128xf32> to vector<16x128xf32>
      %28 = arith.addf %25, %27 : vector<16x128xf32>
      %29 = arith.addf %28, %3 : vector<16x128xf32>
      %cst_20 = arith.constant dense<0.000000e+00> : vector<16xf32>
      %30 = vector.multi_reduction <add>, %29, %cst_20 [1] : vector<16x128xf32> to vector<16xf32>
      %31 = vector.shape_cast %30 : vector<16xf32> to vector<16x1xf32>
      %cst_21 = arith.constant 1.280000e+02 : f32
      %32 = vector.broadcast %cst_21 : f32 to vector<16x1xf32>
      %33 = arith.divf %31, %32 : vector<16x1xf32>
      %34 = arith.mulf %29, %29 : vector<16x128xf32>
      %cst_22 = arith.constant dense<0.000000e+00> : vector<16xf32>
      %35 = vector.multi_reduction <add>, %34, %cst_22 [1] : vector<16x128xf32> to vector<16xf32>
      %36 = vector.shape_cast %35 : vector<16xf32> to vector<16x1xf32>
      %cst_23 = arith.constant 1.280000e+02 : f32
      %37 = vector.broadcast %cst_23 : f32 to vector<16x1xf32>
      %38 = arith.divf %36, %37 : vector<16x1xf32>
      %39 = vector.broadcast %33 : vector<16x1xf32> to vector<16x128xf32>
      %40 = arith.subf %29, %39 : vector<16x128xf32>
      %41 = arith.mulf %33, %33 : vector<16x1xf32>
      %42 = arith.subf %38, %41 : vector<16x1xf32>
      %cst_24 = arith.constant 9.99999996E-13 : f32
      %43 = vector.broadcast %cst_24 : f32 to vector<16x1xf32>
      %44 = arith.addf %42, %43 : vector<16x1xf32>
      %45 = math.rsqrt %44 : vector<16x1xf32>
      %46 = vector.broadcast %45 : vector<16x1xf32> to vector<16x128xf32>
      %47 = arith.mulf %40, %46 : vector<16x128xf32>
      %c0_25 = arith.constant 0 : index
      %c0_26 = arith.constant 0 : index
      %48 = vector.load %arg7[%c0_25, %c0_26] : memref<1x128xf32, #tpu.memory_space<vmem>>, vector<1x128xf32>
      %49 = vector.broadcast %48 : vector<1x128xf32> to vector<16x128xf32>
      %50 = arith.mulf %49, %47 : vector<16x128xf32>
      %c0_27 = arith.constant 0 : index
      %c0_28 = arith.constant 0 : index
      %51 = vector.load %arg8[%c0_27, %c0_28] : memref<1x128xf32, #tpu.memory_space<vmem>>, vector<1x128xf32>
      %52 = vector.broadcast %51 : vector<1x128xf32> to vector<16x128xf32>
      %53 = arith.addf %50, %52 : vector<16x128xf32>
      %c0_29 = arith.constant 0 : index
      %c0_30 = arith.constant 0 : index
      %54 = vector.load %arg9[%c0_29, %c0_30] : memref<16x128xf32, #tpu.memory_space<vmem>>, vector<16x128xf32>
      tpu.vector_store %arg9[%c0_29, %c0_30], %53 {strides = array<i32>} : memref<16x128xf32, #tpu.memory_space<vmem>>, vector<16x128xf32>,
    } else {
    }
    return
  }
  func.func @transform_0(%arg0: i32, %arg1: i32) -> (i32, i32) {
    %c0_i32 = arith.constant 0 : i32
    %c0_i32_0 = arith.constant 0 : i32
    return %arg0, %c0_i32 : i32, i32
  }
  func.func @transform_1(%arg0: i32, %arg1: i32) -> (i32, i32) {
    %c0_i32 = arith.constant 0 : i32
    %c0_i32_0 = arith.constant 0 : i32
    return %c0_i32, %arg1 : i32, i32
  }
  func.func @transform_2(%arg0: i32, %arg1: i32) -> (i32, i32) {
    %c0_i32 = arith.constant 0 : i32
    %c0_i32_0 = arith.constant 0 : i32
    return %c0_i32, %arg1 : i32, i32
  }
  func.func @transform_3(%arg0: i32, %arg1: i32) -> (i32, i32) {
    %c0_i32 = arith.constant 0 : i32
    %c0_i32_0 = arith.constant 0 : i32
    return %arg1, %c0_i32 : i32, i32
  }
  func.func @transform_4(%arg0: i32, %arg1: i32) -> (i32, i32) {
    %c0_i32 = arith.constant 0 : i32
    %c0_i32_0 = arith.constant 0 : i32
    %c0_i32_1 = arith.constant 0 : i32
    return %c0_i32, %c0_i32_0 : i32, i32
  }
  func.func @transform_5(%arg0: i32, %arg1: i32) -> (i32, i32) {
    %c0_i32 = arith.constant 0 : i32
    %c0_i32_0 = arith.constant 0 : i32
    %c0_i32_1 = arith.constant 0 : i32
    return %c0_i32, %c0_i32_0 : i32, i32
  }
  func.func @transform_6(%arg0: i32, %arg1: i32) -> (i32, i32) {
    %c0_i32 = arith.constant 0 : i32
    %c0_i32_0 = arith.constant 0 : i32
    %c0_i32_1 = arith.constant 0 : i32
    return %c0_i32, %c0_i32_0 : i32, i32
  }
  func.func @transform_7(%arg0: i32, %arg1: i32) -> (i32, i32) {
    %c0_i32 = arith.constant 0 : i32
    %c0_i32_0 = arith.constant 0 : i32
    return %arg0, %c0_i32 : i32, i32
  }
}

</mosaic_0001>

<llo_original>
// kernel: dist_layer_forward.7
$region0: #{dist_layer_forward.7}
  #allocation0 [shape = 'u32[]', space=smem, size = 0x4, offset = 0x4, fixed_abs, tag = 'smem constant byte address 0x4 - core index']
  #allocation1 [shape = 'u32[144,128]{1,0:T(1,128)}', space=vmem, size = 0x12000, scoped, tag = 'internal scratch']
  %s0 = inlined_call_operand.vmem [shape: f32[16,128], index: 0, kind: input, shape index: {}]
  %s1 = inlined_call_operand.vmem [shape: bf16[128,384], index: 1, kind: input, shape index: {}]
  %s2 = inlined_call_operand.vmem [shape: f32[1,384], index: 2, kind: input, shape index: {}]
  %s3 = inlined_call_operand.vmem [shape: f32[16,384], index: 3, kind: output, shape index: {}]
  %s4 = sld [smem:[#allocation0]]
  $region22: #{dist_layer_forward.7} parent=0
    _
  %s6 = ssub.s32 1, %s4
  %s7 = scalar_select 0, %s6, %s4
  // Predicated region
  $region2: #{dist_layer_forward.7} parent=0 // pred_check
    _
  $region3: #{dist_layer_forward.7} parent=0 // pred_check_branch
    %9 = sbr.rel (0) target = $region5
  $region4: #{dist_layer_forward.7} parent=0 // pred_region
    _
  $region5: #{dist_layer_forward.7} parent=0 // pred_fallthru
    _
  // Predicated region
  $region6: #{dist_layer_forward.7} parent=0 // pred_check
    _
  $region7: #{dist_layer_forward.7} parent=0 // pred_check_branch
    %11 = sbr.rel (0) target = $region9
  $region8: #{dist_layer_forward.7} parent=0 // pred_region
    _
  $region9: #{dist_layer_forward.7} parent=0 // pred_fallthru
    _
  // Predicated region
  $region10: #{dist_layer_forward.7} parent=0 // pred_check
    _
  $region11: #{dist_layer_forward.7} parent=0 // pred_check_branch
    %13 = sbr.rel (0) target = $region13
  $region12: #{dist_layer_forward.7} parent=0 // pred_region
    _
  $region13: #{dist_layer_forward.7} parent=0 // pred_fallthru
    _
  %v15 = vld [vmem:[%s0] sm:$0xff]
  %v16 = vld [vmem:[%s0 + $0x8] sm:$0xff]
  %v17 = vpack.c.bf16 %v16, %v15
  %v18 = vld [vmem:[%s1] sm:$0xff]
  %v19 = vld [vmem:[%s1 + $0x8] sm:$0xf]
  %v20 = vld [vmem:[%s1 + $0xc] sm:$0xff]
  %v21 = vld [vmem:[%s1 + $0x14] sm:$0xf]
  %v22 = vld [vmem:[%s1 + $0x18] sm:$0xff]
  %v23 = vld [vmem:[%s1 + $0x20] sm:$0xf]
  %v24 = vld [vmem:[%s1 + $0x24] sm:$0xff]
  %v25 = vld [vmem:[%s1 + $0x2c] sm:$0xf]
  %v26 = vld [vmem:[%s1 + $0x30] sm:$0xff]
  %v27 = vld [vmem:[%s1 + $0x38] sm:$0xf]
  %v28 = vld [vmem:[%s1 + $0x3c] sm:$0xff]
  %v29 = vld [vmem:[%s1 + $0x44] sm:$0xf]
  %v30 = vld [vmem:[%s1 + $0x48] sm:$0xff]
  %v31 = vld [vmem:[%s1 + $0x50] sm:$0xf]
  %v32 = vld [vmem:[%s1 + $0x54] sm:$0xff]
  %v33 = vld [vmem:[%s1 + $0x5c] sm:$0xf]
  %v34 = vld [vmem:[%s1 + $0x60] sm:$0xff]
  %v35 = vld [vmem:[%s1 + $0x68] sm:$0xf]
  %v36 = vld [vmem:[%s1 + $0x6c] sm:$0xff]
  %v37 = vld [vmem:[%s1 + $0x74] sm:$0xf]
  %v38 = vld [vmem:[%s1 + $0x78] sm:$0xff]
  %v39 = vld [vmem:[%s1 + $0x80] sm:$0xf]
  %v40 = vld [vmem:[%s1 + $0x84] sm:$0xff]
  %v41 = vld [vmem:[%s1 + $0x8c] sm:$0xf]
  %v42 = vld [vmem:[%s1 + $0x90] sm:$0xff]
  %v43 = vld [vmem:[%s1 + $0x98] sm:$0xf]
  %v44 = vld [vmem:[%s1 + $0x9c] sm:$0xff]
  %v45 = vld [vmem:[%s1 + $0xa4] sm:$0xf]
  %v46 = vld [vmem:[%s1 + $0xa8] sm:$0xff]
  %v47 = vld [vmem:[%s1 + $0xb0] sm:$0xf]
  %v48 = vld [vmem:[%s1 + $0xb4] sm:$0xff]
  %v49 = vld [vmem:[%s1 + $0xbc] sm:$0xf]
  %v50 = vld [vmem:[%s2] sm:$0x7]
  %v52 = vlaneseq
  %v53 = vshrl.u32 %v52, 7
  %v54 = vsub.s32 0, %v53
  %v55 = vrot.slane %v50, %v54
  %v56 = vlaneseq
  %v57 = vshrl.u32 %v56, 7
  %v58 = vsub.s32 1, %v57
  %v59 = vrot.slane %v50, %v58
  %v60 = vlaneseq
  %v61 = vshrl.u32 %v60, 7
  %v62 = vsub.s32 2, %v61
  %v63 = vrot.slane %v50, %v62
  %v99 = vunpack.c.l.b16 %v18
  %v100 = vunpack.c.h.b16 %v18
  %v101 = vunpack.c.l.b16 %v19
  %v102 = vunpack.c.l.b16 %v20
  %v103 = vunpack.c.h.b16 %v20
  %v104 = vunpack.c.l.b16 %v21
  %v105 = vunpack.c.l.b16 %v22
  %v106 = vunpack.c.h.b16 %v22
  %v107 = vunpack.c.l.b16 %v23
  %v108 = vunpack.c.l.b16 %v24
  %v109 = vunpack.c.h.b16 %v24
  %v110 = vunpack.c.l.b16 %v25
  %v111 = vunpack.c.l.b16 %v26
  %v112 = vunpack.c.h.b16 %v26
  %v113 = vunpack.c.l.b16 %v27
  %v114 = vunpack.c.l.b16 %v28
  %v115 = vunpack.c.h.b16 %v28
  %v116 = vunpack.c.l.b16 %v29
  %v117 = vunpack.c.l.b16 %v30
  %v118 = vunpack.c.h.b16 %v30
  %v119 = vunpack.c.l.b16 %v31
  %v120 = vunpack.c.l.b16 %v32
  %v121 = vunpack.c.h.b16 %v32
  %v122 = vunpack.c.l.b16 %v33
  %v123 = vunpack.c.l.b16 %v34
  %v124 = vunpack.c.h.b16 %v34
  %v125 = vunpack.c.l.b16 %v35
  %v126 = vunpack.c.l.b16 %v36
  %v127 = vunpack.c.h.b16 %v36
  %v128 = vunpack.c.l.b16 %v37
  %v129 = vunpack.c.l.b16 %v38
  %v130 = vunpack.c.h.b16 %v38
  %v131 = vunpack.c.l.b16 %v39
  %v132 = vunpack.c.l.b16 %v40
  %v133 = vunpack.c.h.b16 %v40
  %v134 = vunpack.c.l.b16 %v41
  %v135 = vunpack.c.l.b16 %v42
  %v136 = vunpack.c.h.b16 %v42
  %v137 = vunpack.c.l.b16 %v43
  %v138 = vunpack.c.l.b16 %v44
  %v139 = vunpack.c.h.b16 %v44
  %v140 = vunpack.c.l.b16 %v45
  %v141 = vunpack.c.l.b16 %v46
  %v142 = vunpack.c.h.b16 %v46
  %v143 = vunpack.c.l.b16 %v47
  %v144 = vunpack.c.l.b16 %v48
  %v145 = vunpack.c.h.b16 %v48
  %v146 = vunpack.c.l.b16 %v49
  %v147 = vpack.c.b16 %v102, %v99
  %v148 = vpack.c.b16 %v103, %v100
  %v149 = vpack.c.b16 %v104, %v101
  %v150 = vpack.c.b16 %v108, %v105
  %v151 = vpack.c.b16 %v109, %v106
  %v152 = vpack.c.b16 %v110, %v107
  %v153 = vpack.c.b16 %v114, %v111
  %v154 = vpack.c.b16 %v115, %v112
  %v155 = vpack.c.b16 %v116, %v113
  %v156 = vpack.c.b16 %v120, %v117
  %v157 = vpack.c.b16 %v121, %v118
  %v158 = vpack.c.b16 %v122, %v119
  %v159 = vpack.c.b16 %v126, %v123
  %v160 = vpack.c.b16 %v127, %v124
  %v161 = vpack.c.b16 %v128, %v125
  %v162 = vpack.c.b16 %v132, %v129
  %v163 = vpack.c.b16 %v133, %v130
  %v164 = vpack.c.b16 %v134, %v131
  %v165 = vpack.c.b16 %v138, %v135
  %v166 = vpack.c.b16 %v139, %v136
  %v167 = vpack.c.b16 %v140, %v137
  %v168 = vpack.c.b16 %v144, %v141
  %v169 = vpack.c.b16 %v145, %v142
  %v170 = vpack.c.b16 %v146, %v143
  %195 = vmatprep.subr.bf16.mxu0 %v169
  %196 = vmatpush1.bf16.msra.mxu0 %v168
  %197 = vmatprep.subr.bf16.mxu0 %v166
  %198 = vmatpush1.bf16.msra.mxu0 %v165
  %199 = vmatprep.subr.bf16.mxu0 %v163
  %200 = vmatpush1.bf16.msra.mxu0 %v162
  %201 = vmatprep.subr.bf16.mxu0 %v160
  %202 = vmatpush1.bf16.msra.mxu0 %v159
  %203 = vmatprep.subr.bf16.mxu0 %v157
  %204 = vmatpush1.bf16.msra.mxu0 %v156
  %205 = vmatprep.subr.bf16.mxu0 %v154
  %206 = vmatpush1.bf16.msra.mxu0 %v153
  %207 = vmatprep.subr.bf16.mxu0 %v151
  %208 = vmatpush1.bf16.msra.mxu0 %v150
  %209 = vmatprep.subr.bf16.mxu0 %v148
  %210 = vmatpush1.bf16.msra.mxu0 %v147
  %211 = vmatprep.subr.bf16.mxu0 0
  %212 = vmatpush2.bf16.msra.mxu0 0
  %213 = vmatprep.subr.bf16.mxu0 0
  %214 = vmatpush2.bf16.msra.mxu0 0
  %215 = vmatprep.subr.bf16.mxu0 0
  %216 = vmatpush2.bf16.msra.mxu0 0
  %217 = vmatprep.subr.bf16.mxu0 0
  %218 = vmatpush2.bf16.msra.mxu0 0
  %219 = vmatprep.subr.bf16.mxu0 0
  %220 = vmatpush2.bf16.msra.mxu0 0
  %221 = vmatprep.subr.bf16.mxu0 0
  %222 = vmatpush2.bf16.msra.mxu0 0
  %223 = vmatprep.subr.bf16.mxu0 0
  %224 = vmatpush2.bf16.msra.mxu0 0
  %225 = vmatprep.subr.bf16.mxu0 0
  %226 = vmatpush2.bf16.msra.mxu0 0
  %227 = vmatprep.mubr.bf16.mxu0 0
  %228 = vmatmul.mubr.bf16.gmra.mxu0 %v17
  %v229 = vpop.f32.mrf.mxu0
  %v230 = vadd.f32 %v55, %v229
  %v231 = vpop.f32.mrf.mxu0
  %v232 = vadd.f32 %v59, %v231
  %v233 = vpop.f32.mrf.mxu0
  %v234 = vadd.f32 %v55, %v233
  %v235 = vpop.f32.mrf.mxu0
  %v236 = vadd.f32 %v59, %v235
  %237 = vdwg.mxu0
  %238 = vmatprep.subr.bf16.mxu0 0
  %239 = vmatpush1.bf16.msra.mxu0 %v170
  %240 = vmatprep.subr.bf16.mxu0 0
  %241 = vmatpush1.bf16.msra.mxu0 %v167
  %242 = vmatprep.subr.bf16.mxu0 0
  %243 = vmatpush1.bf16.msra.mxu0 %v164
  %244 = vmatprep.subr.bf16.mxu0 0
  %245 = vmatpush1.bf16.msra.mxu0 %v161
  %246 = vmatprep.subr.bf16.mxu0 0
  %247 = vmatpush1.bf16.msra.mxu0 %v158
  %248 = vmatprep.subr.bf16.mxu0 0
  %249 = vmatpush1.bf16.msra.mxu0 %v155
  %250 = vmatprep.subr.bf16.mxu0 0
  %251 = vmatpush1.bf16.msra.mxu0 %v152
  %252 = vmatprep.subr.bf16.mxu0 0
  %253 = vmatpush1.bf16.msra.mxu0 %v149
  %254 = vmatprep.subr.bf16.mxu0 0
  %255 = vmatpush2.bf16.msra.mxu0 0
  %256 = vmatprep.subr.bf16.mxu0 0
  %257 = vmatpush2.bf16.msra.mxu0 0
  %258 = vmatprep.subr.bf16.mxu0 0
  %259 = vmatpush2.bf16.msra.mxu0 0
  %260 = vmatprep.subr.bf16.mxu0 0
  %261 = vmatpush2.bf16.msra.mxu0 0
  %262 = vmatprep.subr.bf16.mxu0 0
  %263 = vmatpush2.bf16.msra.mxu0 0
  %264 = vmatprep.subr.bf16.mxu0 0
  %265 = vmatpush2.bf16.msra.mxu0 0
  %266 = vmatprep.subr.bf16.mxu0 0
  %267 = vmatpush2.bf16.msra.mxu0 0
  %268 = vmatprep.subr.bf16.mxu0 0
  %269 = vmatpush2.bf16.msra.mxu0 0
  %270 = vmatprep.mubr.bf16.mxu0 0
  %271 = vmatmul.mubr.bf16.gmra.mxu0 %v17
  %v272 = vpop.f32.mrf.mxu0
  %v273 = vadd.f32 %v63, %v272
  %v274 = vpop.f32.mrf.mxu0
  %v275 = vpop.f32.mrf.mxu0
  %v276 = vadd.f32 %v63, %v275
  %v277 = vpop.f32.mrf.mxu0
  %278 = vdwg.mxu0
  %279 = vst [vmem:[%s3] sm:$0xff] %v230
  %280 = vst [vmem:[%s3 + $0x8] sm:$0xff] %v232
  %281 = vst [vmem:[%s3 + $0x10] sm:$0xff] %v273
  %282 = vst [vmem:[%s3 + $0x18] sm:$0xff] %v234
  %283 = vst [vmem:[%s3 + $0x20] sm:$0xff] %v236
  %284 = vst [vmem:[%s3 + $0x28] sm:$0xff] %v276
  // Predicated region
  $region14: #{dist_layer_forward.7} parent=0 // pred_check
    _
  $region15: #{dist_layer_forward.7} parent=0 // pred_check_branch
    %286 = sbr.rel (0) target = $region17
  $region16: #{dist_layer_forward.7} parent=0 // pred_region
    _
  $region17: #{dist_layer_forward.7} parent=0 // pred_fallthru
    _
  // Predicated region
  $region18: #{dist_layer_forward.7} parent=0 // pred_check
    _
  $region19: #{dist_layer_forward.7} parent=0 // pred_check_branch
    %288 = sbr.rel (0) target = $region21
  $region20: #{dist_layer_forward.7} parent=0 // pred_region
    _
  $region21: #{dist_layer_forward.7} parent=0 // pred_fallthru
    _

// kernel: dist_layer_forward.8
$region0: #{dist_layer_forward.8}
  #allocation0 [shape = 'u32[]', space=smem, size = 0x4, offset = 0x4, fixed_abs, tag = 'smem constant byte address 0x4 - core index']
  #allocation1 [shape = 'u32[144,128]{1,0:T(1,128)}', space=vmem, size = 0x12000, scoped, tag = 'internal scratch']
  %s0 = inlined_call_operand.vmem [shape: f32[16,128], index: 0, kind: input, shape index: {}]
  %s1 = inlined_call_operand.vmem [shape: bf16[128,384], index: 1, kind: input, shape index: {}]
  %s2 = inlined_call_operand.vmem [shape: f32[1,384], index: 2, kind: input, shape index: {}]
  %s3 = inlined_call_operand.vmem [shape: f32[16,384], index: 3, kind: output, shape index: {}]
  %s4 = sld [smem:[#allocation0]]
  $region22: #{dist_layer_forward.8} parent=0
    _
  %s6 = ssub.s32 1, %s4
  %s7 = scalar_select 0, %s6, %s4
  // Predicated region
  $region2: #{dist_layer_forward.8} parent=0 // pred_check
    _
  $region3: #{dist_layer_forward.8} parent=0 // pred_check_branch
    %9 = sbr.rel (0) target = $region5
  $region4: #{dist_layer_forward.8} parent=0 // pred_region
    _
  $region5: #{dist_layer_forward.8} parent=0 // pred_fallthru
    _
  // Predicated region
  $region6: #{dist_layer_forward.8} parent=0 // pred_check
    _
  $region7: #{dist_layer_forward.8} parent=0 // pred_check_branch
    %11 = sbr.rel (0) target = $region9
  $region8: #{dist_layer_forward.8} parent=0 // pred_region
    _
  $region9: #{dist_layer_forward.8} parent=0 // pred_fallthru
    _
  // Predicated region
  $region10: #{dist_layer_forward.8} parent=0 // pred_check
    _
  $region11: #{dist_layer_forward.8} parent=0 // pred_check_branch
    %13 = sbr.rel (0) target = $region13
  $region12: #{dist_layer_forward.8} parent=0 // pred_region
    _
  $region13: #{dist_layer_forward.8} parent=0 // pred_fallthru
    _
  %v15 = vld [vmem:[%s0] sm:$0xff]
  %v16 = vld [vmem:[%s0 + $0x8] sm:$0xff]
  %v17 = vpack.c.bf16 %v16, %v15
  %v18 = vld [vmem:[%s1] sm:$0xff]
  %v19 = vld [vmem:[%s1 + $0x8] sm:$0xf]
  %v20 = vld [vmem:[%s1 + $0xc] sm:$0xff]
  %v21 = vld [vmem:[%s1 + $0x14] sm:$0xf]
  %v22 = vld [vmem:[%s1 + $0x18] sm:$0xff]
  %v23 = vld [vmem:[%s1 + $0x20] sm:$0xf]
  %v24 = vld [vmem:[%s1 + $0x24] sm:$0xff]
  %v25 = vld [vmem:[%s1 + $0x2c] sm:$0xf]
  %v26 = vld [vmem:[%s1 + $0x30] sm:$0xff]
  %v27 = vld [vmem:[%s1 + $0x38] sm:$0xf]
  %v28 = vld [vmem:[%s1 + $0x3c] sm:$0xff]
  %v29 = vld [vmem:[%s1 + $0x44] sm:$0xf]
  %v30 = vld [vmem:[%s1 + $0x48] sm:$0xff]
  %v31 = vld [vmem:[%s1 + $0x50] sm:$0xf]
  %v32 = vld [vmem:[%s1 + $0x54] sm:$0xff]
  %v33 = vld [vmem:[%s1 + $0x5c] sm:$0xf]
  %v34 = vld [vmem:[%s1 + $0x60] sm:$0xff]
  %v35 = vld [vmem:[%s1 + $0x68] sm:$0xf]
  %v36 = vld [vmem:[%s1 + $0x6c] sm:$0xff]
  %v37 = vld [vmem:[%s1 + $0x74] sm:$0xf]
  %v38 = vld [vmem:[%s1 + $0x78] sm:$0xff]
  %v39 = vld [vmem:[%s1 + $0x80] sm:$0xf]
  %v40 = vld [vmem:[%s1 + $0x84] sm:$0xff]
  %v41 = vld [vmem:[%s1 + $0x8c] sm:$0xf]
  %v42 = vld [vmem:[%s1 + $0x90] sm:$0xff]
  %v43 = vld [vmem:[%s1 + $0x98] sm:$0xf]
  %v44 = vld [vmem:[%s1 + $0x9c] sm:$0xff]
  %v45 = vld [vmem:[%s1 + $0xa4] sm:$0xf]
  %v46 = vld [vmem:[%s1 + $0xa8] sm:$0xff]
  %v47 = vld [vmem:[%s1 + $0xb0] sm:$0xf]
  %v48 = vld [vmem:[%s1 + $0xb4] sm:$0xff]
  %v49 = vld [vmem:[%s1 + $0xbc] sm:$0xf]
  %v50 = vld [vmem:[%s2] sm:$0x7]
  %v52 = vlaneseq
  %v53 = vshrl.u32 %v52, 7
  %v54 = vsub.s32 0, %v53
  %v55 = vrot.slane %v50, %v54
  %v56 = vlaneseq
  %v57 = vshrl.u32 %v56, 7
  %v58 = vsub.s32 1, %v57
  %v59 = vrot.slane %v50, %v58
  %v60 = vlaneseq
  %v61 = vshrl.u32 %v60, 7
  %v62 = vsub.s32 2, %v61
  %v63 = vrot.slane %v50, %v62
  %v99 = vunpack.c.l.b16 %v18
  %v100 = vunpack.c.h.b16 %v18
  %v101 = vunpack.c.l.b16 %v19
  %v102 = vunpack.c.l.b16 %v20
  %v103 = vunpack.c.h.b16 %v20
  %v104 = vunpack.c.l.b16 %v21
  %v105 = vunpack.c.l.b16 %v22
  %v106 = vunpack.c.h.b16 %v22
  %v107 = vunpack.c.l.b16 %v23
  %v108 = vunpack.c.l.b16 %v24
  %v109 = vunpack.c.h.b16 %v24
  %v110 = vunpack.c.l.b16 %v25
  %v111 = vunpack.c.l.b16 %v26
  %v112 = vunpack.c.h.b16 %v26
  %v113 = vunpack.c.l.b16 %v27
  %v114 = vunpack.c.l.b16 %v28
  %v115 = vunpack.c.h.b16 %v28
  %v116 = vunpack.c.l.b16 %v29
  %v117 = vunpack.c.l.b16 %v30
  %v118 = vunpack.c.h.b16 %v30
  %v119 = vunpack.c.l.b16 %v31
  %v120 = vunpack.c.l.b16 %v32
  %v121 = vunpack.c.h.b16 %v32
  %v122 = vunpack.c.l.b16 %v33
  %v123 = vunpack.c.l.b16 %v34
  %v124 = vunpack.c.h.b16 %v34
  %v125 = vunpack.c.l.b16 %v35
  %v126 = vunpack.c.l.b16 %v36
  %v127 = vunpack.c.h.b16 %v36
  %v128 = vunpack.c.l.b16 %v37
  %v129 = vunpack.c.l.b16 %v38
  %v130 = vunpack.c.h.b16 %v38
  %v131 = vunpack.c.l.b16 %v39
  %v132 = vunpack.c.l.b16 %v40
  %v133 = vunpack.c.h.b16 %v40
  %v134 = vunpack.c.l.b16 %v41
  %v135 = vunpack.c.l.b16 %v42
  %v136 = vunpack.c.h.b16 %v42
  %v137 = vunpack.c.l.b16 %v43
  %v138 = vunpack.c.l.b16 %v44
  %v139 = vunpack.c.h.b16 %v44
  %v140 = vunpack.c.l.b16 %v45
  %v141 = vunpack.c.l.b16 %v46
  %v142 = vunpack.c.h.b16 %v46
  %v143 = vunpack.c.l.b16 %v47
  %v144 = vunpack.c.l.b16 %v48
  %v145 = vunpack.c.h.b16 %v48
  %v146 = vunpack.c.l.b16 %v49
  %v147 = vpack.c.b16 %v102, %v99
  %v148 = vpack.c.b16 %v103, %v100
  %v149 = vpack.c.b16 %v104, %v101
  %v150 = vpack.c.b16 %v108, %v105
  %v151 = vpack.c.b16 %v109, %v106
  %v152 = vpack.c.b16 %v110, %v107
  %v153 = vpack.c.b16 %v114, %v111
  %v154 = vpack.c.b16 %v115, %v112
  %v155 = vpack.c.b16 %v116, %v113
  %v156 = vpack.c.b16 %v120, %v117
  %v157 = vpack.c.b16 %v121, %v118
  %v158 = vpack.c.b16 %v122, %v119
  %v159 = vpack.c.b16 %v126, %v123
  %v160 = vpack.c.b16 %v127, %v124
  %v161 = vpack.c.b16 %v128, %v125
  %v162 = vpack.c.b16 %v132, %v129
  %v163 = vpack.c.b16 %v133, %v130
  %v164 = vpack.c.b16 %v134, %v131
  %v165 = vpack.c.b16 %v138, %v135
  %v166 = vpack.c.b16 %v139, %v136
  %v167 = vpack.c.b16 %v140, %v137
  %v168 = vpack.c.b16 %v144, %v141
  %v169 = vpack.c.b16 %v145, %v142
  %v170 = vpack.c.b16 %v146, %v143
  %195 = vmatprep.subr.bf16.mxu0 %v169
  %196 = vmatpush1.bf16.msra.mxu0 %v168
  %197 = vmatprep.subr.bf16.mxu0 %v166
  %198 = vmatpush1.bf16.msra.mxu0 %v165
  %199 = vmatprep.subr.bf16.mxu0 %v163
  %200 = vmatpush1.bf16.msra.mxu0 %v162
  %201 = vmatprep.subr.bf16.mxu0 %v160
  %202 = vmatpush1.bf16.msra.mxu0 %v159
  %203 = vmatprep.subr.bf16.mxu0 %v157
  %204 = vmatpush1.bf16.msra.mxu0 %v156
  %205 = vmatprep.subr.bf16.mxu0 %v154
  %206 = vmatpush1.bf16.msra.mxu0 %v153
  %207 = vmatprep.subr.bf16.mxu0 %v151
  %208 = vmatpush1.bf16.msra.mxu0 %v150
  %209 = vmatprep.subr.bf16.mxu0 %v148
  %210 = vmatpush1.bf16.msra.mxu0 %v147
  %211 = vmatprep.subr.bf16.mxu0 0
  %212 = vmatpush2.bf16.msra.mxu0 0
  %213 = vmatprep.subr.bf16.mxu0 0
  %214 = vmatpush2.bf16.msra.mxu0 0
  %215 = vmatprep.subr.bf16.mxu0 0
  %216 = vmatpush2.bf16.msra.mxu0 0
  %217 = vmatprep.subr.bf16.mxu0 0
  %218 = vmatpush2.bf16.msra.mxu0 0
  %219 = vmatprep.subr.bf16.mxu0 0
  %220 = vmatpush2.bf16.msra.mxu0 0
  %221 = vmatprep.subr.bf16.mxu0 0
  %222 = vmatpush2.bf16.msra.mxu0 0
  %223 = vmatprep.subr.bf16.mxu0 0
  %224 = vmatpush2.bf16.msra.mxu0 0
  %225 = vmatprep.subr.bf16.mxu0 0
  %226 = vmatpush2.bf16.msra.mxu0 0
  %227 = vmatprep.mubr.bf16.mxu0 0
  %228 = vmatmul.mubr.bf16.gmra.mxu0 %v17
  %v229 = vpop.f32.mrf.mxu0
  %v230 = vadd.f32 %v55, %v229
  %v231 = vpop.f32.mrf.mxu0
  %v232 = vadd.f32 %v59, %v231
  %v233 = vpop.f32.mrf.mxu0
  %v234 = vadd.f32 %v55, %v233
  %v235 = vpop.f32.mrf.mxu0
  %v236 = vadd.f32 %v59, %v235
  %237 = vdwg.mxu0
  %238 = vmatprep.subr.bf16.mxu0 0
  %239 = vmatpush1.bf16.msra.mxu0 %v170
  %240 = vmatprep.subr.bf16.mxu0 0
  %241 = vmatpush1.bf16.msra.mxu0 %v167
  %242 = vmatprep.subr.bf16.mxu0 0
  %243 = vmatpush1.bf16.msra.mxu0 %v164
  %244 = vmatprep.subr.bf16.mxu0 0
  %245 = vmatpush1.bf16.msra.mxu0 %v161
  %246 = vmatprep.subr.bf16.mxu0 0
  %247 = vmatpush1.bf16.msra.mxu0 %v158
  %248 = vmatprep.subr.bf16.mxu0 0
  %249 = vmatpush1.bf16.msra.mxu0 %v155
  %250 = vmatprep.subr.bf16.mxu0 0
  %251 = vmatpush1.bf16.msra.mxu0 %v152
  %252 = vmatprep.subr.bf16.mxu0 0
  %253 = vmatpush1.bf16.msra.mxu0 %v149
  %254 = vmatprep.subr.bf16.mxu0 0
  %255 = vmatpush2.bf16.msra.mxu0 0
  %256 = vmatprep.subr.bf16.mxu0 0
  %257 = vmatpush2.bf16.msra.mxu0 0
  %258 = vmatprep.subr.bf16.mxu0 0
  %259 = vmatpush2.bf16.msra.mxu0 0
  %260 = vmatprep.subr.bf16.mxu0 0
  %261 = vmatpush2.bf16.msra.mxu0 0
  %262 = vmatprep.subr.bf16.mxu0 0
  %263 = vmatpush2.bf16.msra.mxu0 0
  %264 = vmatprep.subr.bf16.mxu0 0
  %265 = vmatpush2.bf16.msra.mxu0 0
  %266 = vmatprep.subr.bf16.mxu0 0
  %267 = vmatpush2.bf16.msra.mxu0 0
  %268 = vmatprep.subr.bf16.mxu0 0
  %269 = vmatpush2.bf16.msra.mxu0 0
  %270 = vmatprep.mubr.bf16.mxu0 0
  %271 = vmatmul.mubr.bf16.gmra.mxu0 %v17
  %v272 = vpop.f32.mrf.mxu0
  %v273 = vadd.f32 %v63, %v272
  %v274 = vpop.f32.mrf.mxu0
  %v275 = vpop.f32.mrf.mxu0
  %v276 = vadd.f32 %v63, %v275
  %v277 = vpop.f32.mrf.mxu0
  %278 = vdwg.mxu0
  %vm279 = vcmp.gt.f32.partialorder %v230, 0.0
  %vm280 = vcmp.gt.f32.partialorder %v232, 0.0
  %vm281 = vcmp.gt.f32.partialorder %v273, 0.0
  %vm282 = vcmp.gt.f32.partialorder %v234, 0.0
  %vm283 = vcmp.gt.f32.partialorder %v236, 0.0
  %vm284 = vcmp.gt.f32.partialorder %v276, 0.0
  %v285 = vmul.f32 %v230, 1.442695
  %v286 = vpow.pop %v285
  %v287 = vmul.f32 %v232, 1.442695
  %v288 = vpow.pop %v287
  %v289 = vmul.f32 %v273, 1.442695
  %v290 = vpow.pop %v289
  %v291 = vmul.f32 %v234, 1.442695
  %v292 = vpow.pop %v291
  %v293 = vmul.f32 %v236, 1.442695
  %v294 = vpow.pop %v293
  %v295 = vmul.f32 %v276, 1.442695
  %v296 = vpow.pop %v295
  %v297 = vsub.f32 %v286, 1.0
  %v298 = vsub.f32 %v288, 1.0
  %v299 = vsub.f32 %v290, 1.0
  %v300 = vsub.f32 %v292, 1.0
  %v301 = vsub.f32 %v294, 1.0
  %v302 = vsub.f32 %v296, 1.0
  %v303 = vsel %vm279, %v230, %v297
  %v304 = vsel %vm280, %v232, %v298
  %v305 = vsel %vm281, %v273, %v299
  %v306 = vsel %vm282, %v234, %v300
  %v307 = vsel %vm283, %v236, %v301
  %v308 = vsel %vm284, %v276, %v302
  %v309 = vadd.f32 %v303, 1.0
  %v310 = vadd.f32 %v304, 1.0
  %v311 = vadd.f32 %v305, 1.0
  %v312 = vadd.f32 %v306, 1.0
  %v313 = vadd.f32 %v307, 1.0
  %v314 = vadd.f32 %v308, 1.0
  %315 = vst [vmem:[%s3] sm:$0xff] %v309
  %316 = vst [vmem:[%s3 + $0x8] sm:$0xff] %v310
  %317 = vst [vmem:[%s3 + $0x10] sm:$0xff] %v311
  %318 = vst [vmem:[%s3 + $0x18] sm:$0xff] %v312
  %319 = vst [vmem:[%s3 + $0x20] sm:$0xff] %v313
  %320 = vst [vmem:[%s3 + $0x28] sm:$0xff] %v314
  // Predicated region
  $region14: #{dist_layer_forward.8} parent=0 // pred_check
    _
  $region15: #{dist_layer_forward.8} parent=0 // pred_check_branch
    %322 = sbr.rel (0) target = $region17
  $region16: #{dist_layer_forward.8} parent=0 // pred_region
    _
  $region17: #{dist_layer_forward.8} parent=0 // pred_fallthru
    _
  // Predicated region
  $region18: #{dist_layer_forward.8} parent=0 // pred_check
    _
  $region19: #{dist_layer_forward.8} parent=0 // pred_check_branch
    %324 = sbr.rel (0) target = $region21
  $region20: #{dist_layer_forward.8} parent=0 // pred_region
    _
  $region21: #{dist_layer_forward.8} parent=0 // pred_fallthru
    _

// kernel: dist_layer_forward.9
$region0: #{dist_layer_forward.9}
  #allocation0 [shape = 'u32[]', space=smem, size = 0x4, offset = 0x4, fixed_abs, tag = 'smem constant byte address 0x4 - core index']
  #allocation1 [shape = 'u32[144,128]{1,0:T(1,128)}', space=vmem, size = 0x12000, scoped, tag = 'internal scratch']
  %s0 = inlined_call_operand.vmem [shape: f32[2,1,1,8], index: 0, kind: input, shape index: {}]
  %s1 = inlined_call_operand.vmem [shape: f32[2,4,8,32], index: 1, kind: input, shape index: {}]
  %s2 = inlined_call_operand.vmem [shape: f32[2,4,8,32], index: 2, kind: input, shape index: {}]
  %s3 = inlined_call_operand.vmem [shape: f32[2,4,8,32], index: 3, kind: input, shape index: {}]
  %s4 = inlined_call_operand.vmem [shape: f32[2,4,8,32], index: 4, kind: input, shape index: {}]
  %s5 = inlined_call_operand.vmem [shape: f32[2,4,8,32], index: 5, kind: input, shape index: {}]
  %s6 = inlined_call_operand.vmem [shape: f32[2,4,8,32], index: 6, kind: input, shape index: {}]
  %s7 = inlined_call_operand.vmem [shape: f32[2,4,8,32], index: 7, kind: output, shape index: {0}]
  %s8 = inlined_call_operand.vmem [shape: f32[2,4,8,32], index: 8, kind: output, shape index: {1}]
  %s9 = inlined_call_operand.hbm [shape: f32[2,4,8,8], index: 9, kind: output, shape index: {2}]
  %10 = xla_tuple %s7, %s8, %s9
  %s11 = sld [smem:[#allocation0]]
  $region77: #{dist_layer_forward.9} parent=0
    _
  %s13 = ssub.s32 1, %s11
  %s14 = scalar_select 0, %s13, %s11
  $region1: #{dist_layer_forward.9} parent=0
    #allocation2 [shape = 'u8[8192]{0}', space=vmem, size = 0x2000, scoped, tag = 'output window, operand 2']
    #allocation3 [shape = 's32[2]{0}', space=sflag, size = 0x8, scoped, tag = 'scoped memory for dist_layer_forward.9']
    %15 = vsyncpa [#allocation3], 0
    %s16 = scalar_lea.sflag [#allocation3], 1
    %17 = vsyncpa %s16, 0
    loop: start=0, step=1, limit=10
    $region2: #{dist_layer_forward.9} parent=1 // loop_pre_header
      _
    $region3: #{dist_layer_forward.9} parent=1 // loop_header
      %s19 = sphi 0, %s23
      %p20 = scmp.ge.s32.totalorder %s19, 10
      %s26 = sphi 0, %s45
      %s27 = sphi 0, %s41
      %s28 = sphi 0, %s37
      %s29 = sphi 0, %s26
      %s30 = sphi 0, %s27
      %s31 = sphi 0, %s28
      %s32 = sphi 0, %s29
      %s33 = sphi 0, %s30
      %s34 = sphi 0, %s31
      %s48 = sphi 0, %s50
      %s51 = sphi 0, %s48
      %s52 = sphi 0, %s51
      %s68 = sphi 0, %s52
      %s78 = sphi 0, %s80
      %s81 = sphi 0, %s78
      %s82 = sphi 0, %s81
      %s98 = sphi 0, %s82
      %s108 = sphi 0, %s110
      %s111 = sphi 0, %s108
      %s112 = sphi 0, %s111
      %s128 = sphi 0, %s112
      %s136 = sphi 0, %s138
      %s139 = sphi 0, %s136
      %s140 = sphi 0, %s139
      %s156 = sphi 0, %s140
      %s164 = sphi 0, %s166
      %s167 = sphi 0, %s164
      %s168 = sphi 0, %s167
      %s184 = sphi 0, %s168
      %s192 = sphi 0, %s194
      %s195 = sphi 0, %s192
      %s196 = sphi 0, %s195
      %s212 = sphi 0, %s196
      %s220 = sphi 0, %s222
      %s223 = sphi 0, %s220
      %s224 = sphi 0, %s223
      %s240 = sphi 0, %s224
      %s250 = sphi 0, %s252
      %s253 = sphi 0, %s250
      %s254 = sphi 0, %s253
      %s270 = sphi 0, %s254
      %s280 = sphi 0, %s282
      %s283 = sphi 0, %s280
      %s284 = sphi 0, %s283
      %s300 = sphi 0, %s284
      %s310 = sphi 0, %s312
      %s313 = sphi 0, %s310
      %s314 = sphi 0, %s313
      %s330 = sphi 0, %s314
    $region4: #{dist_layer_forward.9} parent=1 // loop_header_branch
      %22 = sbr.rel (%p20) target = $region8
    $region5: #{dist_layer_forward.9} parent=1 // loop_body
      %s24 = ssub.s32 %s19, 1
      %s25 = ssub.s32 %s19, 2
      %s35 = sadd.s32 1, %s28
      %p36 = scmp.ge.s32.totalorder %s35, 1
      %s37 = scalar_select %p36, 0, %s35
      %s38 = sadd.s32 1, %s27
      %s39 = scalar_select %p36, %s38, %s27
      %p40 = scmp.ge.s32.totalorder %s39, 4
      %s41 = scalar_select %p40, 0, %s39
      %s42 = sadd.s32 1, %s26
      %s43 = scalar_select %p40, %s42, %s26
      %p44 = scmp.ge.s32.totalorder %s43, 2
      %s45 = scalar_select %p44, 0, %s43
      %s46 = ssub.s32 %s26, %s45
      %p47 = scmp.eq.s32.totalorder %s46, 0
      %s49 = sadd.s32 %s48, 1
      %s50 = scalar_select %p47, %s48, %s49
      %p53 = pneg %p47
      %p54 = scmp.eq.s32.totalorder %s19, 7
      %p55 = por %p53, %p54
      %p56 = scmp.ne.s32.totalorder %s48, %s51
      %p57 = scmp.eq.s32.totalorder %s19, 0
      %p58 = por %p56, %p57
      %p59 = scmp.ne.s32.totalorder %s48, %s51
      %p60 = scmp.eq.s32.totalorder %s24, 7
      %p61 = por %p59, %p60
      %p62 = scmp.ne.s32.totalorder %s51, %s52
      %p63 = scmp.eq.s32.totalorder %s24, 0
      %p64 = por %p62, %p63
      %p65 = scmp.ne.s32.totalorder %s51, %s52
      %p66 = scmp.eq.s32.totalorder %s25, 7
      %p67 = por %p65, %p66
      %p69 = scmp.ne.s32.totalorder %s52, %s68
      %p70 = scmp.eq.s32.totalorder %s25, 0
      %p71 = por %p69, %p70
      %s72 = ssub.s32 %s26, %s45
      %s73 = ssub.s32 %s27, %s41
      %s74 = sor.u32 %s72, %s73
      %s75 = ssub.s32 %s28, %s37
      %s76 = sor.u32 %s74, %s75
      %p77 = scmp.eq.s32.totalorder %s76, 0
      %s79 = sadd.s32 %s78, 1
      %s80 = scalar_select %p77, %s78, %s79
      %p83 = pneg %p77
      %p84 = scmp.eq.s32.totalorder %s19, 7
      %p85 = por %p83, %p84
      %p86 = scmp.ne.s32.totalorder %s78, %s81
      %p87 = scmp.eq.s32.totalorder %s19, 0
      %p88 = por %p86, %p87
      %p89 = scmp.ne.s32.totalorder %s78, %s81
      %p90 = scmp.eq.s32.totalorder %s24, 7
      %p91 = por %p89, %p90
      %p92 = scmp.ne.s32.totalorder %s81, %s82
      %p93 = scmp.eq.s32.totalorder %s24, 0
      %p94 = por %p92, %p93
      %p95 = scmp.ne.s32.totalorder %s81, %s82
      %p96 = scmp.eq.s32.totalorder %s25, 7
      %p97 = por %p95, %p96
      %p99 = scmp.ne.s32.totalorder %s82, %s98
      %p100 = scmp.eq.s32.totalorder %s25, 0
      %p101 = por %p99, %p100
      %s102 = ssub.s32 %s26, %s45
      %s103 = ssub.s32 %s27, %s41
      %s104 = sor.u32 %s102, %s103
      %s105 = ssub.s32 %s28, %s37
      %s106 = sor.u32 %s104, %s105
      %p107 = scmp.eq.s32.totalorder %s106, 0
      %s109 = sadd.s32 %s108, 1
      %s110 = scalar_select %p107, %s108, %s109
      %p113 = pneg %p107
      %p114 = scmp.eq.s32.totalorder %s19, 7
      %p115 = por %p113, %p114
      %p116 = scmp.ne.s32.totalorder %s108, %s111
      %p117 = scmp.eq.s32.totalorder %s19, 0
      %p118 = por %p116, %p117
      %p119 = scmp.ne.s32.totalorder %s108, %s111
      %p120 = scmp.eq.s32.totalorder %s24, 7
      %p121 = por %p119, %p120
      %p122 = scmp.ne.s32.totalorder %s111, %s112
      %p123 = scmp.eq.s32.totalorder %s24, 0
      %p124 = por %p122, %p123
      %p125 = scmp.ne.s32.totalorder %s111, %s112
      %p126 = scmp.eq.s32.totalorder %s25, 7
      %p127 = por %p125, %p126
      %p129 = scmp.ne.s32.totalorder %s112, %s128
      %p130 = scmp.eq.s32.totalorder %s25, 0
      %p131 = por %p129, %p130
      %s132 = ssub.s32 %s26, %s45
      %s133 = ssub.s32 %s27, %s41
      %s134 = sor.u32 %s132, %s133
      %p135 = scmp.eq.s32.totalorder %s134, 0
      %s137 = sadd.s32 %s136, 1
      %s138 = scalar_select %p135, %s136, %s137
      %p141 = pneg %p135
      %p142 = scmp.eq.s32.totalorder %s19, 7
      %p143 = por %p141, %p142
      %p144 = scmp.ne.s32.totalorder %s136, %s139
      %p145 = scmp.eq.s32.totalorder %s19, 0
      %p146 = por %p144, %p145
      %p147 = scmp.ne.s32.totalorder %s136, %s139
      %p148 = scmp.eq.s32.totalorder %s24, 7
      %p149 = por %p147, %p148
      %p150 = scmp.ne.s32.totalorder %s139, %s140
      %p151 = scmp.eq.s32.totalorder %s24, 0
      %p152 = por %p150, %p151
      %p153 = scmp.ne.s32.totalorder %s139, %s140
      %p154 = scmp.eq.s32.totalorder %s25, 7
      %p155 = por %p153, %p154
      %p157 = scmp.ne.s32.totalorder %s140, %s156
      %p158 = scmp.eq.s32.totalorder %s25, 0
      %p159 = por %p157, %p158
      %s160 = ssub.s32 %s26, %s45
      %s161 = ssub.s32 %s27, %s41
      %s162 = sor.u32 %s160, %s161
      %p163 = scmp.eq.s32.totalorder %s162, 0
      %s165 = sadd.s32 %s164, 1
      %s166 = scalar_select %p163, %s164, %s165
      %p169 = pneg %p163
      %p170 = scmp.eq.s32.totalorder %s19, 7
      %p171 = por %p169, %p170
      %p172 = scmp.ne.s32.totalorder %s164, %s167
      %p173 = scmp.eq.s32.totalorder %s19, 0
      %p174 = por %p172, %p173
      %p175 = scmp.ne.s32.totalorder %s164, %s167
      %p176 = scmp.eq.s32.totalorder %s24, 7
      %p177 = por %p175, %p176
      %p178 = scmp.ne.s32.totalorder %s167, %s168
      %p179 = scmp.eq.s32.totalorder %s24, 0
      %p180 = por %p178, %p179
      %p181 = scmp.ne.s32.totalorder %s167, %s168
      %p182 = scmp.eq.s32.totalorder %s25, 7
      %p183 = por %p181, %p182
      %p185 = scmp.ne.s32.totalorder %s168, %s184
      %p186 = scmp.eq.s32.totalorder %s25, 0
      %p187 = por %p185, %p186
      %s188 = ssub.s32 %s26, %s45
      %s189 = ssub.s32 %s27, %s41
      %s190 = sor.u32 %s188, %s189
      %p191 = scmp.eq.s32.totalorder %s190, 0
      %s193 = sadd.s32 %s192, 1
      %s194 = scalar_select %p191, %s192, %s193
      %p197 = pneg %p191
      %p198 = scmp.eq.s32.totalorder %s19, 7
      %p199 = por %p197, %p198
      %p200 = scmp.ne.s32.totalorder %s192, %s195
      %p201 = scmp.eq.s32.totalorder %s19, 0
      %p202 = por %p200, %p201
      %p203 = scmp.ne.s32.totalorder %s192, %s195
      %p204 = scmp.eq.s32.totalorder %s24, 7
      %p205 = por %p203, %p204
      %p206 = scmp.ne.s32.totalorder %s195, %s196
      %p207 = scmp.eq.s32.totalorder %s24, 0
      %p208 = por %p206, %p207
      %p209 = scmp.ne.s32.totalorder %s195, %s196
      %p210 = scmp.eq.s32.totalorder %s25, 7
      %p211 = por %p209, %p210
      %p213 = scmp.ne.s32.totalorder %s196, %s212
      %p214 = scmp.eq.s32.totalorder %s25, 0
      %p215 = por %p213, %p214
      %s216 = ssub.s32 %s26, %s45
      %s217 = ssub.s32 %s27, %s41
      %s218 = sor.u32 %s216, %s217
      %p219 = scmp.eq.s32.totalorder %s218, 0
      %s221 = sadd.s32 %s220, 1
      %s222 = scalar_select %p219, %s220, %s221
      %p225 = pneg %p219
      %p226 = scmp.eq.s32.totalorder %s19, 7
      %p227 = por %p225, %p226
      %p228 = scmp.ne.s32.totalorder %s220, %s223
      %p229 = scmp.eq.s32.totalorder %s19, 0
      %p230 = por %p228, %p229
      %p231 = scmp.ne.s32.totalorder %s220, %s223
      %p232 = scmp.eq.s32.totalorder %s24, 7
      %p233 = por %p231, %p232
      %p234 = scmp.ne.s32.totalorder %s223, %s224
      %p235 = scmp.eq.s32.totalorder %s24, 0
      %p236 = por %p234, %p235
      %p237 = scmp.ne.s32.totalorder %s223, %s224
      %p238 = scmp.eq.s32.totalorder %s25, 7
      %p239 = por %p237, %p238
      %p241 = scmp.ne.s32.totalorder %s224, %s240
      %p242 = scmp.eq.s32.totalorder %s25, 0
      %p243 = por %p241, %p242
      %s244 = ssub.s32 %s26, %s45
      %s245 = ssub.s32 %s27, %s41
      %s246 = sor.u32 %s244, %s245
      %s247 = ssub.s32 %s28, %s37
      %s248 = sor.u32 %s246, %s247
      %p249 = scmp.eq.s32.totalorder %s248, 0
      %s251 = sadd.s32 %s250, 1
      %s252 = scalar_select %p249, %s250, %s251
      %p255 = pneg %p249
      %p256 = scmp.eq.s32.totalorder %s19, 7
      %p257 = por %p255, %p256
      %p258 = scmp.ne.s32.totalorder %s250, %s253
      %p259 = scmp.eq.s32.totalorder %s19, 0
      %p260 = por %p258, %p259
      %p261 = scmp.ne.s32.totalorder %s250, %s253
      %p262 = scmp.eq.s32.totalorder %s24, 7
      %p263 = por %p261, %p262
      %p264 = scmp.ne.s32.totalorder %s253, %s254
      %p265 = scmp.eq.s32.totalorder %s24, 0
      %p266 = por %p264, %p265
      %p267 = scmp.ne.s32.totalorder %s253, %s254
      %p268 = scmp.eq.s32.totalorder %s25, 7
      %p269 = por %p267, %p268
      %p271 = scmp.ne.s32.totalorder %s254, %s270
      %p272 = scmp.eq.s32.totalorder %s25, 0
      %p273 = por %p271, %p272
      %s274 = ssub.s32 %s26, %s45
      %s275 = ssub.s32 %s27, %s41
      %s276 = sor.u32 %s274, %s275
      %s277 = ssub.s32 %s28, %s37
      %s278 = sor.u32 %s276, %s277
      %p279 = scmp.eq.s32.totalorder %s278, 0
      %s281 = sadd.s32 %s280, 1
      %s282 = scalar_select %p279, %s280, %s281
      %p285 = pneg %p279
      %p286 = scmp.eq.s32.totalorder %s19, 7
      %p287 = por %p285, %p286
      %p288 = scmp.ne.s32.totalorder %s280, %s283
      %p289 = scmp.eq.s32.totalorder %s19, 0
      %p290 = por %p288, %p289
      %p291 = scmp.ne.s32.totalorder %s280, %s283
      %p292 = scmp.eq.s32.totalorder %s24, 7
      %p293 = por %p291, %p292
      %p294 = scmp.ne.s32.totalorder %s283, %s284
      %p295 = scmp.eq.s32.totalorder %s24, 0
      %p296 = por %p294, %p295
      %p297 = scmp.ne.s32.totalorder %s283, %s284
      %p298 = scmp.eq.s32.totalorder %s25, 7
      %p299 = por %p297, %p298
      %p301 = scmp.ne.s32.totalorder %s284, %s300
      %p302 = scmp.eq.s32.totalorder %s25, 0
      %p303 = por %p301, %p302
      %s304 = ssub.s32 %s26, %s45
      %s305 = ssub.s32 %s27, %s41
      %s306 = sor.u32 %s304, %s305
      %s307 = ssub.s32 %s28, %s37
      %s308 = sor.u32 %s306, %s307
      %p309 = scmp.eq.s32.totalorder %s308, 0
      %s311 = sadd.s32 %s310, 1
      %s312 = scalar_select %p309, %s310, %s311
      %p315 = pneg %p309
      %p316 = scmp.eq.s32.totalorder %s19, 7
      %p317 = por %p315, %p316
      %p318 = scmp.ne.s32.totalorder %s310, %s313
      %p319 = scmp.eq.s32.totalorder %s19, 0
      %p320 = por %p318, %p319
      %p321 = scmp.ne.s32.totalorder %s310, %s313
      %p322 = scmp.eq.s32.totalorder %s24, 7
      %p323 = por %p321, %p322
      %p324 = scmp.ne.s32.totalorder %s313, %s314
      %p325 = scmp.eq.s32.totalorder %s24, 0
      %p326 = por %p324, %p325
      %p327 = scmp.ne.s32.totalorder %s313, %s314
      %p328 = scmp.eq.s32.totalorder %s25, 7
      %p329 = por %p327, %p328
      %p331 = scmp.ne.s32.totalorder %s314, %s330
      %p332 = scmp.eq.s32.totalorder %s25, 0
      %p333 = por %p331, %p332
      %p334 = scmp.le.s32.totalorder 1, %s19
      %p335 = scmp.lt.s32.totalorder %s19, 9
      %p336 = pnand %p334, %p335
      %p337 = pneg %p336
      // Predicated region
      $region9: #{dist_layer_forward.9} parent=5 // pred_check
        _
      $region10: #{dist_layer_forward.9} parent=5 // pred_check_branch
        %339 = sbr.rel (%p336) target = $region12
      $region11: #{dist_layer_forward.9} parent=5 // pred_region
        %s340 = ssub.s32 %s19, 1
      $region12: #{dist_layer_forward.9} parent=5 // pred_fallthru
        _
      %p341 = scmp.lt.s32.totalorder %s19, 8
      // Predicated region
      $region13: #{dist_layer_forward.9} parent=5 // pred_check
        %p342 = pneg %p341
      $region14: #{dist_layer_forward.9} parent=5 // pred_check_branch
        %344 = sbr.rel (%p342) target = $region16
      $region15: #{dist_layer_forward.9} parent=5 // pred_region
        // Predicated region
        $region17: #{dist_layer_forward.9} parent=15 // pred_check
          %p345 = pneg %p58
        $region18: #{dist_layer_forward.9} parent=15 // pred_check_branch
          %347 = sbr.rel (%p345) target = $region20
        $region19: #{dist_layer_forward.9} parent=15 // pred_region
          %p348 = scmp.lt.s32.totalorder %s26, 1
          %s349 = scalar_select %p348, %s26, 1
          %s350 = scalar_lea.vmem %s0, %s349
        $region20: #{dist_layer_forward.9} parent=15 // pred_fallthru
          _
        // Predicated region
        $region21: #{dist_layer_forward.9} parent=15 // pred_check
          %p351 = pneg %p88
        $region22: #{dist_layer_forward.9} parent=15 // pred_check_branch
          %353 = sbr.rel (%p351) target = $region24
        $region23: #{dist_layer_forward.9} parent=15 // pred_region
          %p354 = scmp.lt.s32.totalorder %s26, 1
          %s355 = scalar_select %p354, %s26, 1
          %p356 = scmp.lt.s32.totalorder %s27, 3
          %s357 = scalar_select %p356, %s27, 3
          %p358 = scmp.lt.s32.totalorder %s28, 0
          %s359 = scalar_select %p358, %s28, 0
          %s360 = sadd.s32 %s359, %s357
          %s361 = smul.addr %s355, 4
          %s362 = sadd.s32 %s360, %s361
          %s363 = smul.addr %s362, 8
          %s364 = scalar_lea.vmem %s1, %s363
        $region24: #{dist_layer_forward.9} parent=15 // pred_fallthru
          _
        // Predicated region
        $region25: #{dist_layer_forward.9} parent=15 // pred_check
          %p365 = pneg %p118
        $region26: #{dist_layer_forward.9} parent=15 // pred_check_branch
          %367 = sbr.rel (%p365) target = $region28
        $region27: #{dist_layer_forward.9} parent=15 // pred_region
          %p368 = scmp.lt.s32.totalorder %s26, 1
          %s369 = scalar_select %p368, %s26, 1
          %p370 = scmp.lt.s32.totalorder %s27, 3
          %s371 = scalar_select %p370, %s27, 3
          %p372 = scmp.lt.s32.totalorder %s28, 0
          %s373 = scalar_select %p372, %s28, 0
          %s374 = sadd.s32 %s373, %s371
          %s375 = smul.addr %s369, 4
          %s376 = sadd.s32 %s374, %s375
          %s377 = smul.addr %s376, 8
          %s378 = scalar_lea.vmem %s2, %s377
        $region28: #{dist_layer_forward.9} parent=15 // pred_fallthru
          _
        // Predicated region
        $region29: #{dist_layer_forward.9} parent=15 // pred_check
          %p379 = pneg %p146
        $region30: #{dist_layer_forward.9} parent=15 // pred_check_branch
          %381 = sbr.rel (%p379) target = $region32
        $region31: #{dist_layer_forward.9} parent=15 // pred_region
          %p382 = scmp.lt.s32.totalorder %s26, 1
          %s383 = scalar_select %p382, %s26, 1
          %p384 = scmp.lt.s32.totalorder %s27, 3
          %s385 = scalar_select %p384, %s27, 3
          %s386 = smul.addr %s383, 4
          %s387 = sadd.s32 %s385, %s386
          %s388 = smul.addr %s387, 8
          %s389 = scalar_lea.vmem %s3, %s388
        $region32: #{dist_layer_forward.9} parent=15 // pred_fallthru
          _
        // Predicated region
        $region33: #{dist_layer_forward.9} parent=15 // pred_check
          %p390 = pneg %p174
        $region34: #{dist_layer_forward.9} parent=15 // pred_check_branch
          %392 = sbr.rel (%p390) target = $region36
        $region35: #{dist_layer_forward.9} parent=15 // pred_region
          %p393 = scmp.lt.s32.totalorder %s26, 1
          %s394 = scalar_select %p393, %s26, 1
          %p395 = scmp.lt.s32.totalorder %s27, 3
          %s396 = scalar_select %p395, %s27, 3
          %s397 = smul.addr %s394, 4
          %s398 = sadd.s32 %s396, %s397
          %s399 = smul.addr %s398, 8
          %s400 = scalar_lea.vmem %s4, %s399
        $region36: #{dist_layer_forward.9} parent=15 // pred_fallthru
          _
        // Predicated region
        $region37: #{dist_layer_forward.9} parent=15 // pred_check
          %p401 = pneg %p202
        $region38: #{dist_layer_forward.9} parent=15 // pred_check_branch
          %403 = sbr.rel (%p401) target = $region40
        $region39: #{dist_layer_forward.9} parent=15 // pred_region
          %p404 = scmp.lt.s32.totalorder %s26, 1
          %s405 = scalar_select %p404, %s26, 1
          %p406 = scmp.lt.s32.totalorder %s27, 3
          %s407 = scalar_select %p406, %s27, 3
          %s408 = smul.addr %s405, 4
          %s409 = sadd.s32 %s407, %s408
          %s410 = smul.addr %s409, 8
          %s411 = scalar_lea.vmem %s5, %s410
        $region40: #{dist_layer_forward.9} parent=15 // pred_fallthru
          _
        // Predicated region
        $region41: #{dist_layer_forward.9} parent=15 // pred_check
          %p412 = pneg %p230
        $region42: #{dist_layer_forward.9} parent=15 // pred_check_branch
          %414 = sbr.rel (%p412) target = $region44
        $region43: #{dist_layer_forward.9} parent=15 // pred_region
          %p415 = scmp.lt.s32.totalorder %s26, 1
          %s416 = scalar_select %p415, %s26, 1
          %p417 = scmp.lt.s32.totalorder %s27, 3
          %s418 = scalar_select %p417, %s27, 3
          %s419 = smul.addr %s416, 4
          %s420 = sadd.s32 %s418, %s419
          %s421 = smul.addr %s420, 8
          %s422 = scalar_lea.vmem %s6, %s421
        $region44: #{dist_layer_forward.9} parent=15 // pred_fallthru
          _
      $region16: #{dist_layer_forward.9} parent=5 // pred_fallthru
        _
      %p423 = scmp.le.s32.totalorder 1, %s19
      %p424 = scmp.lt.s32.totalorder %s19, 9
      %p425 = pnand %p423, %p424
      %p426 = pneg %p425
      // Predicated region
      $region45: #{dist_layer_forward.9} parent=5 // pred_check
        _
      $region46: #{dist_layer_forward.9} parent=5 // pred_check_branch
        %428 = sbr.rel (%p425) target = $region48
      $region47: #{dist_layer_forward.9} parent=5 // pred_region
        %s429 = ssub.s32 %s19, 1
        %p430 = scmp.lt.s32.totalorder %s29, 1
        %s431 = scalar_select %p430, %s29, 1
        %s432 = scalar_lea.vmem %s0, %s431
        %p433 = pneg %p64
        %p434 = pneg %p61
        %p435 = scmp.lt.s32.totalorder %s29, 1
        %s436 = scalar_select %p435, %s29, 1
        %p437 = scmp.lt.s32.totalorder %s30, 3
        %s438 = scalar_select %p437, %s30, 3
        %p439 = scmp.lt.s32.totalorder %s31, 0
        %s440 = scalar_select %p439, %s31, 0
        %s441 = sadd.s32 %s440, %s438
        %s442 = smul.addr %s436, 4
        %s443 = sadd.s32 %s441, %s442
        %s444 = smul.addr %s443, 8
        %s445 = scalar_lea.vmem %s1, %s444
        %p446 = pneg %p94
        %p447 = pneg %p91
        %p448 = scmp.lt.s32.totalorder %s29, 1
        %s449 = scalar_select %p448, %s29, 1
        %p450 = scmp.lt.s32.totalorder %s30, 3
        %s451 = scalar_select %p450, %s30, 3
        %p452 = scmp.lt.s32.totalorder %s31, 0
        %s453 = scalar_select %p452, %s31, 0
        %s454 = sadd.s32 %s453, %s451
        %s455 = smul.addr %s449, 4
        %s456 = sadd.s32 %s454, %s455
        %s457 = smul.addr %s456, 8
        %s458 = scalar_lea.vmem %s2, %s457
        %p459 = pneg %p124
        %p460 = pneg %p121
        %p461 = scmp.lt.s32.totalorder %s29, 1
        %s462 = scalar_select %p461, %s29, 1
        %p463 = scmp.lt.s32.totalorder %s30, 3
        %s464 = scalar_select %p463, %s30, 3
        %s465 = smul.addr %s462, 4
        %s466 = sadd.s32 %s464, %s465
        %s467 = smul.addr %s466, 8
        %s468 = scalar_lea.vmem %s3, %s467
        %p469 = pneg %p152
        %p470 = pneg %p149
        %p471 = scmp.lt.s32.totalorder %s29, 1
        %s472 = scalar_select %p471, %s29, 1
        %p473 = scmp.lt.s32.totalorder %s30, 3
        %s474 = scalar_select %p473, %s30, 3
        %s475 = smul.addr %s472, 4
        %s476 = sadd.s32 %s474, %s475
        %s477 = smul.addr %s476, 8
        %s478 = scalar_lea.vmem %s4, %s477
        %p479 = pneg %p180
        %p480 = pneg %p177
        %p481 = scmp.lt.s32.totalorder %s29, 1
        %s482 = scalar_select %p481, %s29, 1
        %p483 = scmp.lt.s32.totalorder %s30, 3
        %s484 = scalar_select %p483, %s30, 3
        %s485 = smul.addr %s482, 4
        %s486 = sadd.s32 %s484, %s485
        %s487 = smul.addr %s486, 8
        %s488 = scalar_lea.vmem %s5, %s487
        %p489 = pneg %p208
        %p490 = pneg %p205
        %p491 = scmp.lt.s32.totalorder %s29, 1
        %s492 = scalar_select %p491, %s29, 1
        %p493 = scmp.lt.s32.totalorder %s30, 3
        %s494 = scalar_select %p493, %s30, 3
        %s495 = smul.addr %s492, 4
        %s496 = sadd.s32 %s494, %s495
        %s497 = smul.addr %s496, 8
        %s498 = scalar_lea.vmem %s6, %s497
        %p499 = pneg %p236
        %p500 = pneg %p233
        %p501 = pneg %p266
        %p502 = pneg %p263
        %p503 = scmp.lt.s32.totalorder %s29, 1
        %s504 = scalar_select %p503, %s29, 1
        %p505 = scmp.lt.s32.totalorder %s30, 3
        %s506 = scalar_select %p505, %s30, 3
        %p507 = scmp.lt.s32.totalorder %s31, 0
        %s508 = scalar_select %p507, %s31, 0
        %s509 = sadd.s32 %s508, %s506
        %s510 = smul.addr %s504, 4
        %s511 = sadd.s32 %s509, %s510
        %s512 = smul.addr %s511, 8
        %s513 = scalar_lea.vmem %s7, %s512
        %p514 = pneg %p296
        %p515 = pneg %p293
        %p516 = scmp.lt.s32.totalorder %s29, 1
        %s517 = scalar_select %p516, %s29, 1
        %p518 = scmp.lt.s32.totalorder %s30, 3
        %s519 = scalar_select %p518, %s30, 3
        %p520 = scmp.lt.s32.totalorder %s31, 0
        %s521 = scalar_select %p520, %s31, 0
        %s522 = sadd.s32 %s521, %s519
        %s523 = smul.addr %s517, 4
        %s524 = sadd.s32 %s522, %s523
        %s525 = smul.addr %s524, 8
        %s526 = scalar_lea.vmem %s8, %s525
        %p527 = pneg %p326
        %p528 = pneg %p323
        %s529 = sand.u32 %s313, 1
        %s530 = scalar_lea.sflag [#allocation3], %s529
        %s531 = sand.u32 %s313, 1
        %s532 = smul.addr %s531, 8
        %s533 = scalar_lea.vmem [#allocation2], %s532
        %p534 = scmp.lt.s32.totalorder %s29, 1
        %s535 = scalar_select %p534, %s29, 1
        %s536 = scalar_lea.vmem %s0, %s535
        %p537 = scmp.lt.s32.totalorder %s29, 1
        %s538 = scalar_select %p537, %s29, 1
        %p539 = scmp.lt.s32.totalorder %s30, 3
        %s540 = scalar_select %p539, %s30, 3
        %p541 = scmp.lt.s32.totalorder %s31, 0
        %s542 = scalar_select %p541, %s31, 0
        %s543 = sadd.s32 %s542, %s540
        %s544 = smul.addr %s538, 4
        %s545 = sadd.s32 %s543, %s544
        %s546 = smul.addr %s545, 8
        %s547 = scalar_lea.vmem %s1, %s546
        %p548 = scmp.lt.s32.totalorder %s29, 1
        %s549 = scalar_select %p548, %s29, 1
        %p550 = scmp.lt.s32.totalorder %s30, 3
        %s551 = scalar_select %p550, %s30, 3
        %p552 = scmp.lt.s32.totalorder %s31, 0
        %s553 = scalar_select %p552, %s31, 0
        %s554 = sadd.s32 %s553, %s551
        %s555 = smul.addr %s549, 4
        %s556 = sadd.s32 %s554, %s555
        %s557 = smul.addr %s556, 8
        %s558 = scalar_lea.vmem %s2, %s557
        %p559 = scmp.lt.s32.totalorder %s29, 1
        %s560 = scalar_select %p559, %s29, 1
        %p561 = scmp.lt.s32.totalorder %s30, 3
        %s562 = scalar_select %p561, %s30, 3
        %s563 = smul.addr %s560, 4
        %s564 = sadd.s32 %s562, %s563
        %s565 = smul.addr %s564, 8
        %s566 = scalar_lea.vmem %s3, %s565
        %p567 = scmp.lt.s32.totalorder %s29, 1
        %s568 = scalar_select %p567, %s29, 1
        %p569 = scmp.lt.s32.totalorder %s30, 3
        %s570 = scalar_select %p569, %s30, 3
        %s571 = smul.addr %s568, 4
        %s572 = sadd.s32 %s570, %s571
        %s573 = smul.addr %s572, 8
        %s574 = scalar_lea.vmem %s4, %s573
        %p575 = scmp.lt.s32.totalorder %s29, 1
        %s576 = scalar_select %p575, %s29, 1
        %p577 = scmp.lt.s32.totalorder %s30, 3
        %s578 = scalar_select %p577, %s30, 3
        %s579 = smul.addr %s576, 4
        %s580 = sadd.s32 %s578, %s579
        %s581 = smul.addr %s580, 8
        %s582 = scalar_lea.vmem %s5, %s581
        %p583 = scmp.lt.s32.totalorder %s29, 1
        %s584 = scalar_select %p583, %s29, 1
        %p585 = scmp.lt.s32.totalorder %s30, 3
        %s586 = scalar_select %p585, %s30, 3
        %s587 = smul.addr %s584, 4
        %s588 = sadd.s32 %s586, %s587
        %s589 = smul.addr %s588, 8
        %s590 = scalar_lea.vmem %s6, %s589
        %p591 = scmp.lt.s32.totalorder %s29, 1
        %s592 = scalar_select %p591, %s29, 1
        %p593 = scmp.lt.s32.totalorder %s30, 3
        %s594 = scalar_select %p593, %s30, 3
        %p595 = scmp.lt.s32.totalorder %s31, 0
        %s596 = scalar_select %p595, %s31, 0
        %s597 = sadd.s32 %s596, %s594
        %s598 = smul.addr %s592, 4
        %s599 = sadd.s32 %s597, %s598
        %s600 = smul.addr %s599, 8
        %s601 = scalar_lea.vmem %s7, %s600
        %p602 = scmp.lt.s32.totalorder %s29, 1
        %s603 = scalar_select %p602, %s29, 1
        %p604 = scmp.lt.s32.totalorder %s30, 3
        %s605 = scalar_select %p604, %s30, 3
        %p606 = scmp.lt.s32.totalorder %s31, 0
        %s607 = scalar_select %p606, %s31, 0
        %s608 = sadd.s32 %s607, %s605
        %s609 = smul.addr %s603, 4
        %s610 = sadd.s32 %s608, %s609
        %s611 = smul.addr %s610, 8
        %s612 = scalar_lea.vmem %s8, %s611
        %v613 = vld [vmem:[%s547] sm:$0xff]
        %v614 = vld [vmem:[%s558] sm:$0xff]
        %v615 = vld [vmem:[%s566] sm:$0xff]
        %v616 = vld [vmem:[%s574] sm:$0xff]
        %v617 = vld [vmem:[%s582] sm:$0xff]
        %v618 = vld [vmem:[%s590] sm:$0xff]
        %v619 = vld [vmem:[%s536] sm:$0x1]
        %vm620 = vcmask 261120
        %v622 = vsel %vm620, %v613, 0
        %v625 = vsel %vm620, %v615, 0
        %627 = vmatprep.subr.mxu0 0.0
        %628 = vmatpush1.xpose.msra.mxu0 0.0
        %629 = vmatprep.subr.mxu0 0.0
        %630 = vmatpush1.xpose.msra.mxu0 0.0
        %631 = vmatprep.subr.mxu0 0.0
        %632 = vmatpush1.xpose.msra.mxu0 0.0
        %633 = vmatprep.subr.mxu0 0.0
        %634 = vmatpush1.xpose.msra.mxu0 0.0
        %635 = vmatprep.subr.mxu0 0.0
        %636 = vmatpush1.xpose.msra.mxu0 0.0
        %637 = vmatprep.subr.mxu0 0.0
        %638 = vmatpush1.xpose.msra.mxu0 0.0
        %639 = vmatprep.subr.mxu0 0.0
        %640 = vmatpush1.xpose.msra.mxu0 0.0
        %641 = vmatprep.subr.mxu0 0.0
        %642 = vmatpush1.xpose.msra.mxu0 0.0
        %643 = vmatprep.subr.mxu0 0.0
        %644 = vmatpush1.xpose.msra.mxu0 0.0
        %645 = vmatprep.subr.mxu0 0.0
        %646 = vmatpush1.xpose.msra.mxu0 0.0
        %647 = vmatprep.subr.mxu0 0.0
        %648 = vmatpush1.xpose.msra.mxu0 0.0
        %649 = vmatprep.subr.mxu0 0.0
        %650 = vmatpush1.xpose.msra.mxu0 0.0
        %651 = vmatprep.subr.mxu0 0.0
        %652 = vmatpush1.xpose.msra.mxu0 0.0
        %653 = vmatprep.subr.mxu0 0.0
        %654 = vmatpush1.xpose.msra.mxu0 0.0
        %655 = vmatprep.subr.mxu0 0.0
        %656 = vmatpush1.xpose.msra.mxu0 0.0
        %657 = vmatprep.subr.mxu0 0.0
        %658 = vmatpush1.xpose.msra.mxu0 %v625
        %659 = vmatprep.subr.mxu0 0.0
        %660 = vmatpush2.xpose.msra.mxu0 0.0
        %661 = vmatprep.subr.mxu0 0.0
        %662 = vmatpush2.xpose.msra.mxu0 0.0
        %663 = vmatprep.subr.mxu0 0.0
        %664 = vmatpush2.xpose.msra.mxu0 0.0
        %665 = vmatprep.subr.mxu0 0.0
        %666 = vmatpush2.xpose.msra.mxu0 0.0
        %667 = vmatprep.subr.mxu0 0.0
        %668 = vmatpush2.xpose.msra.mxu0 0.0
        %669 = vmatprep.subr.mxu0 0.0
        %670 = vmatpush2.xpose.msra.mxu0 0.0
        %671 = vmatprep.subr.mxu0 0.0
        %672 = vmatpush2.xpose.msra.mxu0 0.0
        %673 = vmatprep.subr.mxu0 0.0
        %674 = vmatpush2.xpose.msra.mxu0 0.0
        %675 = vmatprep.subr.mxu0 0.0
        %676 = vmatpush2.xpose.msra.mxu0 0.0
        %677 = vmatprep.subr.mxu0 0.0
        %678 = vmatpush2.xpose.msra.mxu0 0.0
        %679 = vmatprep.subr.mxu0 0.0
        %680 = vmatpush2.xpose.msra.mxu0 0.0
        %681 = vmatprep.subr.mxu0 0.0
        %682 = vmatpush2.xpose.msra.mxu0 0.0
        %683 = vmatprep.subr.mxu0 0.0
        %684 = vmatpush2.xpose.msra.mxu0 0.0
        %685 = vmatprep.subr.mxu0 0.0
        %686 = vmatpush2.xpose.msra.mxu0 0.0
        %687 = vmatprep.subr.mxu0 0.0
        %688 = vmatpush2.xpose.msra.mxu0 0.0
        %689 = vmatprep.subr.mxu0 0.0
        %690 = vmatpush2.xpose.msra.mxu0 0.0
        %691 = vmatprep.mubr.f32.mxu0 0.0
        %692 = vmatmul.mubr.f32.gmra.mxu0 %v622
        %v693 = vpop.f32.mrf.mxu0
        %v694 = vadd.f32 0.0, %v693
        %v695 = vpop.f32.mrf.mxu0
        %696 = vdwg.mxu0
        %v697 = vmul.f32 %v613, %v613
        %v698 = vsel %vm620, %v697, 0.0
        %699 = vadd.xlane.f32.xlu0 %v698
        %v700 = vpop.xlane.xlu0 %699
        %v701 = vmul.f32 %v615, %v615
        %v703 = vsel %vm620, 1.0, 0
        %v706 = vsel %vm620, %v701, 0
        %708 = vmatprep.subr.mxu0 0.0
        %709 = vmatpush1.xpose.msra.mxu0 0.0
        %710 = vmatprep.subr.mxu0 0.0
        %711 = vmatpush1.xpose.msra.mxu0 0.0
        %712 = vmatprep.subr.mxu0 0.0
        %713 = vmatpush1.xpose.msra.mxu0 0.0
        %714 = vmatprep.subr.mxu0 0.0
        %715 = vmatpush1.xpose.msra.mxu0 0.0
        %716 = vmatprep.subr.mxu0 0.0
        %717 = vmatpush1.xpose.msra.mxu0 0.0
        %718 = vmatprep.subr.mxu0 0.0
        %719 = vmatpush1.xpose.msra.mxu0 0.0
        %720 = vmatprep.subr.mxu0 0.0
        %721 = vmatpush1.xpose.msra.mxu0 0.0
        %722 = vmatprep.subr.mxu0 0.0
        %723 = vmatpush1.xpose.msra.mxu0 0.0
        %724 = vmatprep.subr.mxu0 0.0
        %725 = vmatpush1.xpose.msra.mxu0 0.0
        %726 = vmatprep.subr.mxu0 0.0
        %727 = vmatpush1.xpose.msra.mxu0 0.0
        %728 = vmatprep.subr.mxu0 0.0
        %729 = vmatpush1.xpose.msra.mxu0 0.0
        %730 = vmatprep.subr.mxu0 0.0
        %731 = vmatpush1.xpose.msra.mxu0 0.0
        %732 = vmatprep.subr.mxu0 0.0
        %733 = vmatpush1.xpose.msra.mxu0 0.0
        %734 = vmatprep.subr.mxu0 0.0
        %735 = vmatpush1.xpose.msra.mxu0 0.0
        %736 = vmatprep.subr.mxu0 0.0
        %737 = vmatpush1.xpose.msra.mxu0 0.0
        %738 = vmatprep.subr.mxu0 0.0
        %739 = vmatpush1.xpose.msra.mxu0 %v706
        %740 = vmatprep.subr.mxu0 0.0
        %741 = vmatpush2.xpose.msra.mxu0 0.0
        %742 = vmatprep.subr.mxu0 0.0
        %743 = vmatpush2.xpose.msra.mxu0 0.0
        %744 = vmatprep.subr.mxu0 0.0
        %745 = vmatpush2.xpose.msra.mxu0 0.0
        %746 = vmatprep.subr.mxu0 0.0
        %747 = vmatpush2.xpose.msra.mxu0 0.0
        %748 = vmatprep.subr.mxu0 0.0
        %749 = vmatpush2.xpose.msra.mxu0 0.0
        %750 = vmatprep.subr.mxu0 0.0
        %751 = vmatpush2.xpose.msra.mxu0 0.0
        %752 = vmatprep.subr.mxu0 0.0
        %753 = vmatpush2.xpose.msra.mxu0 0.0
        %754 = vmatprep.subr.mxu0 0.0
        %755 = vmatpush2.xpose.msra.mxu0 0.0
        %756 = vmatprep.subr.mxu0 0.0
        %757 = vmatpush2.xpose.msra.mxu0 0.0
        %758 = vmatprep.subr.mxu0 0.0
        %759 = vmatpush2.xpose.msra.mxu0 0.0
        %760 = vmatprep.subr.mxu0 0.0
        %761 = vmatpush2.xpose.msra.mxu0 0.0
        %762 = vmatprep.subr.mxu0 0.0
        %763 = vmatpush2.xpose.msra.mxu0 0.0
        %764 = vmatprep.subr.mxu0 0.0
        %765 = vmatpush2.xpose.msra.mxu0 0.0
        %766 = vmatprep.subr.mxu0 0.0
        %767 = vmatpush2.xpose.msra.mxu0 0.0
        %768 = vmatprep.subr.mxu0 0.0
        %769 = vmatpush2.xpose.msra.mxu0 0.0
        %770 = vmatprep.subr.mxu0 0.0
        %771 = vmatpush2.xpose.msra.mxu0 0.0
        %772 = vmatprep.mubr.f32.mxu0 0.0
        %773 = vmatmul.mubr.f32.gmra.mxu0 %v703
        %v774 = vpop.f32.mrf.mxu0
        %v775 = vadd.f32 0.0, %v774
        %v776 = vpop.f32.mrf.mxu0
        %777 = vdwg.mxu0
        %v778 = vmul.f32 %v694, -2.0
        %v779 = vadd.f32 %v778, %v700
        %v780 = vlaneseq
        %v781 = vshrl.u32 %v780, 7
        %v782 = vsub.s32 0, %v781
        %v783 = vrot.slane %v775, %v782
        %v784 = vadd.f32 %v779, %v783
        %v785 = vmax.f32 %v614, 1e-24
        %v786 = vrsqrt.pop %v785
        %v787 = vmul.f32 %v785, %v786
        %vm788 = vcmp.eq.f32.partialorder %v785, inf
        %v789 = vsel %vm788, %v785, %v787
        %vm790 = vcmp.eq.f32.partialorder %v785, 0.0
        %v791 = vand.u32 %v785, 2147483648
        %v792 = vsel %vm790, %v791, %v789
        %v793 = vmax.f32 %v616, 1e-24
        %v794 = vrsqrt.pop %v793
        %v795 = vmul.f32 %v793, %v794
        %vm796 = vcmp.eq.f32.partialorder %v793, inf
        %v797 = vsel %vm796, %v793, %v795
        %vm798 = vcmp.eq.f32.partialorder %v793, 0.0
        %v799 = vand.u32 %v793, 2147483648
        %v800 = vsel %vm798, %v799, %v797
        %v802 = vsel %vm620, %v792, 0
        %v805 = vsel %vm620, %v800, 0
        %807 = vmatprep.subr.mxu0 0.0
        %808 = vmatpush1.xpose.msra.mxu0 0.0
        %809 = vmatprep.subr.mxu0 0.0
        %810 = vmatpush1.xpose.msra.mxu0 0.0
        %811 = vmatprep.subr.mxu0 0.0
        %812 = vmatpush1.xpose.msra.mxu0 0.0
        %813 = vmatprep.subr.mxu0 0.0
        %814 = vmatpush1.xpose.msra.mxu0 0.0
        %815 = vmatprep.subr.mxu0 0.0
        %816 = vmatpush1.xpose.msra.mxu0 0.0
        %817 = vmatprep.subr.mxu0 0.0
        %818 = vmatpush1.xpose.msra.mxu0 0.0
        %819 = vmatprep.subr.mxu0 0.0
        %820 = vmatpush1.xpose.msra.mxu0 0.0
        %821 = vmatprep.subr.mxu0 0.0
        %822 = vmatpush1.xpose.msra.mxu0 0.0
        %823 = vmatprep.subr.mxu0 0.0
        %824 = vmatpush1.xpose.msra.mxu0 0.0
        %825 = vmatprep.subr.mxu0 0.0
        %826 = vmatpush1.xpose.msra.mxu0 0.0
        %827 = vmatprep.subr.mxu0 0.0
        %828 = vmatpush1.xpose.msra.mxu0 0.0
        %829 = vmatprep.subr.mxu0 0.0
        %830 = vmatpush1.xpose.msra.mxu0 0.0
        %831 = vmatprep.subr.mxu0 0.0
        %832 = vmatpush1.xpose.msra.mxu0 0.0
        %833 = vmatprep.subr.mxu0 0.0
        %834 = vmatpush1.xpose.msra.mxu0 0.0
        %835 = vmatprep.subr.mxu0 0.0
        %836 = vmatpush1.xpose.msra.mxu0 0.0
        %837 = vmatprep.subr.mxu0 0.0
        %838 = vmatpush1.xpose.msra.mxu0 %v805
        %839 = vmatprep.subr.mxu0 0.0
        %840 = vmatpush2.xpose.msra.mxu0 0.0
        %841 = vmatprep.subr.mxu0 0.0
        %842 = vmatpush2.xpose.msra.mxu0 0.0
        %843 = vmatprep.subr.mxu0 0.0
        %844 = vmatpush2.xpose.msra.mxu0 0.0
        %845 = vmatprep.subr.mxu0 0.0
        %846 = vmatpush2.xpose.msra.mxu0 0.0
        %847 = vmatprep.subr.mxu0 0.0
        %848 = vmatpush2.xpose.msra.mxu0 0.0
        %849 = vmatprep.subr.mxu0 0.0
        %850 = vmatpush2.xpose.msra.mxu0 0.0
        %851 = vmatprep.subr.mxu0 0.0
        %852 = vmatpush2.xpose.msra.mxu0 0.0
        %853 = vmatprep.subr.mxu0 0.0
        %854 = vmatpush2.xpose.msra.mxu0 0.0
        %855 = vmatprep.subr.mxu0 0.0
        %856 = vmatpush2.xpose.msra.mxu0 0.0
        %857 = vmatprep.subr.mxu0 0.0
        %858 = vmatpush2.xpose.msra.mxu0 0.0
        %859 = vmatprep.subr.mxu0 0.0
        %860 = vmatpush2.xpose.msra.mxu0 0.0
        %861 = vmatprep.subr.mxu0 0.0
        %862 = vmatpush2.xpose.msra.mxu0 0.0
        %863 = vmatprep.subr.mxu0 0.0
        %864 = vmatpush2.xpose.msra.mxu0 0.0
        %865 = vmatprep.subr.mxu0 0.0
        %866 = vmatpush2.xpose.msra.mxu0 0.0
        %867 = vmatprep.subr.mxu0 0.0
        %868 = vmatpush2.xpose.msra.mxu0 0.0
        %869 = vmatprep.subr.mxu0 0.0
        %870 = vmatpush2.xpose.msra.mxu0 0.0
        %871 = vmatprep.mubr.f32.mxu0 0.0
        %872 = vmatmul.mubr.f32.gmra.mxu0 %v802
        %v873 = vpop.f32.mrf.mxu0
        %v874 = vadd.f32 0.0, %v873
        %v875 = vpop.f32.mrf.mxu0
        %876 = vdwg.mxu0
        %v877 = vsel %vm620, %v614, 0.0
        %878 = vadd.xlane.f32.xlu0 %v877
        %v879 = vpop.xlane.xlu0 %878
        %v881 = vsel %vm620, %v616, 0
        %883 = vmatprep.subr.mxu0 0.0
        %884 = vmatpush1.xpose.msra.mxu0 0.0
        %885 = vmatprep.subr.mxu0 0.0
        %886 = vmatpush1.xpose.msra.mxu0 0.0
        %887 = vmatprep.subr.mxu0 0.0
        %888 = vmatpush1.xpose.msra.mxu0 0.0
        %889 = vmatprep.subr.mxu0 0.0
        %890 = vmatpush1.xpose.msra.mxu0 0.0
        %891 = vmatprep.subr.mxu0 0.0
        %892 = vmatpush1.xpose.msra.mxu0 0.0
        %893 = vmatprep.subr.mxu0 0.0
        %894 = vmatpush1.xpose.msra.mxu0 0.0
        %895 = vmatprep.subr.mxu0 0.0
        %896 = vmatpush1.xpose.msra.mxu0 0.0
        %897 = vmatprep.subr.mxu0 0.0
        %898 = vmatpush1.xpose.msra.mxu0 0.0
        %899 = vmatprep.subr.mxu0 0.0
        %900 = vmatpush1.xpose.msra.mxu0 0.0
        %901 = vmatprep.subr.mxu0 0.0
        %902 = vmatpush1.xpose.msra.mxu0 0.0
        %903 = vmatprep.subr.mxu0 0.0
        %904 = vmatpush1.xpose.msra.mxu0 0.0
        %905 = vmatprep.subr.mxu0 0.0
        %906 = vmatpush1.xpose.msra.mxu0 0.0
        %907 = vmatprep.subr.mxu0 0.0
        %908 = vmatpush1.xpose.msra.mxu0 0.0
        %909 = vmatprep.subr.mxu0 0.0
        %910 = vmatpush1.xpose.msra.mxu0 0.0
        %911 = vmatprep.subr.mxu0 0.0
        %912 = vmatpush1.xpose.msra.mxu0 0.0
        %913 = vmatprep.subr.mxu0 0.0
        %914 = vmatpush1.xpose.msra.mxu0 %v881
        %915 = vmatprep.subr.mxu0 0.0
        %916 = vmatpush2.xpose.msra.mxu0 0.0
        %917 = vmatprep.subr.mxu0 0.0
        %918 = vmatpush2.xpose.msra.mxu0 0.0
        %919 = vmatprep.subr.mxu0 0.0
        %920 = vmatpush2.xpose.msra.mxu0 0.0
        %921 = vmatprep.subr.mxu0 0.0
        %922 = vmatpush2.xpose.msra.mxu0 0.0
        %923 = vmatprep.subr.mxu0 0.0
        %924 = vmatpush2.xpose.msra.mxu0 0.0
        %925 = vmatprep.subr.mxu0 0.0
        %926 = vmatpush2.xpose.msra.mxu0 0.0
        %927 = vmatprep.subr.mxu0 0.0
        %928 = vmatpush2.xpose.msra.mxu0 0.0
        %929 = vmatprep.subr.mxu0 0.0
        %930 = vmatpush2.xpose.msra.mxu0 0.0
        %931 = vmatprep.subr.mxu0 0.0
        %932 = vmatpush2.xpose.msra.mxu0 0.0
        %933 = vmatprep.subr.mxu0 0.0
        %934 = vmatpush2.xpose.msra.mxu0 0.0
        %935 = vmatprep.subr.mxu0 0.0
        %936 = vmatpush2.xpose.msra.mxu0 0.0
        %937 = vmatprep.subr.mxu0 0.0
        %938 = vmatpush2.xpose.msra.mxu0 0.0
        %939 = vmatprep.subr.mxu0 0.0
        %940 = vmatpush2.xpose.msra.mxu0 0.0
        %941 = vmatprep.subr.mxu0 0.0
        %942 = vmatpush2.xpose.msra.mxu0 0.0
        %943 = vmatprep.subr.mxu0 0.0
        %944 = vmatpush2.xpose.msra.mxu0 0.0
        %945 = vmatprep.subr.mxu0 0.0
        %946 = vmatpush2.xpose.msra.mxu0 0.0
        %947 = vmatprep.mubr.f32.mxu0 0.0
        %948 = vmatmul.mubr.f32.gmra.mxu0 %v703
        %v949 = vpop.f32.mrf.mxu0
        %v950 = vadd.f32 0.0, %v949
        %v951 = vpop.f32.mrf.mxu0
        %952 = vdwg.mxu0
        %v953 = vmul.f32 %v874, -2.0
        %v954 = vadd.f32 %v953, %v879
        %v955 = vlaneseq
        %v956 = vshrl.u32 %v955, 7
        %v957 = vsub.s32 0, %v956
        %v958 = vrot.slane %v950, %v957
        %v959 = vadd.f32 %v954, %v958
        %v960 = vadd.f32 %v784, %v959
        %v961 = vsub.f32 0.0, %v960
        %v962 = vmul.f32 %v961, 0.17677669
        %v964 = vlaneseq
        %v965 = vshrl.u32 %v964, 7
        %v966 = vsub.s32 0, %v965
        %v967 = vrot.slane %v619, %v966
        %v969 = vadd.f32 %v962, %v967
        %vm970 = vcmask 64512
        %v971 = vsel %vm970, %v969, -inf
        %972 = vmax.xlane.f32.xlu0 %v971
        %v973 = vpop.xlane.xlu0 %972
        %v974 = vsub.f32 %v969, %v973
        %v975 = vmul.f32 %v974, 1.442695
        %v976 = vpow.pop %v975
        %v977 = vsel %vm970, %v976, 0.0
        %978 = vadd.xlane.f32.xlu0 %v977
        %v979 = vpop.xlane.xlu0 %978
        %v980 = vrcp.pop %v979
        %v981 = vmul.f32 %v976, %v980
        %982 = vst.msk [vmem:[%s533] sm:$0xff] %vm970, %v981
        %v984 = vsel %vm970, %v981, 0
        %986 = vmatprep.subr.mxu0 0.0
        %987 = vmatpush1.msra.mxu0 0.0
        %988 = vmatprep.subr.mxu0 0.0
        %989 = vmatpush1.msra.mxu0 0.0
        %990 = vmatprep.subr.mxu0 0.0
        %991 = vmatpush1.msra.mxu0 0.0
        %992 = vmatprep.subr.mxu0 0.0
        %993 = vmatpush1.msra.mxu0 0.0
        %994 = vmatprep.subr.mxu0 0.0
        %995 = vmatpush1.msra.mxu0 0.0
        %996 = vmatprep.subr.mxu0 0.0
        %997 = vmatpush1.msra.mxu0 0.0
        %998 = vmatprep.subr.mxu0 0.0
        %999 = vmatpush1.msra.mxu0 0.0
        %1000 = vmatprep.subr.mxu0 0.0
        %1001 = vmatpush1.msra.mxu0 0.0
        %1002 = vmatprep.subr.mxu0 0.0
        %1003 = vmatpush1.msra.mxu0 0.0
        %1004 = vmatprep.subr.mxu0 0.0
        %1005 = vmatpush1.msra.mxu0 0.0
        %1006 = vmatprep.subr.mxu0 0.0
        %1007 = vmatpush1.msra.mxu0 0.0
        %1008 = vmatprep.subr.mxu0 0.0
        %1009 = vmatpush1.msra.mxu0 0.0
        %1010 = vmatprep.subr.mxu0 0.0
        %1011 = vmatpush1.msra.mxu0 0.0
        %1012 = vmatprep.subr.mxu0 0.0
        %1013 = vmatpush1.msra.mxu0 0.0
        %1014 = vmatprep.subr.mxu0 0.0
        %1015 = vmatpush1.msra.mxu0 0.0
        %1016 = vmatprep.subr.mxu0 0.0
        %1017 = vmatpush1.msra.mxu0 %v617
        %1018 = vmatprep.subr.mxu0 0.0
        %1019 = vmatpush2.msra.mxu0 0.0
        %1020 = vmatprep.subr.mxu0 0.0
        %1021 = vmatpush2.msra.mxu0 0.0
        %1022 = vmatprep.subr.mxu0 0.0
        %1023 = vmatpush2.msra.mxu0 0.0
        %1024 = vmatprep.subr.mxu0 0.0
        %1025 = vmatpush2.msra.mxu0 0.0
        %1026 = vmatprep.subr.mxu0 0.0
        %1027 = vmatpush2.msra.mxu0 0.0
        %1028 = vmatprep.subr.mxu0 0.0
        %1029 = vmatpush2.msra.mxu0 0.0
        %1030 = vmatprep.subr.mxu0 0.0
        %1031 = vmatpush2.msra.mxu0 0.0
        %1032 = vmatprep.subr.mxu0 0.0
        %1033 = vmatpush2.msra.mxu0 0.0
        %1034 = vmatprep.subr.mxu0 0.0
        %1035 = vmatpush2.msra.mxu0 0.0
        %1036 = vmatprep.subr.mxu0 0.0
        %1037 = vmatpush2.msra.mxu0 0.0
        %1038 = vmatprep.subr.mxu0 0.0
        %1039 = vmatpush2.msra.mxu0 0.0
        %1040 = vmatprep.subr.mxu0 0.0
        %1041 = vmatpush2.msra.mxu0 0.0
        %1042 = vmatprep.subr.mxu0 0.0
        %1043 = vmatpush2.msra.mxu0 0.0
        %1044 = vmatprep.subr.mxu0 0.0
        %1045 = vmatpush2.msra.mxu0 0.0
        %1046 = vmatprep.subr.mxu0 0.0
        %1047 = vmatpush2.msra.mxu0 0.0
        %1048 = vmatprep.subr.mxu0 0.0
        %1049 = vmatpush2.msra.mxu0 0.0
        %1050 = vmatprep.mubr.f32.mxu0 0.0
        %1051 = vmatmul.mubr.f32.gmra.mxu0 %v984
        %v1052 = vpop.f32.mrf.mxu0
        %v1053 = vadd.f32 0.0, %v1052
        %v1054 = vpop.f32.mrf.mxu0
        %1055 = vdwg.mxu0
        %1056 = vst.msk [vmem:[%s601] sm:$0xff] %vm620, %v1053
        %v1057 = vmul.f32 %v981, %v981
        %v1059 = vsel %vm970, %v1057, 0
        %1061 = vmatprep.subr.mxu0 0.0
        %1062 = vmatpush1.msra.mxu0 0.0
        %1063 = vmatprep.subr.mxu0 0.0
        %1064 = vmatpush1.msra.mxu0 0.0
        %1065 = vmatprep.subr.mxu0 0.0
        %1066 = vmatpush1.msra.mxu0 0.0
        %1067 = vmatprep.subr.mxu0 0.0
        %1068 = vmatpush1.msra.mxu0 0.0
        %1069 = vmatprep.subr.mxu0 0.0
        %1070 = vmatpush1.msra.mxu0 0.0
        %1071 = vmatprep.subr.mxu0 0.0
        %1072 = vmatpush1.msra.mxu0 0.0
        %1073 = vmatprep.subr.mxu0 0.0
        %1074 = vmatpush1.msra.mxu0 0.0
        %1075 = vmatprep.subr.mxu0 0.0
        %1076 = vmatpush1.msra.mxu0 0.0
        %1077 = vmatprep.subr.mxu0 0.0
        %1078 = vmatpush1.msra.mxu0 0.0
        %1079 = vmatprep.subr.mxu0 0.0
        %1080 = vmatpush1.msra.mxu0 0.0
        %1081 = vmatprep.subr.mxu0 0.0
        %1082 = vmatpush1.msra.mxu0 0.0
        %1083 = vmatprep.subr.mxu0 0.0
        %1084 = vmatpush1.msra.mxu0 0.0
        %1085 = vmatprep.subr.mxu0 0.0
        %1086 = vmatpush1.msra.mxu0 0.0
        %1087 = vmatprep.subr.mxu0 0.0
        %1088 = vmatpush1.msra.mxu0 0.0
        %1089 = vmatprep.subr.mxu0 0.0
        %1090 = vmatpush1.msra.mxu0 0.0
        %1091 = vmatprep.subr.mxu0 0.0
        %1092 = vmatpush1.msra.mxu0 %v618
        %1093 = vmatprep.subr.mxu0 0.0
        %1094 = vmatpush2.msra.mxu0 0.0
        %1095 = vmatprep.subr.mxu0 0.0
        %1096 = vmatpush2.msra.mxu0 0.0
        %1097 = vmatprep.subr.mxu0 0.0
        %1098 = vmatpush2.msra.mxu0 0.0
        %1099 = vmatprep.subr.mxu0 0.0
        %1100 = vmatpush2.msra.mxu0 0.0
        %1101 = vmatprep.subr.mxu0 0.0
        %1102 = vmatpush2.msra.mxu0 0.0
        %1103 = vmatprep.subr.mxu0 0.0
        %1104 = vmatpush2.msra.mxu0 0.0
        %1105 = vmatprep.subr.mxu0 0.0
        %1106 = vmatpush2.msra.mxu0 0.0
        %1107 = vmatprep.subr.mxu0 0.0
        %1108 = vmatpush2.msra.mxu0 0.0
        %1109 = vmatprep.subr.mxu0 0.0
        %1110 = vmatpush2.msra.mxu0 0.0
        %1111 = vmatprep.subr.mxu0 0.0
        %1112 = vmatpush2.msra.mxu0 0.0
        %1113 = vmatprep.subr.mxu0 0.0
        %1114 = vmatpush2.msra.mxu0 0.0
        %1115 = vmatprep.subr.mxu0 0.0
        %1116 = vmatpush2.msra.mxu0 0.0
        %1117 = vmatprep.subr.mxu0 0.0
        %1118 = vmatpush2.msra.mxu0 0.0
        %1119 = vmatprep.subr.mxu0 0.0
        %1120 = vmatpush2.msra.mxu0 0.0
        %1121 = vmatprep.subr.mxu0 0.0
        %1122 = vmatpush2.msra.mxu0 0.0
        %1123 = vmatprep.subr.mxu0 0.0
        %1124 = vmatpush2.msra.mxu0 0.0
        %1125 = vmatprep.mubr.f32.mxu0 0.0
        %1126 = vmatmul.mubr.f32.gmra.mxu0 %v1059
        %v1127 = vpop.f32.mrf.mxu0
        %v1128 = vadd.f32 0.0, %v1127
        %v1129 = vpop.f32.mrf.mxu0
        %1130 = vdwg.mxu0
        %1131 = vst.msk [vmem:[%s612] sm:$0xff] %vm620, %v1128
        %p1132 = scmp.lt.s32.totalorder %s29, 1
        %s1133 = scalar_select %p1132, %s29, 1
        %p1134 = scmp.lt.s32.totalorder %s30, 3
        %s1135 = scalar_select %p1134, %s30, 3
        %p1136 = scmp.lt.s32.totalorder %s31, 0
        %s1137 = scalar_select %p1136, %s31, 0
        %s1138 = sadd.s32 %s1137, %s1135
        %s1139 = smul.addr %s1133, 4
        %s1140 = sadd.s32 %s1138, %s1139
        %s1141 = smul.addr %s1140, 8
        %s1142 = scalar_lea.vmem %s7, %s1141
        %p1143 = scmp.lt.s32.totalorder %s29, 1
        %s1144 = scalar_select %p1143, %s29, 1
        %p1145 = scmp.lt.s32.totalorder %s30, 3
        %s1146 = scalar_select %p1145, %s30, 3
        %p1147 = scmp.lt.s32.totalorder %s31, 0
        %s1148 = scalar_select %p1147, %s31, 0
        %s1149 = sadd.s32 %s1148, %s1146
        %s1150 = smul.addr %s1144, 4
        %s1151 = sadd.s32 %s1149, %s1150
        %s1152 = smul.addr %s1151, 8
        %s1153 = scalar_lea.vmem %s8, %s1152
        %s1154 = sand.u32 %s313, 1
        %s1155 = scalar_lea.sflag [#allocation3], %s1154
        %s1156 = sand.u32 %s313, 1
        %s1157 = smul.addr %s1156, 8
        %s1158 = scalar_lea.vmem [#allocation2], %s1157
        // Predicated region
        $region49: #{dist_layer_forward.9} parent=47 // pred_check
          %p1159 = pneg %p263
        $region50: #{dist_layer_forward.9} parent=47 // pred_check_branch
          %1161 = sbr.rel (%p1159) target = $region52
        $region51: #{dist_layer_forward.9} parent=47 // pred_region
          _
        $region52: #{dist_layer_forward.9} parent=47 // pred_fallthru
          _
        // Predicated region
        $region53: #{dist_layer_forward.9} parent=47 // pred_check
          %p1162 = pneg %p293
        $region54: #{dist_layer_forward.9} parent=47 // pred_check_branch
          %1164 = sbr.rel (%p1162) target = $region56
        $region55: #{dist_layer_forward.9} parent=47 // pred_region
          _
        $region56: #{dist_layer_forward.9} parent=47 // pred_fallthru
          _
        // Predicated region
        $region57: #{dist_layer_forward.9} parent=47 // pred_check
          %p1165 = pneg %p323
        $region58: #{dist_layer_forward.9} parent=47 // pred_check_branch
          %1167 = sbr.rel (%p1165) target = $region60
        $region59: #{dist_layer_forward.9} parent=47 // pred_region
          %s1169 = ssub.s32 128, 128
          %1170 = vsyncadd %s1155, %s1169
          %s1171 = sadd.s32 %s31, %s30
          %s1172 = smul.addr %s29, 4
          %s1173 = sadd.s32 %s1171, %s1172
          %s1174 = smul.addr %s1173, 128
          %s1175 = scalar_lea.hbm %s9, %s1174
          %s1177 = sshll.u32 %s1158, 4
          %s1178 = int_to_ptr.vmem [resolvable:$true] %s1177
          %1180 = dma.vmem_to_hbm [thread:$0]  %s1178, 128, %s1175, %s1155
        $region60: #{dist_layer_forward.9} parent=47 // pred_fallthru
          _
      $region48: #{dist_layer_forward.9} parent=5 // pred_fallthru
        _
      %p1181 = scmp.le.s32.totalorder 2, %s19
      // Predicated region
      $region61: #{dist_layer_forward.9} parent=5 // pred_check
        %p1182 = pneg %p1181
      $region62: #{dist_layer_forward.9} parent=5 // pred_check_branch
        %1184 = sbr.rel (%p1182) target = $region64
      $region63: #{dist_layer_forward.9} parent=5 // pred_region
        %s1185 = ssub.s32 %s19, 2
        // Predicated region
        $region65: #{dist_layer_forward.9} parent=63 // pred_check
          %p1186 = pneg %p269
        $region66: #{dist_layer_forward.9} parent=63 // pred_check_branch
          %1188 = sbr.rel (%p1186) target = $region68
        $region67: #{dist_layer_forward.9} parent=63 // pred_region
          %p1189 = scmp.lt.s32.totalorder %s32, 1
          %s1190 = scalar_select %p1189, %s32, 1
          %p1191 = scmp.lt.s32.totalorder %s33, 3
          %s1192 = scalar_select %p1191, %s33, 3
          %p1193 = scmp.lt.s32.totalorder %s34, 0
          %s1194 = scalar_select %p1193, %s34, 0
          %s1195 = sadd.s32 %s1194, %s1192
          %s1196 = smul.addr %s1190, 4
          %s1197 = sadd.s32 %s1195, %s1196
          %s1198 = smul.addr %s1197, 8
          %s1199 = scalar_lea.vmem %s7, %s1198
        $region68: #{dist_layer_forward.9} parent=63 // pred_fallthru
          _
        // Predicated region
        $region69: #{dist_layer_forward.9} parent=63 // pred_check
          %p1200 = pneg %p299
        $region70: #{dist_layer_forward.9} parent=63 // pred_check_branch
          %1202 = sbr.rel (%p1200) target = $region72
        $region71: #{dist_layer_forward.9} parent=63 // pred_region
          %p1203 = scmp.lt.s32.totalorder %s32, 1
          %s1204 = scalar_select %p1203, %s32, 1
          %p1205 = scmp.lt.s32.totalorder %s33, 3
          %s1206 = scalar_select %p1205, %s33, 3
          %p1207 = scmp.lt.s32.totalorder %s34, 0
          %s1208 = scalar_select %p1207, %s34, 0
          %s1209 = sadd.s32 %s1208, %s1206
          %s1210 = smul.addr %s1204, 4
          %s1211 = sadd.s32 %s1209, %s1210
          %s1212 = smul.addr %s1211, 8
          %s1213 = scalar_lea.vmem %s8, %s1212
        $region72: #{dist_layer_forward.9} parent=63 // pred_fallthru
          _
        // Predicated region
        $region73: #{dist_layer_forward.9} parent=63 // pred_check
          %p1214 = pneg %p329
        $region74: #{dist_layer_forward.9} parent=63 // pred_check_branch
          %1216 = sbr.rel (%p1214) target = $region76
        $region75: #{dist_layer_forward.9} parent=63 // pred_region
          %s1217 = sand.u32 %s314, 1
          %s1218 = scalar_lea.sflag [#allocation3], %s1217
          %s1219 = sand.u32 %s314, 1
          %s1220 = smul.addr %s1219, 8
          %s1221 = scalar_lea.vmem [#allocation2], %s1220
          %1222 = dma.done %s1218, 128
        $region76: #{dist_layer_forward.9} parent=63 // pred_fallthru
          _
      $region64: #{dist_layer_forward.9} parent=5 // pred_fallthru
        _
    $region6: #{dist_layer_forward.9} parent=1 // loop_footer
      %s23 = sadd.s32 1, %s19
    $region7: #{dist_layer_forward.9} parent=1 // loop_footer_branch
      %18 = sbr.rel target = $region3
    $region8: #{dist_layer_forward.9} parent=1 // loop_exit
      _
    %1223 = vsyncpa [#allocation3], 1
    %s1224 = scalar_lea.sflag [#allocation3], 1
    %1225 = vsyncpa %s1224, 1

// kernel: dist_layer_forward.10
$region0: #{dist_layer_forward.10}
  #allocation0 [shape = 'u32[]', space=smem, size = 0x4, offset = 0x4, fixed_abs, tag = 'smem constant byte address 0x4 - core index']
  #allocation1 [shape = 'u32[144,128]{1,0:T(1,128)}', space=vmem, size = 0x12000, scoped, tag = 'internal scratch']
  %s0 = inlined_call_operand.vmem [shape: f32[16,128], index: 0, kind: input, shape index: {}]
  %s1 = inlined_call_operand.vmem [shape: f32[16,128], index: 1, kind: input, shape index: {}]
  %s2 = inlined_call_operand.vmem [shape: bf16[128,128], index: 2, kind: input, shape index: {}]
  %s3 = inlined_call_operand.vmem [shape: f32[1,128], index: 3, kind: input, shape index: {}]
  %s4 = inlined_call_operand.vmem [shape: f32[1,128], index: 4, kind: input, shape index: {}]
  %s5 = inlined_call_operand.vmem [shape: f32[1,128], index: 5, kind: input, shape index: {}]
  %s6 = inlined_call_operand.vmem [shape: f32[16,128], index: 6, kind: output, shape index: {}]
  %s7 = sld [smem:[#allocation0]]
  $region34: #{dist_layer_forward.10} parent=0
    _
  %s9 = ssub.s32 1, %s7
  %s10 = scalar_select 0, %s9, %s7
  // Predicated region
  $region2: #{dist_layer_forward.10} parent=0 // pred_check
    _
  $region3: #{dist_layer_forward.10} parent=0 // pred_check_branch
    %12 = sbr.rel (0) target = $region5
  $region4: #{dist_layer_forward.10} parent=0 // pred_region
    _
  $region5: #{dist_layer_forward.10} parent=0 // pred_fallthru
    _
  // Predicated region
  $region6: #{dist_layer_forward.10} parent=0 // pred_check
    _
  $region7: #{dist_layer_forward.10} parent=0 // pred_check_branch
    %14 = sbr.rel (0) target = $region9
  $region8: #{dist_layer_forward.10} parent=0 // pred_region
    _
  $region9: #{dist_layer_forward.10} parent=0 // pred_fallthru
    _
  // Predicated region
  $region10: #{dist_layer_forward.10} parent=0 // pred_check
    _
  $region11: #{dist_layer_forward.10} parent=0 // pred_check_branch
    %16 = sbr.rel (0) target = $region13
  $region12: #{dist_layer_forward.10} parent=0 // pred_region
    _
  $region13: #{dist_layer_forward.10} parent=0 // pred_fallthru
    _
  // Predicated region
  $region14: #{dist_layer_forward.10} parent=0 // pred_check
    _
  $region15: #{dist_layer_forward.10} parent=0 // pred_check_branch
    %18 = sbr.rel (0) target = $region17
  $region16: #{dist_layer_forward.10} parent=0 // pred_region
    _
  $region17: #{dist_layer_forward.10} parent=0 // pred_fallthru
    _
  // Predicated region
  $region18: #{dist_layer_forward.10} parent=0 // pred_check
    _
  $region19: #{dist_layer_forward.10} parent=0 // pred_check_branch
    %20 = sbr.rel (0) target = $region21
  $region20: #{dist_layer_forward.10} parent=0 // pred_region
    _
  $region21: #{dist_layer_forward.10} parent=0 // pred_fallthru
    _
  // Predicated region
  $region22: #{dist_layer_forward.10} parent=0 // pred_check
    _
  $region23: #{dist_layer_forward.10} parent=0 // pred_check_branch
    %22 = sbr.rel (0) target = $region25
  $region24: #{dist_layer_forward.10} parent=0 // pred_region
    _
  $region25: #{dist_layer_forward.10} parent=0 // pred_fallthru
    _
  %v24 = vld [vmem:[%s0] sm:$0xff]
  %v25 = vld [vmem:[%s0 + $0x8] sm:$0xff]
  %v26 = vpack.c.bf16 %v25, %v24
  %v27 = vld [vmem:[%s2] sm:$0xf]
  %v28 = vld [vmem:[%s2 + $0x4] sm:$0xf]
  %v29 = vld [vmem:[%s2 + $0x8] sm:$0xf]
  %v30 = vld [vmem:[%s2 + $0xc] sm:$0xf]
  %v31 = vld [vmem:[%s2 + $0x10] sm:$0xf]
  %v32 = vld [vmem:[%s2 + $0x14] sm:$0xf]
  %v33 = vld [vmem:[%s2 + $0x18] sm:$0xf]
  %v34 = vld [vmem:[%s2 + $0x1c] sm:$0xf]
  %v35 = vld [vmem:[%s2 + $0x20] sm:$0xf]
  %v36 = vld [vmem:[%s2 + $0x24] sm:$0xf]
  %v37 = vld [vmem:[%s2 + $0x28] sm:$0xf]
  %v38 = vld [vmem:[%s2 + $0x2c] sm:$0xf]
  %v39 = vld [vmem:[%s2 + $0x30] sm:$0xf]
  %v40 = vld [vmem:[%s2 + $0x34] sm:$0xf]
  %v41 = vld [vmem:[%s2 + $0x38] sm:$0xf]
  %v42 = vld [vmem:[%s2 + $0x3c] sm:$0xf]
  %v43 = vld [vmem:[%s3] sm:$0x1]
  %v45 = vlaneseq
  %v46 = vshrl.u32 %v45, 7
  %v47 = vsub.s32 0, %v46
  %v48 = vrot.slane %v43, %v47
  %v66 = vunpack.c.l.b16 %v27
  %v67 = vunpack.c.l.b16 %v28
  %v68 = vunpack.c.l.b16 %v29
  %v69 = vunpack.c.l.b16 %v30
  %v70 = vunpack.c.l.b16 %v31
  %v71 = vunpack.c.l.b16 %v32
  %v72 = vunpack.c.l.b16 %v33
  %v73 = vunpack.c.l.b16 %v34
  %v74 = vunpack.c.l.b16 %v35
  %v75 = vunpack.c.l.b16 %v36
  %v76 = vunpack.c.l.b16 %v37
  %v77 = vunpack.c.l.b16 %v38
  %v78 = vunpack.c.l.b16 %v39
  %v79 = vunpack.c.l.b16 %v40
  %v80 = vunpack.c.l.b16 %v41
  %v81 = vunpack.c.l.b16 %v42
  %v82 = vpack.c.b16 %v67, %v66
  %v83 = vpack.c.b16 %v69, %v68
  %v84 = vpack.c.b16 %v71, %v70
  %v85 = vpack.c.b16 %v73, %v72
  %v86 = vpack.c.b16 %v75, %v74
  %v87 = vpack.c.b16 %v77, %v76
  %v88 = vpack.c.b16 %v79, %v78
  %v89 = vpack.c.b16 %v81, %v80
  %98 = vmatprep.subr.bf16.mxu0 0
  %99 = vmatpush1.bf16.msra.mxu0 %v89
  %100 = vmatprep.subr.bf16.mxu0 0
  %101 = vmatpush1.bf16.msra.mxu0 %v88
  %102 = vmatprep.subr.bf16.mxu0 0
  %103 = vmatpush1.bf16.msra.mxu0 %v87
  %104 = vmatprep.subr.bf16.mxu0 0
  %105 = vmatpush1.bf16.msra.mxu0 %v86
  %106 = vmatprep.subr.bf16.mxu0 0
  %107 = vmatpush1.bf16.msra.mxu0 %v85
  %108 = vmatprep.subr.bf16.mxu0 0
  %109 = vmatpush1.bf16.msra.mxu0 %v84
  %110 = vmatprep.subr.bf16.mxu0 0
  %111 = vmatpush1.bf16.msra.mxu0 %v83
  %112 = vmatprep.subr.bf16.mxu0 0
  %113 = vmatpush1.bf16.msra.mxu0 %v82
  %114 = vmatprep.subr.bf16.mxu0 0
  %115 = vmatpush2.bf16.msra.mxu0 0
  %116 = vmatprep.subr.bf16.mxu0 0
  %117 = vmatpush2.bf16.msra.mxu0 0
  %118 = vmatprep.subr.bf16.mxu0 0
  %119 = vmatpush2.bf16.msra.mxu0 0
  %120 = vmatprep.subr.bf16.mxu0 0
  %121 = vmatpush2.bf16.msra.mxu0 0
  %122 = vmatprep.subr.bf16.mxu0 0
  %123 = vmatpush2.bf16.msra.mxu0 0
  %124 = vmatprep.subr.bf16.mxu0 0
  %125 = vmatpush2.bf16.msra.mxu0 0
  %126 = vmatprep.subr.bf16.mxu0 0
  %127 = vmatpush2.bf16.msra.mxu0 0
  %128 = vmatprep.subr.bf16.mxu0 0
  %129 = vmatpush2.bf16.msra.mxu0 0
  %130 = vmatprep.mubr.bf16.mxu0 0
  %131 = vmatmul.mubr.bf16.gmra.mxu0 %v26
  %v132 = vpop.f32.mrf.mxu0
  %v133 = vadd.f32 %v48, %v132
  %v134 = vpop.f32.mrf.mxu0
  %v135 = vpop.f32.mrf.mxu0
  %v136 = vadd.f32 %v48, %v135
  %v137 = vpop.f32.mrf.mxu0
  %138 = vdwg.mxu0
  %v139 = vld [vmem:[%s1] sm:$0xff]
  %v140 = vld [vmem:[%s1 + $0x8] sm:$0xff]
  %v141 = vadd.f32 %v133, %v139
  %v142 = vadd.f32 %v136, %v140
  %143 = vadd.xlane.f32.xlu0 %v141
  %v144 = vpop.xlane.xlu0 %143
  %145 = vadd.xlane.f32.xlu0 %v142
  %v146 = vpop.xlane.xlu0 %145
  %v147 = vrcp.pop 128.0
  %v148 = vmul.f32 %v144, %v147
  %v149 = vmul.f32 %v146, %v147
  %v150 = vmul.f32 %v141, %v141
  %v151 = vmul.f32 %v142, %v142
  %152 = vadd.xlane.f32.xlu0 %v150
  %v153 = vpop.xlane.xlu0 %152
  %154 = vadd.xlane.f32.xlu0 %v151
  %v155 = vpop.xlane.xlu0 %154
  %v156 = vmul.f32 %v153, %v147
  %v157 = vmul.f32 %v155, %v147
  %v158 = vsub.f32 %v141, %v148
  %v159 = vsub.f32 %v142, %v149
  %v160 = vmul.f32 %v148, %v148
  %v161 = vmul.f32 %v149, %v149
  %v162 = vsub.f32 %v156, %v160
  %v163 = vsub.f32 %v157, %v161
  %v164 = vadd.f32 %v162, 1e-12
  %v165 = vadd.f32 %v163, 1e-12
  %v166 = vrsqrt.pop %v164
  %v167 = vrsqrt.pop %v165
  %v168 = vmul.f32 %v158, %v166
  %v169 = vmul.f32 %v159, %v167
  %v170 = vld [vmem:[%s4] sm:$0x1]
  %v172 = vlaneseq
  %v173 = vshrl.u32 %v172, 7
  %v174 = vsub.s32 0, %v173
  %v175 = vrot.slane %v170, %v174
  %v177 = vmul.f32 %v175, %v168
  %v178 = vmul.f32 %v175, %v169
  %v179 = vld [vmem:[%s5] sm:$0x1]
  %v181 = vlaneseq
  %v182 = vshrl.u32 %v181, 7
  %v183 = vsub.s32 0, %v182
  %v184 = vrot.slane %v179, %v183
  %v186 = vadd.f32 %v177, %v184
  %v187 = vadd.f32 %v178, %v184
  %188 = vst [vmem:[%s6] sm:$0xff] %v186
  %189 = vst [vmem:[%s6 + $0x8] sm:$0xff] %v187
  // Predicated region
  $region26: #{dist_layer_forward.10} parent=0 // pred_check
    _
  $region27: #{dist_layer_forward.10} parent=0 // pred_check_branch
    %191 = sbr.rel (0) target = $region29
  $region28: #{dist_layer_forward.10} parent=0 // pred_region
    _
  $region29: #{dist_layer_forward.10} parent=0 // pred_fallthru
    _
  // Predicated region
  $region30: #{dist_layer_forward.10} parent=0 // pred_check
    _
  $region31: #{dist_layer_forward.10} parent=0 // pred_check_branch
    %193 = sbr.rel (0) target = $region33
  $region32: #{dist_layer_forward.10} parent=0 // pred_region
    _
  $region33: #{dist_layer_forward.10} parent=0 // pred_fallthru
    _

// kernel: dist_layer_forward.13
$region0: #{dist_layer_forward.13}
  #allocation0 [shape = 'u32[]', space=smem, size = 0x4, offset = 0x4, fixed_abs, tag = 'smem constant byte address 0x4 - core index']
  #allocation1 [shape = 'u32[144,128]{1,0:T(1,128)}', space=vmem, size = 0x12000, scoped, tag = 'internal scratch']
  #allocation2 [shape = 'f32[16,128]{1,0:T(8,128)}', space=vmem, size = 0x2000, scoped, tag = 'scratch operand']
  %s0 = inlined_call_operand.vmem [shape: f32[16,128], index: 0, kind: input, shape index: {}]
  %s1 = inlined_call_operand.vmem [shape: bf16[128,512], index: 1, kind: input, shape index: {}]
  %s2 = inlined_call_operand.vmem [shape: f32[1,512], index: 2, kind: input, shape index: {}]
  %s3 = inlined_call_operand.vmem [shape: bf16[512,128], index: 3, kind: input, shape index: {}]
  %s4 = inlined_call_operand.vmem [shape: f32[1,128], index: 4, kind: input, shape index: {}]
  %s5 = inlined_call_operand.vmem [shape: f32[1,128], index: 5, kind: input, shape index: {}]
  %s6 = inlined_call_operand.vmem [shape: f32[1,128], index: 6, kind: input, shape index: {}]
  %s7 = inlined_call_operand.hbm [shape: f32[16,128], index: 7, kind: output, shape index: {}]
  %s8 = sld [smem:[#allocation0]]
  $region107: #{dist_layer_forward.13} parent=0
    _
  %s10 = ssub.s32 1, %s8
  %s11 = scalar_select 0, %s10, %s8
  $region1: #{dist_layer_forward.13} parent=0
    #allocation3 [shape = 'u8[131072]{0}', space=vmem, size = 0x20000, scoped, tag = 'input window, operand 1']
    #allocation4 [shape = 'u8[8192]{0}', space=vmem, size = 0x2000, scoped, tag = 'output window, operand 0, single buffered']
    #allocation5 [shape = 's32[2]{0}', space=sflag, size = 0x8, scoped, tag = 'scoped memory for dist_layer_forward.13']
    %12 = vsyncpa [#allocation5], 0
    loop: start=0, step=1, limit=4
    $region2: #{dist_layer_forward.13} parent=1 // loop_pre_header
      _
    $region3: #{dist_layer_forward.13} parent=1 // loop_header
      %s14 = sphi 0, %s18
      %p15 = scmp.ge.s32.totalorder %s14, 4
      %s21 = sphi 0, %s33
      %s22 = sphi 0, %s29
      %s23 = sphi 0, %s21
      %s24 = sphi 0, %s22
      %s25 = sphi 0, %s23
      %s26 = sphi 0, %s24
      %s36 = sphi 0, %s38
      %s39 = sphi 0, %s36
      %s40 = sphi 0, %s39
      %s56 = sphi 0, %s40
      %s62 = sphi 0, %s64
      %s65 = sphi 0, %s62
      %s66 = sphi 0, %s65
      %s82 = sphi 0, %s66
      %s88 = sphi 0, %s90
      %s91 = sphi 0, %s88
      %s92 = sphi 0, %s91
      %s108 = sphi 0, %s92
      %s114 = sphi 0, %s116
      %s117 = sphi 0, %s114
      %s118 = sphi 0, %s117
      %s134 = sphi 0, %s118
      %s138 = sphi 0, %s138
      %s140 = sphi 0, %s138
      %s141 = sphi 0, %s140
      %s155 = sphi 0, %s141
      %s159 = sphi 0, %s159
      %s161 = sphi 0, %s159
      %s162 = sphi 0, %s161
      %s176 = sphi 0, %s162
      %s180 = sphi 0, %s180
      %s182 = sphi 0, %s180
      %s183 = sphi 0, %s182
      %s197 = sphi 0, %s183
      %s203 = sphi 0, %s205
      %s206 = sphi 0, %s203
      %s207 = sphi 0, %s206
      %s223 = sphi 0, %s207
    $region4: #{dist_layer_forward.13} parent=1 // loop_header_branch
      %17 = sbr.rel (%p15) target = $region8
    $region5: #{dist_layer_forward.13} parent=1 // loop_body
      %s19 = ssub.s32 %s14, 1
      %s20 = ssub.s32 %s14, 2
      %s27 = sadd.s32 1, %s22
      %p28 = scmp.ge.s32.totalorder %s27, 2
      %s29 = scalar_select %p28, 0, %s27
      %s30 = sadd.s32 1, %s21
      %s31 = scalar_select %p28, %s30, %s21
      %p32 = scmp.ge.s32.totalorder %s31, 1
      %s33 = scalar_select %p32, 0, %s31
      %s34 = ssub.s32 %s21, %s33
      %p35 = scmp.eq.s32.totalorder %s34, 0
      %s37 = sadd.s32 %s36, 1
      %s38 = scalar_select %p35, %s36, %s37
      %p41 = pneg %p35
      %p42 = scmp.eq.s32.totalorder %s14, 1
      %p43 = por %p41, %p42
      %p44 = scmp.ne.s32.totalorder %s36, %s39
      %p45 = scmp.eq.s32.totalorder %s14, 0
      %p46 = por %p44, %p45
      %p47 = scmp.ne.s32.totalorder %s36, %s39
      %p48 = scmp.eq.s32.totalorder %s19, 1
      %p49 = por %p47, %p48
      %p50 = scmp.ne.s32.totalorder %s39, %s40
      %p51 = scmp.eq.s32.totalorder %s19, 0
      %p52 = por %p50, %p51
      %p53 = scmp.ne.s32.totalorder %s39, %s40
      %p54 = scmp.eq.s32.totalorder %s20, 1
      %p55 = por %p53, %p54
      %p57 = scmp.ne.s32.totalorder %s40, %s56
      %p58 = scmp.eq.s32.totalorder %s20, 0
      %p59 = por %p57, %p58
      %s60 = ssub.s32 %s22, %s29
      %p61 = scmp.eq.s32.totalorder %s60, 0
      %s63 = sadd.s32 %s62, 1
      %s64 = scalar_select %p61, %s62, %s63
      %p67 = pneg %p61
      %p68 = scmp.eq.s32.totalorder %s14, 1
      %p69 = por %p67, %p68
      %p70 = scmp.ne.s32.totalorder %s62, %s65
      %p71 = scmp.eq.s32.totalorder %s14, 0
      %p72 = por %p70, %p71
      %p73 = scmp.ne.s32.totalorder %s62, %s65
      %p74 = scmp.eq.s32.totalorder %s19, 1
      %p75 = por %p73, %p74
      %p76 = scmp.ne.s32.totalorder %s65, %s66
      %p77 = scmp.eq.s32.totalorder %s19, 0
      %p78 = por %p76, %p77
      %p79 = scmp.ne.s32.totalorder %s65, %s66
      %p80 = scmp.eq.s32.totalorder %s20, 1
      %p81 = por %p79, %p80
      %p83 = scmp.ne.s32.totalorder %s66, %s82
      %p84 = scmp.eq.s32.totalorder %s20, 0
      %p85 = por %p83, %p84
      %s86 = ssub.s32 %s22, %s29
      %p87 = scmp.eq.s32.totalorder %s86, 0
      %s89 = sadd.s32 %s88, 1
      %s90 = scalar_select %p87, %s88, %s89
      %p93 = pneg %p87
      %p94 = scmp.eq.s32.totalorder %s14, 1
      %p95 = por %p93, %p94
      %p96 = scmp.ne.s32.totalorder %s88, %s91
      %p97 = scmp.eq.s32.totalorder %s14, 0
      %p98 = por %p96, %p97
      %p99 = scmp.ne.s32.totalorder %s88, %s91
      %p100 = scmp.eq.s32.totalorder %s19, 1
      %p101 = por %p99, %p100
      %p102 = scmp.ne.s32.totalorder %s91, %s92
      %p103 = scmp.eq.s32.totalorder %s19, 0
      %p104 = por %p102, %p103
      %p105 = scmp.ne.s32.totalorder %s91, %s92
      %p106 = scmp.eq.s32.totalorder %s20, 1
      %p107 = por %p105, %p106
      %p109 = scmp.ne.s32.totalorder %s92, %s108
      %p110 = scmp.eq.s32.totalorder %s20, 0
      %p111 = por %p109, %p110
      %s112 = ssub.s32 %s22, %s29
      %p113 = scmp.eq.s32.totalorder %s112, 0
      %s115 = sadd.s32 %s114, 1
      %s116 = scalar_select %p113, %s114, %s115
      %p119 = pneg %p113
      %p120 = scmp.eq.s32.totalorder %s14, 1
      %p121 = por %p119, %p120
      %p122 = scmp.ne.s32.totalorder %s114, %s117
      %p123 = scmp.eq.s32.totalorder %s14, 0
      %p124 = por %p122, %p123
      %p125 = scmp.ne.s32.totalorder %s114, %s117
      %p126 = scmp.eq.s32.totalorder %s19, 1
      %p127 = por %p125, %p126
      %p128 = scmp.ne.s32.totalorder %s117, %s118
      %p129 = scmp.eq.s32.totalorder %s19, 0
      %p130 = por %p128, %p129
      %p131 = scmp.ne.s32.totalorder %s117, %s118
      %p132 = scmp.eq.s32.totalorder %s20, 1
      %p133 = por %p131, %p132
      %p135 = scmp.ne.s32.totalorder %s118, %s134
      %p136 = scmp.eq.s32.totalorder %s20, 0
      %p137 = por %p135, %p136
      %s139 = sadd.s32 %s138, 1
      %p142 = scmp.eq.s32.totalorder %s14, 1
      %p143 = scmp.ne.s32.totalorder %s138, %s140
      %p144 = scmp.eq.s32.totalorder %s14, 0
      %p145 = por %p143, %p144
      %p146 = scmp.ne.s32.totalorder %s138, %s140
      %p147 = scmp.eq.s32.totalorder %s19, 1
      %p148 = por %p146, %p147
      %p149 = scmp.ne.s32.totalorder %s140, %s141
      %p150 = scmp.eq.s32.totalorder %s19, 0
      %p151 = por %p149, %p150
      %p152 = scmp.ne.s32.totalorder %s140, %s141
      %p153 = scmp.eq.s32.totalorder %s20, 1
      %p154 = por %p152, %p153
      %p156 = scmp.ne.s32.totalorder %s141, %s155
      %p157 = scmp.eq.s32.totalorder %s20, 0
      %p158 = por %p156, %p157
      %s160 = sadd.s32 %s159, 1
      %p163 = scmp.eq.s32.totalorder %s14, 1
      %p164 = scmp.ne.s32.totalorder %s159, %s161
      %p165 = scmp.eq.s32.totalorder %s14, 0
      %p166 = por %p164, %p165
      %p167 = scmp.ne.s32.totalorder %s159, %s161
      %p168 = scmp.eq.s32.totalorder %s19, 1
      %p169 = por %p167, %p168
      %p170 = scmp.ne.s32.totalorder %s161, %s162
      %p171 = scmp.eq.s32.totalorder %s19, 0
      %p172 = por %p170, %p171
      %p173 = scmp.ne.s32.totalorder %s161, %s162
      %p174 = scmp.eq.s32.totalorder %s20, 1
      %p175 = por %p173, %p174
      %p177 = scmp.ne.s32.totalorder %s162, %s176
      %p178 = scmp.eq.s32.totalorder %s20, 0
      %p179 = por %p177, %p178
      %s181 = sadd.s32 %s180, 1
      %p184 = scmp.eq.s32.totalorder %s14, 1
      %p185 = scmp.ne.s32.totalorder %s180, %s182
      %p186 = scmp.eq.s32.totalorder %s14, 0
      %p187 = por %p185, %p186
      %p188 = scmp.ne.s32.totalorder %s180, %s182
      %p189 = scmp.eq.s32.totalorder %s19, 1
      %p190 = por %p188, %p189
      %p191 = scmp.ne.s32.totalorder %s182, %s183
      %p192 = scmp.eq.s32.totalorder %s19, 0
      %p193 = por %p191, %p192
      %p194 = scmp.ne.s32.totalorder %s182, %s183
      %p195 = scmp.eq.s32.totalorder %s20, 1
      %p196 = por %p194, %p195
      %p198 = scmp.ne.s32.totalorder %s183, %s197
      %p199 = scmp.eq.s32.totalorder %s20, 0
      %p200 = por %p198, %p199
      %s201 = ssub.s32 %s21, %s33
      %p202 = scmp.eq.s32.totalorder %s201, 0
      %s204 = sadd.s32 %s203, 1
      %s205 = scalar_select %p202, %s203, %s204
      %p208 = pneg %p202
      %p209 = scmp.eq.s32.totalorder %s14, 1
      %p210 = por %p208, %p209
      %p211 = scmp.ne.s32.totalorder %s203, %s206
      %p212 = scmp.eq.s32.totalorder %s14, 0
      %p213 = por %p211, %p212
      %p214 = scmp.ne.s32.totalorder %s203, %s206
      %p215 = scmp.eq.s32.totalorder %s19, 1
      %p216 = por %p214, %p215
      %p217 = scmp.ne.s32.totalorder %s206, %s207
      %p218 = scmp.eq.s32.totalorder %s19, 0
      %p219 = por %p217, %p218
      %p220 = scmp.ne.s32.totalorder %s206, %s207
      %p221 = scmp.eq.s32.totalorder %s20, 1
      %p222 = por %p220, %p221
      %p224 = scmp.ne.s32.totalorder %s207, %s223
      %p225 = scmp.eq.s32.totalorder %s20, 0
      %p226 = por %p224, %p225
      %p227 = scmp.le.s32.totalorder 1, %s14
      %p228 = scmp.lt.s32.totalorder %s14, 3
      %p229 = pnand %p227, %p228
      %p230 = pneg %p229
      // Predicated region
      $region9: #{dist_layer_forward.13} parent=5 // pred_check
        _
      $region10: #{dist_layer_forward.13} parent=5 // pred_check_branch
        %232 = sbr.rel (%p229) target = $region12
      $region11: #{dist_layer_forward.13} parent=5 // pred_region
        %s233 = ssub.s32 %s14, 1
        // Predicated region
        $region13: #{dist_layer_forward.13} parent=11 // pred_check
          %p234 = pneg %p52
        $region14: #{dist_layer_forward.13} parent=11 // pred_check_branch
          %236 = sbr.rel (%p234) target = $region16
        $region15: #{dist_layer_forward.13} parent=11 // pred_region
          %s237 = smul.u32 2, %s23
          %p238 = scmp.lt.s32.totalorder %s237, 1
          %s239 = scalar_select %p238, %s237, 1
          %s240 = smul.addr %s239, 8
          %s241 = scalar_lea.vmem %s0, %s240
          %s242 = smul.u32 2, %s23
        $region16: #{dist_layer_forward.13} parent=11 // pred_fallthru
          _
        // Predicated region
        $region17: #{dist_layer_forward.13} parent=11 // pred_check
          %p243 = pneg %p151
        $region18: #{dist_layer_forward.13} parent=11 // pred_check_branch
          %245 = sbr.rel (%p243) target = $region20
        $region19: #{dist_layer_forward.13} parent=11 // pred_region
          _
        $region20: #{dist_layer_forward.13} parent=11 // pred_fallthru
          _
        // Predicated region
        $region21: #{dist_layer_forward.13} parent=11 // pred_check
          %p246 = pneg %p172
        $region22: #{dist_layer_forward.13} parent=11 // pred_check_branch
          %248 = sbr.rel (%p246) target = $region24
        $region23: #{dist_layer_forward.13} parent=11 // pred_region
          _
        $region24: #{dist_layer_forward.13} parent=11 // pred_fallthru
          _
        // Predicated region
        $region25: #{dist_layer_forward.13} parent=11 // pred_check
          %p249 = pneg %p193
        $region26: #{dist_layer_forward.13} parent=11 // pred_check_branch
          %251 = sbr.rel (%p249) target = $region28
        $region27: #{dist_layer_forward.13} parent=11 // pred_region
          _
        $region28: #{dist_layer_forward.13} parent=11 // pred_fallthru
          _
      $region12: #{dist_layer_forward.13} parent=5 // pred_fallthru
        _
      %p252 = scmp.lt.s32.totalorder %s14, 2
      // Predicated region
      $region29: #{dist_layer_forward.13} parent=5 // pred_check
        %p253 = pneg %p252
      $region30: #{dist_layer_forward.13} parent=5 // pred_check_branch
        %255 = sbr.rel (%p253) target = $region32
      $region31: #{dist_layer_forward.13} parent=5 // pred_region
        // Predicated region
        $region33: #{dist_layer_forward.13} parent=31 // pred_check
          %p256 = pneg %p72
        $region34: #{dist_layer_forward.13} parent=31 // pred_check_branch
          %258 = sbr.rel (%p256) target = $region36
        $region35: #{dist_layer_forward.13} parent=31 // pred_region
          %s259 = sand.u32 %s62, 1
          %s260 = sand.u32 %s62, 1
          %s261 = smul.addr %s260, 128
          %s262 = scalar_lea.vmem [#allocation3], %s261
          %s263 = smul.u32 2, %s22
          %s264 = smul.addr %s263, 4
          %s265 = scalar_lea.vmem %s1, %s264
          // Predicated region
          $region37: #{dist_layer_forward.13} parent=35 // pred_check
            _
          $region38: #{dist_layer_forward.13} parent=35 // pred_check_branch
            %267 = sbr.rel (0) target = $region40
          $region39: #{dist_layer_forward.13} parent=35 // pred_region
            // Predicated region
            $region41: #{dist_layer_forward.13} parent=39 // pred_check
              _
            $region42: #{dist_layer_forward.13} parent=39 // pred_check_branch
              %269 = sbr.rel (0) target = $region44
            $region43: #{dist_layer_forward.13} parent=39 // pred_region
              // Predicated region
              $region56: #{dist_layer_forward.13} parent=43 // pred_check
                _
              $region57: #{dist_layer_forward.13} parent=43 // pred_check_branch
                %315 = sbr.rel (0) target = $region59
              $region58: #{dist_layer_forward.13} parent=43 // pred_region
                loop: start=0, step=1, limit=1
                $region60: #{dist_layer_forward.13} parent=58 // loop_pre_header
                  _
                $region61: #{dist_layer_forward.13} parent=58 // loop_header
                  %s317 = sphi 0, %s321
                  %p318 = scmp.ge.s32.totalorder %s317, 1
                  %s322 = sphi %s265, %s265
                  %s323 = sphi %s262, %s262
                $region62: #{dist_layer_forward.13} parent=58 // loop_header_branch
                  %320 = sbr.rel (%p318) target = $region66
                $region63: #{dist_layer_forward.13} parent=58 // loop_body
                  %v324 = vld [vmem:[%s322] sm:$0xff]
                  %325 = vst [vmem:[%s323] sm:$0xff] %v324
                  %v326 = vld [vmem:[%s322 + $0x10] sm:$0xff]
                  %327 = vst [vmem:[%s323 + $0x8] sm:$0xff] %v326
                  %v328 = vld [vmem:[%s322 + $0x20] sm:$0xff]
                  %329 = vst [vmem:[%s323 + $0x10] sm:$0xff] %v328
                  %v330 = vld [vmem:[%s322 + $0x30] sm:$0xff]
                  %331 = vst [vmem:[%s323 + $0x18] sm:$0xff] %v330
                  %v332 = vld [vmem:[%s322 + $0x40] sm:$0xff]
                  %333 = vst [vmem:[%s323 + $0x20] sm:$0xff] %v332
                  %v334 = vld [vmem:[%s322 + $0x50] sm:$0xff]
                  %335 = vst [vmem:[%s323 + $0x28] sm:$0xff] %v334
                  %v336 = vld [vmem:[%s322 + $0x60] sm:$0xff]
                  %337 = vst [vmem:[%s323 + $0x30] sm:$0xff] %v336
                  %v338 = vld [vmem:[%s322 + $0x70] sm:$0xff]
                  %339 = vst [vmem:[%s323 + $0x38] sm:$0xff] %v338
                  %v340 = vld [vmem:[%s322 + $0x80] sm:$0xff]
                  %341 = vst [vmem:[%s323 + $0x40] sm:$0xff] %v340
                  %v342 = vld [vmem:[%s322 + $0x90] sm:$0xff]
                  %343 = vst [vmem:[%s323 + $0x48] sm:$0xff] %v342
                  %v344 = vld [vmem:[%s322 + $0xa0] sm:$0xff]
                  %345 = vst [vmem:[%s323 + $0x50] sm:$0xff] %v344
                  %v346 = vld [vmem:[%s322 + $0xb0] sm:$0xff]
                  %347 = vst [vmem:[%s323 + $0x58] sm:$0xff] %v346
                  %v348 = vld [vmem:[%s322 + $0xc0] sm:$0xff]
                  %349 = vst [vmem:[%s323 + $0x60] sm:$0xff] %v348
                  %v350 = vld [vmem:[%s322 + $0xd0] sm:$0xff]
                  %351 = vst [vmem:[%s323 + $0x68] sm:$0xff] %v350
                  %v352 = vld [vmem:[%s322 + $0xe0] sm:$0xff]
                  %353 = vst [vmem:[%s323 + $0x70] sm:$0xff] %v352
                  %v354 = vld [vmem:[%s322 + $0xf0] sm:$0xff]
                  %355 = vst [vmem:[%s323 + $0x78] sm:$0xff] %v354
                $region64: #{dist_layer_forward.13} parent=58 // loop_footer
                  %s321 = sadd.s32 1, %s317
                $region65: #{dist_layer_forward.13} parent=58 // loop_footer_branch
                  %316 = sbr.rel target = $region61
                $region66: #{dist_layer_forward.13} parent=58 // loop_exit
                  _
              $region59: #{dist_layer_forward.13} parent=43 // pred_fallthru
                _
              // Predicated region
              $region67: #{dist_layer_forward.13} parent=43 // pred_check
                _
              $region68: #{dist_layer_forward.13} parent=43 // pred_check_branch
                %357 = sbr.rel target = $region70
              $region69: #{dist_layer_forward.13} parent=43 // pred_region
                _
              $region70: #{dist_layer_forward.13} parent=43 // pred_fallthru
                _
            $region44: #{dist_layer_forward.13} parent=39 // pred_fallthru
              _
            // Predicated region
            $region45: #{dist_layer_forward.13} parent=39 // pred_check
              _
            $region46: #{dist_layer_forward.13} parent=39 // pred_check_branch
              %271 = sbr.rel target = $region48
            $region47: #{dist_layer_forward.13} parent=39 // pred_region
              %s273 = ssub.s32 256, 1
              loop: start=0, step=1, limit=1
              $region49: #{dist_layer_forward.13} parent=47 // loop_pre_header
                _
              $region50: #{dist_layer_forward.13} parent=47 // loop_header
                %s275 = sphi 0, %s279
                %p276 = scmp.ge.s32.totalorder %s275, 1
                %s280 = sphi %s265, %s265
                %s281 = sphi %s262, %s262
              $region51: #{dist_layer_forward.13} parent=47 // loop_header_branch
                %278 = sbr.rel (%p276) target = $region55
              $region52: #{dist_layer_forward.13} parent=47 // loop_body
                %v282 = vld [vmem:[%s280] sm:%s273]
                %283 = vst [vmem:[%s281] sm:%s273] %v282
                %v284 = vld [vmem:[%s280 + $0x10] sm:%s273]
                %285 = vst [vmem:[%s281 + $0x8] sm:%s273] %v284
                %v286 = vld [vmem:[%s280 + $0x20] sm:%s273]
                %287 = vst [vmem:[%s281 + $0x10] sm:%s273] %v286
                %v288 = vld [vmem:[%s280 + $0x30] sm:%s273]
                %289 = vst [vmem:[%s281 + $0x18] sm:%s273] %v288
                %v290 = vld [vmem:[%s280 + $0x40] sm:%s273]
                %291 = vst [vmem:[%s281 + $0x20] sm:%s273] %v290
                %v292 = vld [vmem:[%s280 + $0x50] sm:%s273]
                %293 = vst [vmem:[%s281 + $0x28] sm:%s273] %v292
                %v294 = vld [vmem:[%s280 + $0x60] sm:%s273]
                %295 = vst [vmem:[%s281 + $0x30] sm:%s273] %v294
                %v296 = vld [vmem:[%s280 + $0x70] sm:%s273]
                %297 = vst [vmem:[%s281 + $0x38] sm:%s273] %v296
                %v298 = vld [vmem:[%s280 + $0x80] sm:%s273]
                %299 = vst [vmem:[%s281 + $0x40] sm:%s273] %v298
                %v300 = vld [vmem:[%s280 + $0x90] sm:%s273]
                %301 = vst [vmem:[%s281 + $0x48] sm:%s273] %v300
                %v302 = vld [vmem:[%s280 + $0xa0] sm:%s273]
                %303 = vst [vmem:[%s281 + $0x50] sm:%s273] %v302
                %v304 = vld [vmem:[%s280 + $0xb0] sm:%s273]
                %305 = vst [vmem:[%s281 + $0x58] sm:%s273] %v304
                %v306 = vld [vmem:[%s280 + $0xc0] sm:%s273]
                %307 = vst [vmem:[%s281 + $0x60] sm:%s273] %v306
                %v308 = vld [vmem:[%s280 + $0xd0] sm:%s273]
                %309 = vst [vmem:[%s281 + $0x68] sm:%s273] %v308
                %v310 = vld [vmem:[%s280 + $0xe0] sm:%s273]
                %311 = vst [vmem:[%s281 + $0x70] sm:%s273] %v310
                %v312 = vld [vmem:[%s280 + $0xf0] sm:%s273]
                %313 = vst [vmem:[%s281 + $0x78] sm:%s273] %v312
              $region53: #{dist_layer_forward.13} parent=47 // loop_footer
                %s279 = sadd.s32 1, %s275
              $region54: #{dist_layer_forward.13} parent=47 // loop_footer_branch
                %274 = sbr.rel target = $region50
              $region55: #{dist_layer_forward.13} parent=47 // loop_exit
                _
            $region48: #{dist_layer_forward.13} parent=39 // pred_fallthru
              _
          $region40: #{dist_layer_forward.13} parent=35 // pred_fallthru
            _
          %358 = vnop
        $region36: #{dist_layer_forward.13} parent=31 // pred_fallthru
          _
        // Predicated region
        $region71: #{dist_layer_forward.13} parent=31 // pred_check
          %p359 = pneg %p98
        $region72: #{dist_layer_forward.13} parent=31 // pred_check_branch
          %361 = sbr.rel (%p359) target = $region74
        $region73: #{dist_layer_forward.13} parent=31 // pred_region
          %s362 = smul.u32 2, %s22
          %p363 = scmp.lt.s32.totalorder %s362, 3
          %s364 = scalar_select %p363, %s362, 3
          %s365 = scalar_lea.vmem %s2, %s364
          %s366 = smul.u32 2, %s22
        $region74: #{dist_layer_forward.13} parent=31 // pred_fallthru
          _
        // Predicated region
        $region75: #{dist_layer_forward.13} parent=31 // pred_check
          %p367 = pneg %p124
        $region76: #{dist_layer_forward.13} parent=31 // pred_check_branch
          %369 = sbr.rel (%p367) target = $region78
        $region77: #{dist_layer_forward.13} parent=31 // pred_region
          %s370 = smul.u32 32, %s22
          %p371 = scmp.lt.s32.totalorder %s370, 63
          %s372 = scalar_select %p371, %s370, 63
          %s373 = smul.addr %s372, 4
          %s374 = scalar_lea.vmem %s3, %s373
          %s375 = smul.u32 32, %s22
        $region78: #{dist_layer_forward.13} parent=31 // pred_fallthru
          _
      $region32: #{dist_layer_forward.13} parent=5 // pred_fallthru
        _
      %p376 = scmp.le.s32.totalorder 1, %s14
      %p377 = scmp.lt.s32.totalorder %s14, 3
      %p378 = pnand %p376, %p377
      %p379 = pneg %p378
      // Predicated region
      $region79: #{dist_layer_forward.13} parent=5 // pred_check
        _
      $region80: #{dist_layer_forward.13} parent=5 // pred_check_branch
        %381 = sbr.rel (%p378) target = $region82
      $region81: #{dist_layer_forward.13} parent=5 // pred_region
        %s382 = ssub.s32 %s14, 1
        %s383 = sand.u32 %s65, 1
        %s384 = sand.u32 %s65, 1
        %s385 = smul.addr %s384, 128
        %s386 = scalar_lea.vmem [#allocation3], %s385
        // Predicated region
        $region83: #{dist_layer_forward.13} parent=81 // pred_check
          %p387 = pneg %p78
        $region84: #{dist_layer_forward.13} parent=81 // pred_check_branch
          %389 = sbr.rel (%p387) target = $region86
        $region85: #{dist_layer_forward.13} parent=81 // pred_region
          _
        $region86: #{dist_layer_forward.13} parent=81 // pred_fallthru
          _
        %s390 = smul.u32 2, %s23
        %p391 = scmp.lt.s32.totalorder %s390, 1
        %s392 = scalar_select %p391, %s390, 1
        %s393 = smul.addr %s392, 8
        %s394 = scalar_lea.vmem %s0, %s393
        %p395 = pneg %p52
        %p396 = pneg %p49
        %s397 = sand.u32 %s65, 1
        %s398 = sand.u32 %s65, 1
        %s399 = smul.addr %s398, 128
        %s400 = scalar_lea.vmem [#allocation3], %s399
        %p401 = pneg %p78
        %p402 = pneg %p75
        %s403 = smul.u32 2, %s24
        %p404 = scmp.lt.s32.totalorder %s403, 3
        %s405 = scalar_select %p404, %s403, 3
        %s406 = scalar_lea.vmem %s2, %s405
        %p407 = pneg %p104
        %p408 = pneg %p101
        %s409 = smul.u32 32, %s24
        %p410 = scmp.lt.s32.totalorder %s409, 63
        %s411 = scalar_select %p410, %s409, 63
        %s412 = smul.addr %s411, 4
        %s413 = scalar_lea.vmem %s3, %s412
        %p414 = pneg %p130
        %p415 = pneg %p127
        %p416 = pneg %p151
        %p417 = pneg %p148
        %p418 = pneg %p172
        %p419 = pneg %p169
        %p420 = pneg %p193
        %p421 = pneg %p190
        %p422 = pneg %p219
        %p423 = pneg %p216
        %s424 = smul.u32 2, %s23
        %p425 = scmp.lt.s32.totalorder %s424, 1
        %s426 = scalar_select %p425, %s424, 1
        %s427 = smul.addr %s426, 8
        %s428 = scalar_lea.vmem %s0, %s427
        %s429 = smul.u32 2, %s23
        %s430 = smul.u32 2, %s24
        %s431 = smul.u32 2, %s24
        %p432 = scmp.lt.s32.totalorder %s431, 3
        %s433 = scalar_select %p432, %s431, 3
        %s434 = scalar_lea.vmem %s2, %s433
        %s435 = smul.u32 2, %s24
        %s436 = smul.u32 32, %s24
        %p437 = scmp.lt.s32.totalorder %s436, 63
        %s438 = scalar_select %p437, %s436, 63
        %s439 = smul.addr %s438, 4
        %s440 = scalar_lea.vmem %s3, %s439
        %s441 = smul.u32 32, %s24
        %s442 = smul.u32 2, %s23
        %p444 = scmp.eq.s32.totalorder %s24, 0
        // Predicated region
        $region87: #{dist_layer_forward.13} parent=81 // pred_check
          %p445 = pneg %p444
        $region88: #{dist_layer_forward.13} parent=81 // pred_check_branch
          %447 = sbr.rel (%p445) target = $region90
        $region89: #{dist_layer_forward.13} parent=81 // pred_region
          %448 = vst [vmem:[#allocation2] sm:$0xff] 0.0
          %449 = vst [vmem:[#allocation2 + $0x8] sm:$0xff] 0.0
        $region90: #{dist_layer_forward.13} parent=81 // pred_fallthru
          _
        %v450 = vld [vmem:[%s428] sm:$0xff]
        %v451 = vld [vmem:[%s428 + $0x8] sm:$0xff]
        %v452 = vpack.c.bf16 %v451, %v450
        %v453 = vld [vmem:[%s386] sm:$0xff]
        %v454 = vld [vmem:[%s386 + $0x8] sm:$0xff]
        %v455 = vld [vmem:[%s386 + $0x10] sm:$0xff]
        %v456 = vld [vmem:[%s386 + $0x18] sm:$0xff]
        %v457 = vld [vmem:[%s386 + $0x20] sm:$0xff]
        %v458 = vld [vmem:[%s386 + $0x28] sm:$0xff]
        %v459 = vld [vmem:[%s386 + $0x30] sm:$0xff]
        %v460 = vld [vmem:[%s386 + $0x38] sm:$0xff]
        %v461 = vld [vmem:[%s386 + $0x40] sm:$0xff]
        %v462 = vld [vmem:[%s386 + $0x48] sm:$0xff]
        %v463 = vld [vmem:[%s386 + $0x50] sm:$0xff]
        %v464 = vld [vmem:[%s386 + $0x58] sm:$0xff]
        %v465 = vld [vmem:[%s386 + $0x60] sm:$0xff]
        %v466 = vld [vmem:[%s386 + $0x68] sm:$0xff]
        %v467 = vld [vmem:[%s386 + $0x70] sm:$0xff]
        %v468 = vld [vmem:[%s386 + $0x78] sm:$0xff]
        %v469 = vld [vmem:[%s434] sm:$0x3]
        %v471 = vlaneseq
        %v472 = vshrl.u32 %v471, 7
        %v473 = vsub.s32 0, %v472
        %v474 = vrot.slane %v469, %v473
        %v475 = vlaneseq
        %v476 = vshrl.u32 %v475, 7
        %v477 = vsub.s32 1, %v476
        %v478 = vrot.slane %v469, %v477
        %v497 = vunpack.c.l.b16 %v453
        %v498 = vunpack.c.h.b16 %v453
        %v499 = vunpack.c.l.b16 %v454
        %v500 = vunpack.c.h.b16 %v454
        %v501 = vunpack.c.l.b16 %v455
        %v502 = vunpack.c.h.b16 %v455
        %v503 = vunpack.c.l.b16 %v456
        %v504 = vunpack.c.h.b16 %v456
        %v505 = vunpack.c.l.b16 %v457
        %v506 = vunpack.c.h.b16 %v457
        %v507 = vunpack.c.l.b16 %v458
        %v508 = vunpack.c.h.b16 %v458
        %v509 = vunpack.c.l.b16 %v459
        %v510 = vunpack.c.h.b16 %v459
        %v511 = vunpack.c.l.b16 %v460
        %v512 = vunpack.c.h.b16 %v460
        %v513 = vunpack.c.l.b16 %v461
        %v514 = vunpack.c.h.b16 %v461
        %v515 = vunpack.c.l.b16 %v462
        %v516 = vunpack.c.h.b16 %v462
        %v517 = vunpack.c.l.b16 %v463
        %v518 = vunpack.c.h.b16 %v463
        %v519 = vunpack.c.l.b16 %v464
        %v520 = vunpack.c.h.b16 %v464
        %v521 = vunpack.c.l.b16 %v465
        %v522 = vunpack.c.h.b16 %v465
        %v523 = vunpack.c.l.b16 %v466
        %v524 = vunpack.c.h.b16 %v466
        %v525 = vunpack.c.l.b16 %v467
        %v526 = vunpack.c.h.b16 %v467
        %v527 = vunpack.c.l.b16 %v468
        %v528 = vunpack.c.h.b16 %v468
        %v529 = vpack.c.b16 %v499, %v497
        %v530 = vpack.c.b16 %v500, %v498
        %v531 = vpack.c.b16 %v503, %v501
        %v532 = vpack.c.b16 %v504, %v502
        %v533 = vpack.c.b16 %v507, %v505
        %v534 = vpack.c.b16 %v508, %v506
        %v535 = vpack.c.b16 %v511, %v509
        %v536 = vpack.c.b16 %v512, %v510
        %v537 = vpack.c.b16 %v515, %v513
        %v538 = vpack.c.b16 %v516, %v514
        %v539 = vpack.c.b16 %v519, %v517
        %v540 = vpack.c.b16 %v520, %v518
        %v541 = vpack.c.b16 %v523, %v521
        %v542 = vpack.c.b16 %v524, %v522
        %v543 = vpack.c.b16 %v527, %v525
        %v544 = vpack.c.b16 %v528, %v526
        %561 = vmatprep.subr.bf16.mxu0 %v544
        %562 = vmatpush1.bf16.msra.mxu0 %v543
        %563 = vmatprep.subr.bf16.mxu0 %v542
        %564 = vmatpush1.bf16.msra.mxu0 %v541
        %565 = vmatprep.subr.bf16.mxu0 %v540
        %566 = vmatpush1.bf16.msra.mxu0 %v539
        %567 = vmatprep.subr.bf16.mxu0 %v538
        %568 = vmatpush1.bf16.msra.mxu0 %v537
        %569 = vmatprep.subr.bf16.mxu0 %v536
        %570 = vmatpush1.bf16.msra.mxu0 %v535
        %571 = vmatprep.subr.bf16.mxu0 %v534
        %572 = vmatpush1.bf16.msra.mxu0 %v533
        %573 = vmatprep.subr.bf16.mxu0 %v532
        %574 = vmatpush1.bf16.msra.mxu0 %v531
        %575 = vmatprep.subr.bf16.mxu0 %v530
        %576 = vmatpush1.bf16.msra.mxu0 %v529
        %577 = vmatprep.subr.bf16.mxu0 0
        %578 = vmatpush2.bf16.msra.mxu0 0
        %579 = vmatprep.subr.bf16.mxu0 0
        %580 = vmatpush2.bf16.msra.mxu0 0
        %581 = vmatprep.subr.bf16.mxu0 0
        %582 = vmatpush2.bf16.msra.mxu0 0
        %583 = vmatprep.subr.bf16.mxu0 0
        %584 = vmatpush2.bf16.msra.mxu0 0
        %585 = vmatprep.subr.bf16.mxu0 0
        %586 = vmatpush2.bf16.msra.mxu0 0
        %587 = vmatprep.subr.bf16.mxu0 0
        %588 = vmatpush2.bf16.msra.mxu0 0
        %589 = vmatprep.subr.bf16.mxu0 0
        %590 = vmatpush2.bf16.msra.mxu0 0
        %591 = vmatprep.subr.bf16.mxu0 0
        %592 = vmatpush2.bf16.msra.mxu0 0
        %593 = vmatprep.mubr.bf16.mxu0 0
        %594 = vmatmul.mubr.bf16.gmra.mxu0 %v452
        %v595 = vpop.f32.mrf.mxu0
        %v596 = vadd.f32 %v474, %v595
        %v597 = vpop.f32.mrf.mxu0
        %v598 = vadd.f32 %v478, %v597
        %v599 = vpop.f32.mrf.mxu0
        %v600 = vadd.f32 %v474, %v599
        %v601 = vpop.f32.mrf.mxu0
        %v602 = vadd.f32 %v478, %v601
        %603 = vdwg.mxu0
        %vm604 = vcmp.gt.f32.partialorder %v596, 0.0
        %vm605 = vcmp.gt.f32.partialorder %v598, 0.0
        %vm606 = vcmp.gt.f32.partialorder %v600, 0.0
        %vm607 = vcmp.gt.f32.partialorder %v602, 0.0
        %v608 = vmul.f32 %v596, 1.442695
        %v609 = vpow.pop %v608
        %v610 = vmul.f32 %v598, 1.442695
        %v611 = vpow.pop %v610
        %v612 = vmul.f32 %v600, 1.442695
        %v613 = vpow.pop %v612
        %v614 = vmul.f32 %v602, 1.442695
        %v615 = vpow.pop %v614
        %v616 = vsub.f32 %v609, 1.0
        %v617 = vsub.f32 %v611, 1.0
        %v618 = vsub.f32 %v613, 1.0
        %v619 = vsub.f32 %v615, 1.0
        %v620 = vsel %vm604, %v596, %v616
        %v621 = vsel %vm605, %v598, %v617
        %v622 = vsel %vm606, %v600, %v618
        %v623 = vsel %vm607, %v602, %v619
        %v624 = vld [vmem:[#allocation2] sm:$0xff]
        %v625 = vld [vmem:[#allocation2 + $0x8] sm:$0xff]
        %v626 = vpack.c.bf16 %v622, %v620
        %v627 = vpack.c.bf16 %v623, %v621
        %v628 = vld [vmem:[%s440] sm:$0xf]
        %v629 = vld [vmem:[%s440 + $0x4] sm:$0xf]
        %v630 = vld [vmem:[%s440 + $0x8] sm:$0xf]
        %v631 = vld [vmem:[%s440 + $0xc] sm:$0xf]
        %v632 = vld [vmem:[%s440 + $0x10] sm:$0xf]
        %v633 = vld [vmem:[%s440 + $0x14] sm:$0xf]
        %v634 = vld [vmem:[%s440 + $0x18] sm:$0xf]
        %v635 = vld [vmem:[%s440 + $0x1c] sm:$0xf]
        %v636 = vld [vmem:[%s440 + $0x20] sm:$0xf]
        %v637 = vld [vmem:[%s440 + $0x24] sm:$0xf]
        %v638 = vld [vmem:[%s440 + $0x28] sm:$0xf]
        %v639 = vld [vmem:[%s440 + $0x2c] sm:$0xf]
        %v640 = vld [vmem:[%s440 + $0x30] sm:$0xf]
        %v641 = vld [vmem:[%s440 + $0x34] sm:$0xf]
        %v642 = vld [vmem:[%s440 + $0x38] sm:$0xf]
        %v643 = vld [vmem:[%s440 + $0x3c] sm:$0xf]
        %v644 = vld [vmem:[%s440 + $0x40] sm:$0xf]
        %v645 = vld [vmem:[%s440 + $0x44] sm:$0xf]
        %v646 = vld [vmem:[%s440 + $0x48] sm:$0xf]
        %v647 = vld [vmem:[%s440 + $0x4c] sm:$0xf]
        %v648 = vld [vmem:[%s440 + $0x50] sm:$0xf]
        %v649 = vld [vmem:[%s440 + $0x54] sm:$0xf]
        %v650 = vld [vmem:[%s440 + $0x58] sm:$0xf]
        %v651 = vld [vmem:[%s440 + $0x5c] sm:$0xf]
        %v652 = vld [vmem:[%s440 + $0x60] sm:$0xf]
        %v653 = vld [vmem:[%s440 + $0x64] sm:$0xf]
        %v654 = vld [vmem:[%s440 + $0x68] sm:$0xf]
        %v655 = vld [vmem:[%s440 + $0x6c] sm:$0xf]
        %v656 = vld [vmem:[%s440 + $0x70] sm:$0xf]
        %v657 = vld [vmem:[%s440 + $0x74] sm:$0xf]
        %v658 = vld [vmem:[%s440 + $0x78] sm:$0xf]
        %v659 = vld [vmem:[%s440 + $0x7c] sm:$0xf]
        %v692 = vunpack.c.l.b16 %v628
        %v693 = vunpack.c.l.b16 %v629
        %v694 = vunpack.c.l.b16 %v630
        %v695 = vunpack.c.l.b16 %v631
        %v696 = vunpack.c.l.b16 %v632
        %v697 = vunpack.c.l.b16 %v633
        %v698 = vunpack.c.l.b16 %v634
        %v699 = vunpack.c.l.b16 %v635
        %v700 = vunpack.c.l.b16 %v636
        %v701 = vunpack.c.l.b16 %v637
        %v702 = vunpack.c.l.b16 %v638
        %v703 = vunpack.c.l.b16 %v639
        %v704 = vunpack.c.l.b16 %v640
        %v705 = vunpack.c.l.b16 %v641
        %v706 = vunpack.c.l.b16 %v642
        %v707 = vunpack.c.l.b16 %v643
        %v708 = vunpack.c.l.b16 %v644
        %v709 = vunpack.c.l.b16 %v645
        %v710 = vunpack.c.l.b16 %v646
        %v711 = vunpack.c.l.b16 %v647
        %v712 = vunpack.c.l.b16 %v648
        %v713 = vunpack.c.l.b16 %v649
        %v714 = vunpack.c.l.b16 %v650
        %v715 = vunpack.c.l.b16 %v651
        %v716 = vunpack.c.l.b16 %v652
        %v717 = vunpack.c.l.b16 %v653
        %v718 = vunpack.c.l.b16 %v654
        %v719 = vunpack.c.l.b16 %v655
        %v720 = vunpack.c.l.b16 %v656
        %v721 = vunpack.c.l.b16 %v657
        %v722 = vunpack.c.l.b16 %v658
        %v723 = vunpack.c.l.b16 %v659
        %v724 = vpack.c.b16 %v693, %v692
        %v725 = vpack.c.b16 %v695, %v694
        %v726 = vpack.c.b16 %v697, %v696
        %v727 = vpack.c.b16 %v699, %v698
        %v728 = vpack.c.b16 %v701, %v700
        %v729 = vpack.c.b16 %v703, %v702
        %v730 = vpack.c.b16 %v705, %v704
        %v731 = vpack.c.b16 %v707, %v706
        %v732 = vpack.c.b16 %v709, %v708
        %v733 = vpack.c.b16 %v711, %v710
        %v734 = vpack.c.b16 %v713, %v712
        %v735 = vpack.c.b16 %v715, %v714
        %v736 = vpack.c.b16 %v717, %v716
        %v737 = vpack.c.b16 %v719, %v718
        %v738 = vpack.c.b16 %v721, %v720
        %v739 = vpack.c.b16 %v723, %v722
        %756 = vmatprep.subr.bf16.mxu0 0
        %757 = vmatpush1.bf16.msra.mxu0 %v731
        %758 = vmatprep.subr.bf16.mxu0 0
        %759 = vmatpush1.bf16.msra.mxu0 %v730
        %760 = vmatprep.subr.bf16.mxu0 0
        %761 = vmatpush1.bf16.msra.mxu0 %v729
        %762 = vmatprep.subr.bf16.mxu0 0
        %763 = vmatpush1.bf16.msra.mxu0 %v728
        %764 = vmatprep.subr.bf16.mxu0 0
        %765 = vmatpush1.bf16.msra.mxu0 %v727
        %766 = vmatprep.subr.bf16.mxu0 0
        %767 = vmatpush1.bf16.msra.mxu0 %v726
        %768 = vmatprep.subr.bf16.mxu0 0
        %769 = vmatpush1.bf16.msra.mxu0 %v725
        %770 = vmatprep.subr.bf16.mxu0 0
        %771 = vmatpush1.bf16.msra.mxu0 %v724
        %772 = vmatprep.subr.bf16.mxu0 0
        %773 = vmatpush2.bf16.msra.mxu0 %v739
        %774 = vmatprep.subr.bf16.mxu0 0
        %775 = vmatpush2.bf16.msra.mxu0 %v738
        %776 = vmatprep.subr.bf16.mxu0 0
        %777 = vmatpush2.bf16.msra.mxu0 %v737
        %778 = vmatprep.subr.bf16.mxu0 0
        %779 = vmatpush2.bf16.msra.mxu0 %v736
        %780 = vmatprep.subr.bf16.mxu0 0
        %781 = vmatpush2.bf16.msra.mxu0 %v735
        %782 = vmatprep.subr.bf16.mxu0 0
        %783 = vmatpush2.bf16.msra.mxu0 %v734
        %784 = vmatprep.subr.bf16.mxu0 0
        %785 = vmatpush2.bf16.msra.mxu0 %v733
        %786 = vmatprep.subr.bf16.mxu0 0
        %787 = vmatpush2.bf16.msra.mxu0 %v732
        %788 = vmatprep.mubr.bf16.mxu0 %v627
        %789 = vmatmul.mubr.bf16.gmra.mxu0 %v626
        %v790 = vpop.f32.mrf.mxu0
        %v791 = vadd.f32 0.0, %v790
        %v792 = vpop.f32.mrf.mxu0
        %v793 = vpop.f32.mrf.mxu0
        %v794 = vadd.f32 0.0, %v793
        %v795 = vpop.f32.mrf.mxu0
        %796 = vdwg.mxu0
        %v797 = vadd.f32 %v624, %v791
        %v798 = vadd.f32 %v625, %v794
        %799 = vst [vmem:[#allocation2] sm:$0xff] %v797
        %800 = vst [vmem:[#allocation2 + $0x8] sm:$0xff] %v798
        %p801 = scmp.eq.s32.totalorder %s24, 1
        // Predicated region
        $region91: #{dist_layer_forward.13} parent=81 // pred_check
          %p802 = pneg %p801
        $region92: #{dist_layer_forward.13} parent=81 // pred_check_branch
          %804 = sbr.rel (%p802) target = $region94
        $region93: #{dist_layer_forward.13} parent=81 // pred_region
          %v805 = vld [vmem:[#allocation2] sm:$0xff]
          %v806 = vld [vmem:[#allocation2 + $0x8] sm:$0xff]
          %v807 = vld [vmem:[%s4] sm:$0x1]
          %v809 = vlaneseq
          %v810 = vshrl.u32 %v809, 7
          %v811 = vsub.s32 0, %v810
          %v812 = vrot.slane %v807, %v811
          %v814 = vadd.f32 %v805, %v812
          %v815 = vadd.f32 %v806, %v812
          %v816 = vadd.f32 %v814, %v450
          %v817 = vadd.f32 %v815, %v451
          %818 = vadd.xlane.f32.xlu0 %v816
          %v819 = vpop.xlane.xlu0 %818
          %820 = vadd.xlane.f32.xlu0 %v817
          %v821 = vpop.xlane.xlu0 %820
          %v822 = vrcp.pop 128.0
          %v823 = vmul.f32 %v819, %v822
          %v824 = vmul.f32 %v821, %v822
          %v825 = vmul.f32 %v816, %v816
          %v826 = vmul.f32 %v817, %v817
          %827 = vadd.xlane.f32.xlu0 %v825
          %v828 = vpop.xlane.xlu0 %827
          %829 = vadd.xlane.f32.xlu0 %v826
          %v830 = vpop.xlane.xlu0 %829
          %v831 = vmul.f32 %v828, %v822
          %v832 = vmul.f32 %v830, %v822
          %v833 = vsub.f32 %v816, %v823
          %v834 = vsub.f32 %v817, %v824
          %v835 = vmul.f32 %v823, %v823
          %v836 = vmul.f32 %v824, %v824
          %v837 = vsub.f32 %v831, %v835
          %v838 = vsub.f32 %v832, %v836
          %v839 = vadd.f32 %v837, 1e-12
          %v840 = vadd.f32 %v838, 1e-12
          %v841 = vrsqrt.pop %v839
          %v842 = vrsqrt.pop %v840
          %v843 = vmul.f32 %v833, %v841
          %v844 = vmul.f32 %v834, %v842
          %v845 = vld [vmem:[%s5] sm:$0x1]
          %v847 = vlaneseq
          %v848 = vshrl.u32 %v847, 7
          %v849 = vsub.s32 0, %v848
          %v850 = vrot.slane %v845, %v849
          %v852 = vmul.f32 %v850, %v843
          %v853 = vmul.f32 %v850, %v844
          %v854 = vld [vmem:[%s6] sm:$0x1]
          %v856 = vlaneseq
          %v857 = vshrl.u32 %v856, 7
          %v858 = vsub.s32 0, %v857
          %v859 = vrot.slane %v854, %v858
          %v861 = vadd.f32 %v852, %v859
          %v862 = vadd.f32 %v853, %v859
          %vm863 = vcmp.gt.f32.partialorder %v861, 0.0
          %vm864 = vcmp.gt.f32.partialorder %v862, 0.0
          %v865 = vmul.f32 %v861, 1.442695
          %v866 = vpow.pop %v865
          %v867 = vmul.f32 %v862, 1.442695
          %v868 = vpow.pop %v867
          %v869 = vsub.f32 %v866, 1.0
          %v870 = vsub.f32 %v868, 1.0
          %v871 = vsel %vm863, %v861, %v869
          %v872 = vsel %vm864, %v862, %v870
          %v873 = vadd.f32 %v871, 1.0
          %v874 = vadd.f32 %v872, 1.0
          %875 = vst [vmem:[#allocation4] sm:$0xff] %v873
          %876 = vst [vmem:[#allocation4 + $0x8] sm:$0xff] %v874
        $region94: #{dist_layer_forward.13} parent=81 // pred_fallthru
          _
        // Predicated region
        $region95: #{dist_layer_forward.13} parent=81 // pred_check
          %p877 = pneg %p216
        $region96: #{dist_layer_forward.13} parent=81 // pred_check_branch
          %879 = sbr.rel (%p877) target = $region98
        $region97: #{dist_layer_forward.13} parent=81 // pred_region
          %s880 = smul.u32 2, %s23
          %s882 = ssub.s32 256, 256
          %883 = vsyncadd [#allocation5], %s882
          %s884 = smul.addr %s880, 128
          %s885 = scalar_lea.hbm %s7, %s884
          %s886 = sshll.u32 [#allocation4], 4
          %s887 = int_to_ptr.vmem [resolvable:$true] %s886
          %892 = dma.vmem_to_hbm [thread:$0]  %s887, 256, %s885, [#allocation5], 128, 128, 8
        $region98: #{dist_layer_forward.13} parent=81 // pred_fallthru
          _
        // Predicated region
        $region99: #{dist_layer_forward.13} parent=81 // pred_check
          %p893 = pneg %p216
        $region100: #{dist_layer_forward.13} parent=81 // pred_check_branch
          %895 = sbr.rel (%p893) target = $region102
        $region101: #{dist_layer_forward.13} parent=81 // pred_region
          %896 = dma.done [#allocation5], 256
        $region102: #{dist_layer_forward.13} parent=81 // pred_fallthru
          _
      $region82: #{dist_layer_forward.13} parent=5 // pred_fallthru
        _
      %p897 = scmp.le.s32.totalorder 2, %s14
      // Predicated region
      $region103: #{dist_layer_forward.13} parent=5 // pred_check
        %p898 = pneg %p897
      $region104: #{dist_layer_forward.13} parent=5 // pred_check_branch
        %900 = sbr.rel (%p898) target = $region106
      $region105: #{dist_layer_forward.13} parent=5 // pred_region
        %s901 = ssub.s32 %s14, 2
      $region106: #{dist_layer_forward.13} parent=5 // pred_fallthru
        _
    $region6: #{dist_layer_forward.13} parent=1 // loop_footer
      %s18 = sadd.s32 1, %s14
    $region7: #{dist_layer_forward.13} parent=1 // loop_footer_branch
      %13 = sbr.rel target = $region3
    $region8: #{dist_layer_forward.13} parent=1 // loop_exit
      _
    %902 = vsyncpa [#allocation5], 1
    %s903 = scalar_lea.sflag [#allocation5], 1
    %904 = vsyncpa %s903, 1

// kernel: dist_layer_forward.12
$region0: #{dist_layer_forward.12}
  #allocation0 [shape = 'u32[]', space=smem, size = 0x4, offset = 0x4, fixed_abs, tag = 'smem constant byte address 0x4 - core index']
  #allocation1 [shape = 'u32[144,128]{1,0:T(1,128)}', space=vmem, size = 0x12000, scoped, tag = 'internal scratch']
  #allocation2 [shape = 'f32[16,128]{1,0:T(8,128)}', space=vmem, size = 0x2000, scoped, tag = 'scratch operand']
  %s0 = inlined_call_operand.vmem [shape: f32[16,128], index: 0, kind: input, shape index: {}]
  %s1 = inlined_call_operand.vmem [shape: bf16[128,512], index: 1, kind: input, shape index: {}]
  %s2 = inlined_call_operand.vmem [shape: f32[1,512], index: 2, kind: input, shape index: {}]
  %s3 = inlined_call_operand.vmem [shape: bf16[512,128], index: 3, kind: input, shape index: {}]
  %s4 = inlined_call_operand.vmem [shape: f32[1,128], index: 4, kind: input, shape index: {}]
  %s5 = inlined_call_operand.vmem [shape: f32[1,128], index: 5, kind: input, shape index: {}]
  %s6 = inlined_call_operand.vmem [shape: f32[1,128], index: 6, kind: input, shape index: {}]
  %s7 = inlined_call_operand.hbm [shape: f32[16,128], index: 7, kind: output, shape index: {}]
  %s8 = sld [smem:[#allocation0]]
  $region107: #{dist_layer_forward.12} parent=0
    _
  %s10 = ssub.s32 1, %s8
  %s11 = scalar_select 0, %s10, %s8
  $region1: #{dist_layer_forward.12} parent=0
    #allocation3 [shape = 'u8[131072]{0}', space=vmem, size = 0x20000, scoped, tag = 'input window, operand 1']
    #allocation4 [shape = 'u8[8192]{0}', space=vmem, size = 0x2000, scoped, tag = 'output window, operand 0, single buffered']
    #allocation5 [shape = 's32[2]{0}', space=sflag, size = 0x8, scoped, tag = 'scoped memory for dist_layer_forward.12']
    %12 = vsyncpa [#allocation5], 0
    loop: start=0, step=1, limit=4
    $region2: #{dist_layer_forward.12} parent=1 // loop_pre_header
      _
    $region3: #{dist_layer_forward.12} parent=1 // loop_header
      %s14 = sphi 0, %s18
      %p15 = scmp.ge.s32.totalorder %s14, 4
      %s21 = sphi 0, %s33
      %s22 = sphi 0, %s29
      %s23 = sphi 0, %s21
      %s24 = sphi 0, %s22
      %s25 = sphi 0, %s23
      %s26 = sphi 0, %s24
      %s36 = sphi 0, %s38
      %s39 = sphi 0, %s36
      %s40 = sphi 0, %s39
      %s56 = sphi 0, %s40
      %s62 = sphi 0, %s64
      %s65 = sphi 0, %s62
      %s66 = sphi 0, %s65
      %s82 = sphi 0, %s66
      %s88 = sphi 0, %s90
      %s91 = sphi 0, %s88
      %s92 = sphi 0, %s91
      %s108 = sphi 0, %s92
      %s114 = sphi 0, %s116
      %s117 = sphi 0, %s114
      %s118 = sphi 0, %s117
      %s134 = sphi 0, %s118
      %s138 = sphi 0, %s138
      %s140 = sphi 0, %s138
      %s141 = sphi 0, %s140
      %s155 = sphi 0, %s141
      %s159 = sphi 0, %s159
      %s161 = sphi 0, %s159
      %s162 = sphi 0, %s161
      %s176 = sphi 0, %s162
      %s180 = sphi 0, %s180
      %s182 = sphi 0, %s180
      %s183 = sphi 0, %s182
      %s197 = sphi 0, %s183
      %s203 = sphi 0, %s205
      %s206 = sphi 0, %s203
      %s207 = sphi 0, %s206
      %s223 = sphi 0, %s207
    $region4: #{dist_layer_forward.12} parent=1 // loop_header_branch
      %17 = sbr.rel (%p15) target = $region8
    $region5: #{dist_layer_forward.12} parent=1 // loop_body
      %s19 = ssub.s32 %s14, 1
      %s20 = ssub.s32 %s14, 2
      %s27 = sadd.s32 1, %s22
      %p28 = scmp.ge.s32.totalorder %s27, 2
      %s29 = scalar_select %p28, 0, %s27
      %s30 = sadd.s32 1, %s21
      %s31 = scalar_select %p28, %s30, %s21
      %p32 = scmp.ge.s32.totalorder %s31, 1
      %s33 = scalar_select %p32, 0, %s31
      %s34 = ssub.s32 %s21, %s33
      %p35 = scmp.eq.s32.totalorder %s34, 0
      %s37 = sadd.s32 %s36, 1
      %s38 = scalar_select %p35, %s36, %s37
      %p41 = pneg %p35
      %p42 = scmp.eq.s32.totalorder %s14, 1
      %p43 = por %p41, %p42
      %p44 = scmp.ne.s32.totalorder %s36, %s39
      %p45 = scmp.eq.s32.totalorder %s14, 0
      %p46 = por %p44, %p45
      %p47 = scmp.ne.s32.totalorder %s36, %s39
      %p48 = scmp.eq.s32.totalorder %s19, 1
      %p49 = por %p47, %p48
      %p50 = scmp.ne.s32.totalorder %s39, %s40
      %p51 = scmp.eq.s32.totalorder %s19, 0
      %p52 = por %p50, %p51
      %p53 = scmp.ne.s32.totalorder %s39, %s40
      %p54 = scmp.eq.s32.totalorder %s20, 1
      %p55 = por %p53, %p54
      %p57 = scmp.ne.s32.totalorder %s40, %s56
      %p58 = scmp.eq.s32.totalorder %s20, 0
      %p59 = por %p57, %p58
      %s60 = ssub.s32 %s22, %s29
      %p61 = scmp.eq.s32.totalorder %s60, 0
      %s63 = sadd.s32 %s62, 1
      %s64 = scalar_select %p61, %s62, %s63
      %p67 = pneg %p61
      %p68 = scmp.eq.s32.totalorder %s14, 1
      %p69 = por %p67, %p68
      %p70 = scmp.ne.s32.totalorder %s62, %s65
      %p71 = scmp.eq.s32.totalorder %s14, 0
      %p72 = por %p70, %p71
      %p73 = scmp.ne.s32.totalorder %s62, %s65
      %p74 = scmp.eq.s32.totalorder %s19, 1
      %p75 = por %p73, %p74
      %p76 = scmp.ne.s32.totalorder %s65, %s66
      %p77 = scmp.eq.s32.totalorder %s19, 0
      %p78 = por %p76, %p77
      %p79 = scmp.ne.s32.totalorder %s65, %s66
      %p80 = scmp.eq.s32.totalorder %s20, 1
      %p81 = por %p79, %p80
      %p83 = scmp.ne.s32.totalorder %s66, %s82
      %p84 = scmp.eq.s32.totalorder %s20, 0
      %p85 = por %p83, %p84
      %s86 = ssub.s32 %s22, %s29
      %p87 = scmp.eq.s32.totalorder %s86, 0
      %s89 = sadd.s32 %s88, 1
      %s90 = scalar_select %p87, %s88, %s89
      %p93 = pneg %p87
      %p94 = scmp.eq.s32.totalorder %s14, 1
      %p95 = por %p93, %p94
      %p96 = scmp.ne.s32.totalorder %s88, %s91
      %p97 = scmp.eq.s32.totalorder %s14, 0
      %p98 = por %p96, %p97
      %p99 = scmp.ne.s32.totalorder %s88, %s91
      %p100 = scmp.eq.s32.totalorder %s19, 1
      %p101 = por %p99, %p100
      %p102 = scmp.ne.s32.totalorder %s91, %s92
      %p103 = scmp.eq.s32.totalorder %s19, 0
      %p104 = por %p102, %p103
      %p105 = scmp.ne.s32.totalorder %s91, %s92
      %p106 = scmp.eq.s32.totalorder %s20, 1
      %p107 = por %p105, %p106
      %p109 = scmp.ne.s32.totalorder %s92, %s108
      %p110 = scmp.eq.s32.totalorder %s20, 0
      %p111 = por %p109, %p110
      %s112 = ssub.s32 %s22, %s29
      %p113 = scmp.eq.s32.totalorder %s112, 0
      %s115 = sadd.s32 %s114, 1
      %s116 = scalar_select %p113, %s114, %s115
      %p119 = pneg %p113
      %p120 = scmp.eq.s32.totalorder %s14, 1
      %p121 = por %p119, %p120
      %p122 = scmp.ne.s32.totalorder %s114, %s117
      %p123 = scmp.eq.s32.totalorder %s14, 0
      %p124 = por %p122, %p123
      %p125 = scmp.ne.s32.totalorder %s114, %s117
      %p126 = scmp.eq.s32.totalorder %s19, 1
      %p127 = por %p125, %p126
      %p128 = scmp.ne.s32.totalorder %s117, %s118
      %p129 = scmp.eq.s32.totalorder %s19, 0
      %p130 = por %p128, %p129
      %p131 = scmp.ne.s32.totalorder %s117, %s118
      %p132 = scmp.eq.s32.totalorder %s20, 1
      %p133 = por %p131, %p132
      %p135 = scmp.ne.s32.totalorder %s118, %s134
      %p136 = scmp.eq.s32.totalorder %s20, 0
      %p137 = por %p135, %p136
      %s139 = sadd.s32 %s138, 1
      %p142 = scmp.eq.s32.totalorder %s14, 1
      %p143 = scmp.ne.s32.totalorder %s138, %s140
      %p144 = scmp.eq.s32.totalorder %s14, 0
      %p145 = por %p143, %p144
      %p146 = scmp.ne.s32.totalorder %s138, %s140
      %p147 = scmp.eq.s32.totalorder %s19, 1
      %p148 = por %p146, %p147
      %p149 = scmp.ne.s32.totalorder %s140, %s141
      %p150 = scmp.eq.s32.totalorder %s19, 0
      %p151 = por %p149, %p150
      %p152 = scmp.ne.s32.totalorder %s140, %s141
      %p153 = scmp.eq.s32.totalorder %s20, 1
      %p154 = por %p152, %p153
      %p156 = scmp.ne.s32.totalorder %s141, %s155
      %p157 = scmp.eq.s32.totalorder %s20, 0
      %p158 = por %p156, %p157
      %s160 = sadd.s32 %s159, 1
      %p163 = scmp.eq.s32.totalorder %s14, 1
      %p164 = scmp.ne.s32.totalorder %s159, %s161
      %p165 = scmp.eq.s32.totalorder %s14, 0
      %p166 = por %p164, %p165
      %p167 = scmp.ne.s32.totalorder %s159, %s161
      %p168 = scmp.eq.s32.totalorder %s19, 1
      %p169 = por %p167, %p168
      %p170 = scmp.ne.s32.totalorder %s161, %s162
      %p171 = scmp.eq.s32.totalorder %s19, 0
      %p172 = por %p170, %p171
      %p173 = scmp.ne.s32.totalorder %s161, %s162
      %p174 = scmp.eq.s32.totalorder %s20, 1
      %p175 = por %p173, %p174
      %p177 = scmp.ne.s32.totalorder %s162, %s176
      %p178 = scmp.eq.s32.totalorder %s20, 0
      %p179 = por %p177, %p178
      %s181 = sadd.s32 %s180, 1
      %p184 = scmp.eq.s32.totalorder %s14, 1
      %p185 = scmp.ne.s32.totalorder %s180, %s182
      %p186 = scmp.eq.s32.totalorder %s14, 0
      %p187 = por %p185, %p186
      %p188 = scmp.ne.s32.totalorder %s180, %s182
      %p189 = scmp.eq.s32.totalorder %s19, 1
      %p190 = por %p188, %p189
      %p191 = scmp.ne.s32.totalorder %s182, %s183
      %p192 = scmp.eq.s32.totalorder %s19, 0
      %p193 = por %p191, %p192
      %p194 = scmp.ne.s32.totalorder %s182, %s183
      %p195 = scmp.eq.s32.totalorder %s20, 1
      %p196 = por %p194, %p195
      %p198 = scmp.ne.s32.totalorder %s183, %s197
      %p199 = scmp.eq.s32.totalorder %s20, 0
      %p200 = por %p198, %p199
      %s201 = ssub.s32 %s21, %s33
      %p202 = scmp.eq.s32.totalorder %s201, 0
      %s204 = sadd.s32 %s203, 1
      %s205 = scalar_select %p202, %s203, %s204
      %p208 = pneg %p202
      %p209 = scmp.eq.s32.totalorder %s14, 1
      %p210 = por %p208, %p209
      %p211 = scmp.ne.s32.totalorder %s203, %s206
      %p212 = scmp.eq.s32.totalorder %s14, 0
      %p213 = por %p211, %p212
      %p214 = scmp.ne.s32.totalorder %s203, %s206
      %p215 = scmp.eq.s32.totalorder %s19, 1
      %p216 = por %p214, %p215
      %p217 = scmp.ne.s32.totalorder %s206, %s207
      %p218 = scmp.eq.s32.totalorder %s19, 0
      %p219 = por %p217, %p218
      %p220 = scmp.ne.s32.totalorder %s206, %s207
      %p221 = scmp.eq.s32.totalorder %s20, 1
      %p222 = por %p220, %p221
      %p224 = scmp.ne.s32.totalorder %s207, %s223
      %p225 = scmp.eq.s32.totalorder %s20, 0
      %p226 = por %p224, %p225
      %p227 = scmp.le.s32.totalorder 1, %s14
      %p228 = scmp.lt.s32.totalorder %s14, 3
      %p229 = pnand %p227, %p228
      %p230 = pneg %p229
      // Predicated region
      $region9: #{dist_layer_forward.12} parent=5 // pred_check
        _
      $region10: #{dist_layer_forward.12} parent=5 // pred_check_branch
        %232 = sbr.rel (%p229) target = $region12
      $region11: #{dist_layer_forward.12} parent=5 // pred_region
        %s233 = ssub.s32 %s14, 1
        // Predicated region
        $region13: #{dist_layer_forward.12} parent=11 // pred_check
          %p234 = pneg %p52
        $region14: #{dist_layer_forward.12} parent=11 // pred_check_branch
          %236 = sbr.rel (%p234) target = $region16
        $region15: #{dist_layer_forward.12} parent=11 // pred_region
          %s237 = smul.u32 2, %s23
          %p238 = scmp.lt.s32.totalorder %s237, 1
          %s239 = scalar_select %p238, %s237, 1
          %s240 = smul.addr %s239, 8
          %s241 = scalar_lea.vmem %s0, %s240
          %s242 = smul.u32 2, %s23
        $region16: #{dist_layer_forward.12} parent=11 // pred_fallthru
          _
        // Predicated region
        $region17: #{dist_layer_forward.12} parent=11 // pred_check
          %p243 = pneg %p151
        $region18: #{dist_layer_forward.12} parent=11 // pred_check_branch
          %245 = sbr.rel (%p243) target = $region20
        $region19: #{dist_layer_forward.12} parent=11 // pred_region
          _
        $region20: #{dist_layer_forward.12} parent=11 // pred_fallthru
          _
        // Predicated region
        $region21: #{dist_layer_forward.12} parent=11 // pred_check
          %p246 = pneg %p172
        $region22: #{dist_layer_forward.12} parent=11 // pred_check_branch
          %248 = sbr.rel (%p246) target = $region24
        $region23: #{dist_layer_forward.12} parent=11 // pred_region
          _
        $region24: #{dist_layer_forward.12} parent=11 // pred_fallthru
          _
        // Predicated region
        $region25: #{dist_layer_forward.12} parent=11 // pred_check
          %p249 = pneg %p193
        $region26: #{dist_layer_forward.12} parent=11 // pred_check_branch
          %251 = sbr.rel (%p249) target = $region28
        $region27: #{dist_layer_forward.12} parent=11 // pred_region
          _
        $region28: #{dist_layer_forward.12} parent=11 // pred_fallthru
          _
      $region12: #{dist_layer_forward.12} parent=5 // pred_fallthru
        _
      %p252 = scmp.lt.s32.totalorder %s14, 2
      // Predicated region
      $region29: #{dist_layer_forward.12} parent=5 // pred_check
        %p253 = pneg %p252
      $region30: #{dist_layer_forward.12} parent=5 // pred_check_branch
        %255 = sbr.rel (%p253) target = $region32
      $region31: #{dist_layer_forward.12} parent=5 // pred_region
        // Predicated region
        $region33: #{dist_layer_forward.12} parent=31 // pred_check
          %p256 = pneg %p72
        $region34: #{dist_layer_forward.12} parent=31 // pred_check_branch
          %258 = sbr.rel (%p256) target = $region36
        $region35: #{dist_layer_forward.12} parent=31 // pred_region
          %s259 = sand.u32 %s62, 1
          %s260 = sand.u32 %s62, 1
          %s261 = smul.addr %s260, 128
          %s262 = scalar_lea.vmem [#allocation3], %s261
          %s263 = smul.u32 2, %s22
          %s264 = smul.addr %s263, 4
          %s265 = scalar_lea.vmem %s1, %s264
          // Predicated region
          $region37: #{dist_layer_forward.12} parent=35 // pred_check
            _
          $region38: #{dist_layer_forward.12} parent=35 // pred_check_branch
            %267 = sbr.rel (0) target = $region40
          $region39: #{dist_layer_forward.12} parent=35 // pred_region
            // Predicated region
            $region41: #{dist_layer_forward.12} parent=39 // pred_check
              _
            $region42: #{dist_layer_forward.12} parent=39 // pred_check_branch
              %269 = sbr.rel (0) target = $region44
            $region43: #{dist_layer_forward.12} parent=39 // pred_region
              // Predicated region
              $region56: #{dist_layer_forward.12} parent=43 // pred_check
                _
              $region57: #{dist_layer_forward.12} parent=43 // pred_check_branch
                %315 = sbr.rel (0) target = $region59
              $region58: #{dist_layer_forward.12} parent=43 // pred_region
                loop: start=0, step=1, limit=1
                $region60: #{dist_layer_forward.12} parent=58 // loop_pre_header
                  _
                $region61: #{dist_layer_forward.12} parent=58 // loop_header
                  %s317 = sphi 0, %s321
                  %p318 = scmp.ge.s32.totalorder %s317, 1
                  %s322 = sphi %s265, %s265
                  %s323 = sphi %s262, %s262
                $region62: #{dist_layer_forward.12} parent=58 // loop_header_branch
                  %320 = sbr.rel (%p318) target = $region66
                $region63: #{dist_layer_forward.12} parent=58 // loop_body
                  %v324 = vld [vmem:[%s322] sm:$0xff]
                  %325 = vst [vmem:[%s323] sm:$0xff] %v324
                  %v326 = vld [vmem:[%s322 + $0x10] sm:$0xff]
                  %327 = vst [vmem:[%s323 + $0x8] sm:$0xff] %v326
                  %v328 = vld [vmem:[%s322 + $0x20] sm:$0xff]
                  %329 = vst [vmem:[%s323 + $0x10] sm:$0xff] %v328
                  %v330 = vld [vmem:[%s322 + $0x30] sm:$0xff]
                  %331 = vst [vmem:[%s323 + $0x18] sm:$0xff] %v330
                  %v332 = vld [vmem:[%s322 + $0x40] sm:$0xff]
                  %333 = vst [vmem:[%s323 + $0x20] sm:$0xff] %v332
                  %v334 = vld [vmem:[%s322 + $0x50] sm:$0xff]
                  %335 = vst [vmem:[%s323 + $0x28] sm:$0xff] %v334
                  %v336 = vld [vmem:[%s322 + $0x60] sm:$0xff]
                  %337 = vst [vmem:[%s323 + $0x30] sm:$0xff] %v336
                  %v338 = vld [vmem:[%s322 + $0x70] sm:$0xff]
                  %339 = vst [vmem:[%s323 + $0x38] sm:$0xff] %v338
                  %v340 = vld [vmem:[%s322 + $0x80] sm:$0xff]
                  %341 = vst [vmem:[%s323 + $0x40] sm:$0xff] %v340
                  %v342 = vld [vmem:[%s322 + $0x90] sm:$0xff]
                  %343 = vst [vmem:[%s323 + $0x48] sm:$0xff] %v342
                  %v344 = vld [vmem:[%s322 + $0xa0] sm:$0xff]
                  %345 = vst [vmem:[%s323 + $0x50] sm:$0xff] %v344
                  %v346 = vld [vmem:[%s322 + $0xb0] sm:$0xff]
                  %347 = vst [vmem:[%s323 + $0x58] sm:$0xff] %v346
                  %v348 = vld [vmem:[%s322 + $0xc0] sm:$0xff]
                  %349 = vst [vmem:[%s323 + $0x60] sm:$0xff] %v348
                  %v350 = vld [vmem:[%s322 + $0xd0] sm:$0xff]
                  %351 = vst [vmem:[%s323 + $0x68] sm:$0xff] %v350
                  %v352 = vld [vmem:[%s322 + $0xe0] sm:$0xff]
                  %353 = vst [vmem:[%s323 + $0x70] sm:$0xff] %v352
                  %v354 = vld [vmem:[%s322 + $0xf0] sm:$0xff]
                  %355 = vst [vmem:[%s323 + $0x78] sm:$0xff] %v354
                $region64: #{dist_layer_forward.12} parent=58 // loop_footer
                  %s321 = sadd.s32 1, %s317
                $region65: #{dist_layer_forward.12} parent=58 // loop_footer_branch
                  %316 = sbr.rel target = $region61
                $region66: #{dist_layer_forward.12} parent=58 // loop_exit
                  _
              $region59: #{dist_layer_forward.12} parent=43 // pred_fallthru
                _
              // Predicated region
              $region67: #{dist_layer_forward.12} parent=43 // pred_check
                _
              $region68: #{dist_layer_forward.12} parent=43 // pred_check_branch
                %357 = sbr.rel target = $region70
              $region69: #{dist_layer_forward.12} parent=43 // pred_region
                _
              $region70: #{dist_layer_forward.12} parent=43 // pred_fallthru
                _
            $region44: #{dist_layer_forward.12} parent=39 // pred_fallthru
              _
            // Predicated region
            $region45: #{dist_layer_forward.12} parent=39 // pred_check
              _
            $region46: #{dist_layer_forward.12} parent=39 // pred_check_branch
              %271 = sbr.rel target = $region48
            $region47: #{dist_layer_forward.12} parent=39 // pred_region
              %s273 = ssub.s32 256, 1
              loop: start=0, step=1, limit=1
              $region49: #{dist_layer_forward.12} parent=47 // loop_pre_header
                _
              $region50: #{dist_layer_forward.12} parent=47 // loop_header
                %s275 = sphi 0, %s279
                %p276 = scmp.ge.s32.totalorder %s275, 1
                %s280 = sphi %s265, %s265
                %s281 = sphi %s262, %s262
              $region51: #{dist_layer_forward.12} parent=47 // loop_header_branch
                %278 = sbr.rel (%p276) target = $region55
              $region52: #{dist_layer_forward.12} parent=47 // loop_body
                %v282 = vld [vmem:[%s280] sm:%s273]
                %283 = vst [vmem:[%s281] sm:%s273] %v282
                %v284 = vld [vmem:[%s280 + $0x10] sm:%s273]
                %285 = vst [vmem:[%s281 + $0x8] sm:%s273] %v284
                %v286 = vld [vmem:[%s280 + $0x20] sm:%s273]
                %287 = vst [vmem:[%s281 + $0x10] sm:%s273] %v286
                %v288 = vld [vmem:[%s280 + $0x30] sm:%s273]
                %289 = vst [vmem:[%s281 + $0x18] sm:%s273] %v288
                %v290 = vld [vmem:[%s280 + $0x40] sm:%s273]
                %291 = vst [vmem:[%s281 + $0x20] sm:%s273] %v290
                %v292 = vld [vmem:[%s280 + $0x50] sm:%s273]
                %293 = vst [vmem:[%s281 + $0x28] sm:%s273] %v292
                %v294 = vld [vmem:[%s280 + $0x60] sm:%s273]
                %295 = vst [vmem:[%s281 + $0x30] sm:%s273] %v294
                %v296 = vld [vmem:[%s280 + $0x70] sm:%s273]
                %297 = vst [vmem:[%s281 + $0x38] sm:%s273] %v296
                %v298 = vld [vmem:[%s280 + $0x80] sm:%s273]
                %299 = vst [vmem:[%s281 + $0x40] sm:%s273] %v298
                %v300 = vld [vmem:[%s280 + $0x90] sm:%s273]
                %301 = vst [vmem:[%s281 + $0x48] sm:%s273] %v300
                %v302 = vld [vmem:[%s280 + $0xa0] sm:%s273]
                %303 = vst [vmem:[%s281 + $0x50] sm:%s273] %v302
                %v304 = vld [vmem:[%s280 + $0xb0] sm:%s273]
                %305 = vst [vmem:[%s281 + $0x58] sm:%s273] %v304
                %v306 = vld [vmem:[%s280 + $0xc0] sm:%s273]
                %307 = vst [vmem:[%s281 + $0x60] sm:%s273] %v306
                %v308 = vld [vmem:[%s280 + $0xd0] sm:%s273]
                %309 = vst [vmem:[%s281 + $0x68] sm:%s273] %v308
                %v310 = vld [vmem:[%s280 + $0xe0] sm:%s273]
                %311 = vst [vmem:[%s281 + $0x70] sm:%s273] %v310
                %v312 = vld [vmem:[%s280 + $0xf0] sm:%s273]
                %313 = vst [vmem:[%s281 + $0x78] sm:%s273] %v312
              $region53: #{dist_layer_forward.12} parent=47 // loop_footer
                %s279 = sadd.s32 1, %s275
              $region54: #{dist_layer_forward.12} parent=47 // loop_footer_branch
                %274 = sbr.rel target = $region50
              $region55: #{dist_layer_forward.12} parent=47 // loop_exit
                _
            $region48: #{dist_layer_forward.12} parent=39 // pred_fallthru
              _
          $region40: #{dist_layer_forward.12} parent=35 // pred_fallthru
            _
          %358 = vnop
        $region36: #{dist_layer_forward.12} parent=31 // pred_fallthru
          _
        // Predicated region
        $region71: #{dist_layer_forward.12} parent=31 // pred_check
          %p359 = pneg %p98
        $region72: #{dist_layer_forward.12} parent=31 // pred_check_branch
          %361 = sbr.rel (%p359) target = $region74
        $region73: #{dist_layer_forward.12} parent=31 // pred_region
          %s362 = smul.u32 2, %s22
          %p363 = scmp.lt.s32.totalorder %s362, 3
          %s364 = scalar_select %p363, %s362, 3
          %s365 = scalar_lea.vmem %s2, %s364
          %s366 = smul.u32 2, %s22
        $region74: #{dist_layer_forward.12} parent=31 // pred_fallthru
          _
        // Predicated region
        $region75: #{dist_layer_forward.12} parent=31 // pred_check
          %p367 = pneg %p124
        $region76: #{dist_layer_forward.12} parent=31 // pred_check_branch
          %369 = sbr.rel (%p367) target = $region78
        $region77: #{dist_layer_forward.12} parent=31 // pred_region
          %s370 = smul.u32 32, %s22
          %p371 = scmp.lt.s32.totalorder %s370, 63
          %s372 = scalar_select %p371, %s370, 63
          %s373 = smul.addr %s372, 4
          %s374 = scalar_lea.vmem %s3, %s373
          %s375 = smul.u32 32, %s22
        $region78: #{dist_layer_forward.12} parent=31 // pred_fallthru
          _
      $region32: #{dist_layer_forward.12} parent=5 // pred_fallthru
        _
      %p376 = scmp.le.s32.totalorder 1, %s14
      %p377 = scmp.lt.s32.totalorder %s14, 3
      %p378 = pnand %p376, %p377
      %p379 = pneg %p378
      // Predicated region
      $region79: #{dist_layer_forward.12} parent=5 // pred_check
        _
      $region80: #{dist_layer_forward.12} parent=5 // pred_check_branch
        %381 = sbr.rel (%p378) target = $region82
      $region81: #{dist_layer_forward.12} parent=5 // pred_region
        %s382 = ssub.s32 %s14, 1
        %s383 = sand.u32 %s65, 1
        %s384 = sand.u32 %s65, 1
        %s385 = smul.addr %s384, 128
        %s386 = scalar_lea.vmem [#allocation3], %s385
        // Predicated region
        $region83: #{dist_layer_forward.12} parent=81 // pred_check
          %p387 = pneg %p78
        $region84: #{dist_layer_forward.12} parent=81 // pred_check_branch
          %389 = sbr.rel (%p387) target = $region86
        $region85: #{dist_layer_forward.12} parent=81 // pred_region
          _
        $region86: #{dist_layer_forward.12} parent=81 // pred_fallthru
          _
        %s390 = smul.u32 2, %s23
        %p391 = scmp.lt.s32.totalorder %s390, 1
        %s392 = scalar_select %p391, %s390, 1
        %s393 = smul.addr %s392, 8
        %s394 = scalar_lea.vmem %s0, %s393
        %p395 = pneg %p52
        %p396 = pneg %p49
        %s397 = sand.u32 %s65, 1
        %s398 = sand.u32 %s65, 1
        %s399 = smul.addr %s398, 128
        %s400 = scalar_lea.vmem [#allocation3], %s399
        %p401 = pneg %p78
        %p402 = pneg %p75
        %s403 = smul.u32 2, %s24
        %p404 = scmp.lt.s32.totalorder %s403, 3
        %s405 = scalar_select %p404, %s403, 3
        %s406 = scalar_lea.vmem %s2, %s405
        %p407 = pneg %p104
        %p408 = pneg %p101
        %s409 = smul.u32 32, %s24
        %p410 = scmp.lt.s32.totalorder %s409, 63
        %s411 = scalar_select %p410, %s409, 63
        %s412 = smul.addr %s411, 4
        %s413 = scalar_lea.vmem %s3, %s412
        %p414 = pneg %p130
        %p415 = pneg %p127
        %p416 = pneg %p151
        %p417 = pneg %p148
        %p418 = pneg %p172
        %p419 = pneg %p169
        %p420 = pneg %p193
        %p421 = pneg %p190
        %p422 = pneg %p219
        %p423 = pneg %p216
        %s424 = smul.u32 2, %s23
        %p425 = scmp.lt.s32.totalorder %s424, 1
        %s426 = scalar_select %p425, %s424, 1
        %s427 = smul.addr %s426, 8
        %s428 = scalar_lea.vmem %s0, %s427
        %s429 = smul.u32 2, %s23
        %s430 = smul.u32 2, %s24
        %s431 = smul.u32 2, %s24
        %p432 = scmp.lt.s32.totalorder %s431, 3
        %s433 = scalar_select %p432, %s431, 3
        %s434 = scalar_lea.vmem %s2, %s433
        %s435 = smul.u32 2, %s24
        %s436 = smul.u32 32, %s24
        %p437 = scmp.lt.s32.totalorder %s436, 63
        %s438 = scalar_select %p437, %s436, 63
        %s439 = smul.addr %s438, 4
        %s440 = scalar_lea.vmem %s3, %s439
        %s441 = smul.u32 32, %s24
        %s442 = smul.u32 2, %s23
        %p444 = scmp.eq.s32.totalorder %s24, 0
        // Predicated region
        $region87: #{dist_layer_forward.12} parent=81 // pred_check
          %p445 = pneg %p444
        $region88: #{dist_layer_forward.12} parent=81 // pred_check_branch
          %447 = sbr.rel (%p445) target = $region90
        $region89: #{dist_layer_forward.12} parent=81 // pred_region
          %448 = vst [vmem:[#allocation2] sm:$0xff] 0.0
          %449 = vst [vmem:[#allocation2 + $0x8] sm:$0xff] 0.0
        $region90: #{dist_layer_forward.12} parent=81 // pred_fallthru
          _
        %v450 = vld [vmem:[%s428] sm:$0xff]
        %v451 = vld [vmem:[%s428 + $0x8] sm:$0xff]
        %v452 = vpack.c.bf16 %v451, %v450
        %v453 = vld [vmem:[%s386] sm:$0xff]
        %v454 = vld [vmem:[%s386 + $0x8] sm:$0xff]
        %v455 = vld [vmem:[%s386 + $0x10] sm:$0xff]
        %v456 = vld [vmem:[%s386 + $0x18] sm:$0xff]
        %v457 = vld [vmem:[%s386 + $0x20] sm:$0xff]
        %v458 = vld [vmem:[%s386 + $0x28] sm:$0xff]
        %v459 = vld [vmem:[%s386 + $0x30] sm:$0xff]
        %v460 = vld [vmem:[%s386 + $0x38] sm:$0xff]
        %v461 = vld [vmem:[%s386 + $0x40] sm:$0xff]
        %v462 = vld [vmem:[%s386 + $0x48] sm:$0xff]
        %v463 = vld [vmem:[%s386 + $0x50] sm:$0xff]
        %v464 = vld [vmem:[%s386 + $0x58] sm:$0xff]
        %v465 = vld [vmem:[%s386 + $0x60] sm:$0xff]
        %v466 = vld [vmem:[%s386 + $0x68] sm:$0xff]
        %v467 = vld [vmem:[%s386 + $0x70] sm:$0xff]
        %v468 = vld [vmem:[%s386 + $0x78] sm:$0xff]
        %v469 = vld [vmem:[%s434] sm:$0x3]
        %v471 = vlaneseq
        %v472 = vshrl.u32 %v471, 7
        %v473 = vsub.s32 0, %v472
        %v474 = vrot.slane %v469, %v473
        %v475 = vlaneseq
        %v476 = vshrl.u32 %v475, 7
        %v477 = vsub.s32 1, %v476
        %v478 = vrot.slane %v469, %v477
        %v497 = vunpack.c.l.b16 %v453
        %v498 = vunpack.c.h.b16 %v453
        %v499 = vunpack.c.l.b16 %v454
        %v500 = vunpack.c.h.b16 %v454
        %v501 = vunpack.c.l.b16 %v455
        %v502 = vunpack.c.h.b16 %v455
        %v503 = vunpack.c.l.b16 %v456
        %v504 = vunpack.c.h.b16 %v456
        %v505 = vunpack.c.l.b16 %v457
        %v506 = vunpack.c.h.b16 %v457
        %v507 = vunpack.c.l.b16 %v458
        %v508 = vunpack.c.h.b16 %v458
        %v509 = vunpack.c.l.b16 %v459
        %v510 = vunpack.c.h.b16 %v459
        %v511 = vunpack.c.l.b16 %v460
        %v512 = vunpack.c.h.b16 %v460
        %v513 = vunpack.c.l.b16 %v461
        %v514 = vunpack.c.h.b16 %v461
        %v515 = vunpack.c.l.b16 %v462
        %v516 = vunpack.c.h.b16 %v462
        %v517 = vunpack.c.l.b16 %v463
        %v518 = vunpack.c.h.b16 %v463
        %v519 = vunpack.c.l.b16 %v464
        %v520 = vunpack.c.h.b16 %v464
        %v521 = vunpack.c.l.b16 %v465
        %v522 = vunpack.c.h.b16 %v465
        %v523 = vunpack.c.l.b16 %v466
        %v524 = vunpack.c.h.b16 %v466
        %v525 = vunpack.c.l.b16 %v467
        %v526 = vunpack.c.h.b16 %v467
        %v527 = vunpack.c.l.b16 %v468
        %v528 = vunpack.c.h.b16 %v468
        %v529 = vpack.c.b16 %v499, %v497
        %v530 = vpack.c.b16 %v500, %v498
        %v531 = vpack.c.b16 %v503, %v501
        %v532 = vpack.c.b16 %v504, %v502
        %v533 = vpack.c.b16 %v507, %v505
        %v534 = vpack.c.b16 %v508, %v506
        %v535 = vpack.c.b16 %v511, %v509
        %v536 = vpack.c.b16 %v512, %v510
        %v537 = vpack.c.b16 %v515, %v513
        %v538 = vpack.c.b16 %v516, %v514
        %v539 = vpack.c.b16 %v519, %v517
        %v540 = vpack.c.b16 %v520, %v518
        %v541 = vpack.c.b16 %v523, %v521
        %v542 = vpack.c.b16 %v524, %v522
        %v543 = vpack.c.b16 %v527, %v525
        %v544 = vpack.c.b16 %v528, %v526
        %561 = vmatprep.subr.bf16.mxu0 %v544
        %562 = vmatpush1.bf16.msra.mxu0 %v543
        %563 = vmatprep.subr.bf16.mxu0 %v542
        %564 = vmatpush1.bf16.msra.mxu0 %v541
        %565 = vmatprep.subr.bf16.mxu0 %v540
        %566 = vmatpush1.bf16.msra.mxu0 %v539
        %567 = vmatprep.subr.bf16.mxu0 %v538
        %568 = vmatpush1.bf16.msra.mxu0 %v537
        %569 = vmatprep.subr.bf16.mxu0 %v536
        %570 = vmatpush1.bf16.msra.mxu0 %v535
        %571 = vmatprep.subr.bf16.mxu0 %v534
        %572 = vmatpush1.bf16.msra.mxu0 %v533
        %573 = vmatprep.subr.bf16.mxu0 %v532
        %574 = vmatpush1.bf16.msra.mxu0 %v531
        %575 = vmatprep.subr.bf16.mxu0 %v530
        %576 = vmatpush1.bf16.msra.mxu0 %v529
        %577 = vmatprep.subr.bf16.mxu0 0
        %578 = vmatpush2.bf16.msra.mxu0 0
        %579 = vmatprep.subr.bf16.mxu0 0
        %580 = vmatpush2.bf16.msra.mxu0 0
        %581 = vmatprep.subr.bf16.mxu0 0
        %582 = vmatpush2.bf16.msra.mxu0 0
        %583 = vmatprep.subr.bf16.mxu0 0
        %584 = vmatpush2.bf16.msra.mxu0 0
        %585 = vmatprep.subr.bf16.mxu0 0
        %586 = vmatpush2.bf16.msra.mxu0 0
        %587 = vmatprep.subr.bf16.mxu0 0
        %588 = vmatpush2.bf16.msra.mxu0 0
        %589 = vmatprep.subr.bf16.mxu0 0
        %590 = vmatpush2.bf16.msra.mxu0 0
        %591 = vmatprep.subr.bf16.mxu0 0
        %592 = vmatpush2.bf16.msra.mxu0 0
        %593 = vmatprep.mubr.bf16.mxu0 0
        %594 = vmatmul.mubr.bf16.gmra.mxu0 %v452
        %v595 = vpop.f32.mrf.mxu0
        %v596 = vadd.f32 %v474, %v595
        %v597 = vpop.f32.mrf.mxu0
        %v598 = vadd.f32 %v478, %v597
        %v599 = vpop.f32.mrf.mxu0
        %v600 = vadd.f32 %v474, %v599
        %v601 = vpop.f32.mrf.mxu0
        %v602 = vadd.f32 %v478, %v601
        %603 = vdwg.mxu0
        %vm604 = vcmp.gt.f32.partialorder %v596, 0.0
        %vm605 = vcmp.gt.f32.partialorder %v598, 0.0
        %vm606 = vcmp.gt.f32.partialorder %v600, 0.0
        %vm607 = vcmp.gt.f32.partialorder %v602, 0.0
        %v608 = vmul.f32 %v596, 1.442695
        %v609 = vpow.pop %v608
        %v610 = vmul.f32 %v598, 1.442695
        %v611 = vpow.pop %v610
        %v612 = vmul.f32 %v600, 1.442695
        %v613 = vpow.pop %v612
        %v614 = vmul.f32 %v602, 1.442695
        %v615 = vpow.pop %v614
        %v616 = vsub.f32 %v609, 1.0
        %v617 = vsub.f32 %v611, 1.0
        %v618 = vsub.f32 %v613, 1.0
        %v619 = vsub.f32 %v615, 1.0
        %v620 = vsel %vm604, %v596, %v616
        %v621 = vsel %vm605, %v598, %v617
        %v622 = vsel %vm606, %v600, %v618
        %v623 = vsel %vm607, %v602, %v619
        %v624 = vld [vmem:[#allocation2] sm:$0xff]
        %v625 = vld [vmem:[#allocation2 + $0x8] sm:$0xff]
        %v626 = vpack.c.bf16 %v622, %v620
        %v627 = vpack.c.bf16 %v623, %v621
        %v628 = vld [vmem:[%s440] sm:$0xf]
        %v629 = vld [vmem:[%s440 + $0x4] sm:$0xf]
        %v630 = vld [vmem:[%s440 + $0x8] sm:$0xf]
        %v631 = vld [vmem:[%s440 + $0xc] sm:$0xf]
        %v632 = vld [vmem:[%s440 + $0x10] sm:$0xf]
        %v633 = vld [vmem:[%s440 + $0x14] sm:$0xf]
        %v634 = vld [vmem:[%s440 + $0x18] sm:$0xf]
        %v635 = vld [vmem:[%s440 + $0x1c] sm:$0xf]
        %v636 = vld [vmem:[%s440 + $0x20] sm:$0xf]
        %v637 = vld [vmem:[%s440 + $0x24] sm:$0xf]
        %v638 = vld [vmem:[%s440 + $0x28] sm:$0xf]
        %v639 = vld [vmem:[%s440 + $0x2c] sm:$0xf]
        %v640 = vld [vmem:[%s440 + $0x30] sm:$0xf]
        %v641 = vld [vmem:[%s440 + $0x34] sm:$0xf]
        %v642 = vld [vmem:[%s440 + $0x38] sm:$0xf]
        %v643 = vld [vmem:[%s440 + $0x3c] sm:$0xf]
        %v644 = vld [vmem:[%s440 + $0x40] sm:$0xf]
        %v645 = vld [vmem:[%s440 + $0x44] sm:$0xf]
        %v646 = vld [vmem:[%s440 + $0x48] sm:$0xf]
        %v647 = vld [vmem:[%s440 + $0x4c] sm:$0xf]
        %v648 = vld [vmem:[%s440 + $0x50] sm:$0xf]
        %v649 = vld [vmem:[%s440 + $0x54] sm:$0xf]
        %v650 = vld [vmem:[%s440 + $0x58] sm:$0xf]
        %v651 = vld [vmem:[%s440 + $0x5c] sm:$0xf]
        %v652 = vld [vmem:[%s440 + $0x60] sm:$0xf]
        %v653 = vld [vmem:[%s440 + $0x64] sm:$0xf]
        %v654 = vld [vmem:[%s440 + $0x68] sm:$0xf]
        %v655 = vld [vmem:[%s440 + $0x6c] sm:$0xf]
        %v656 = vld [vmem:[%s440 + $0x70] sm:$0xf]
        %v657 = vld [vmem:[%s440 + $0x74] sm:$0xf]
        %v658 = vld [vmem:[%s440 + $0x78] sm:$0xf]
        %v659 = vld [vmem:[%s440 + $0x7c] sm:$0xf]
        %v692 = vunpack.c.l.b16 %v628
        %v693 = vunpack.c.l.b16 %v629
        %v694 = vunpack.c.l.b16 %v630
        %v695 = vunpack.c.l.b16 %v631
        %v696 = vunpack.c.l.b16 %v632
        %v697 = vunpack.c.l.b16 %v633
        %v698 = vunpack.c.l.b16 %v634
        %v699 = vunpack.c.l.b16 %v635
        %v700 = vunpack.c.l.b16 %v636
        %v701 = vunpack.c.l.b16 %v637
        %v702 = vunpack.c.l.b16 %v638
        %v703 = vunpack.c.l.b16 %v639
        %v704 = vunpack.c.l.b16 %v640
        %v705 = vunpack.c.l.b16 %v641
        %v706 = vunpack.c.l.b16 %v642
        %v707 = vunpack.c.l.b16 %v643
        %v708 = vunpack.c.l.b16 %v644
        %v709 = vunpack.c.l.b16 %v645
        %v710 = vunpack.c.l.b16 %v646
        %v711 = vunpack.c.l.b16 %v647
        %v712 = vunpack.c.l.b16 %v648
        %v713 = vunpack.c.l.b16 %v649
        %v714 = vunpack.c.l.b16 %v650
        %v715 = vunpack.c.l.b16 %v651
        %v716 = vunpack.c.l.b16 %v652
        %v717 = vunpack.c.l.b16 %v653
        %v718 = vunpack.c.l.b16 %v654
        %v719 = vunpack.c.l.b16 %v655
        %v720 = vunpack.c.l.b16 %v656
        %v721 = vunpack.c.l.b16 %v657
        %v722 = vunpack.c.l.b16 %v658
        %v723 = vunpack.c.l.b16 %v659
        %v724 = vpack.c.b16 %v693, %v692
        %v725 = vpack.c.b16 %v695, %v694
        %v726 = vpack.c.b16 %v697, %v696
        %v727 = vpack.c.b16 %v699, %v698
        %v728 = vpack.c.b16 %v701, %v700
        %v729 = vpack.c.b16 %v703, %v702
        %v730 = vpack.c.b16 %v705, %v704
        %v731 = vpack.c.b16 %v707, %v706
        %v732 = vpack.c.b16 %v709, %v708
        %v733 = vpack.c.b16 %v711, %v710
        %v734 = vpack.c.b16 %v713, %v712
        %v735 = vpack.c.b16 %v715, %v714
        %v736 = vpack.c.b16 %v717, %v716
        %v737 = vpack.c.b16 %v719, %v718
        %v738 = vpack.c.b16 %v721, %v720
        %v739 = vpack.c.b16 %v723, %v722
        %756 = vmatprep.subr.bf16.mxu0 0
        %757 = vmatpush1.bf16.msra.mxu0 %v731
        %758 = vmatprep.subr.bf16.mxu0 0
        %759 = vmatpush1.bf16.msra.mxu0 %v730
        %760 = vmatprep.subr.bf16.mxu0 0
        %761 = vmatpush1.bf16.msra.mxu0 %v729
        %762 = vmatprep.subr.bf16.mxu0 0
        %763 = vmatpush1.bf16.msra.mxu0 %v728
        %764 = vmatprep.subr.bf16.mxu0 0
        %765 = vmatpush1.bf16.msra.mxu0 %v727
        %766 = vmatprep.subr.bf16.mxu0 0
        %767 = vmatpush1.bf16.msra.mxu0 %v726
        %768 = vmatprep.subr.bf16.mxu0 0
        %769 = vmatpush1.bf16.msra.mxu0 %v725
        %770 = vmatprep.subr.bf16.mxu0 0
        %771 = vmatpush1.bf16.msra.mxu0 %v724
        %772 = vmatprep.subr.bf16.mxu0 0
        %773 = vmatpush2.bf16.msra.mxu0 %v739
        %774 = vmatprep.subr.bf16.mxu0 0
        %775 = vmatpush2.bf16.msra.mxu0 %v738
        %776 = vmatprep.subr.bf16.mxu0 0
        %777 = vmatpush2.bf16.msra.mxu0 %v737
        %778 = vmatprep.subr.bf16.mxu0 0
        %779 = vmatpush2.bf16.msra.mxu0 %v736
        %780 = vmatprep.subr.bf16.mxu0 0
        %781 = vmatpush2.bf16.msra.mxu0 %v735
        %782 = vmatprep.subr.bf16.mxu0 0
        %783 = vmatpush2.bf16.msra.mxu0 %v734
        %784 = vmatprep.subr.bf16.mxu0 0
        %785 = vmatpush2.bf16.msra.mxu0 %v733
        %786 = vmatprep.subr.bf16.mxu0 0
        %787 = vmatpush2.bf16.msra.mxu0 %v732
        %788 = vmatprep.mubr.bf16.mxu0 %v627
        %789 = vmatmul.mubr.bf16.gmra.mxu0 %v626
        %v790 = vpop.f32.mrf.mxu0
        %v791 = vadd.f32 0.0, %v790
        %v792 = vpop.f32.mrf.mxu0
        %v793 = vpop.f32.mrf.mxu0
        %v794 = vadd.f32 0.0, %v793
        %v795 = vpop.f32.mrf.mxu0
        %796 = vdwg.mxu0
        %v797 = vadd.f32 %v624, %v791
        %v798 = vadd.f32 %v625, %v794
        %799 = vst [vmem:[#allocation2] sm:$0xff] %v797
        %800 = vst [vmem:[#allocation2 + $0x8] sm:$0xff] %v798
        %p801 = scmp.eq.s32.totalorder %s24, 1
        // Predicated region
        $region91: #{dist_layer_forward.12} parent=81 // pred_check
          %p802 = pneg %p801
        $region92: #{dist_layer_forward.12} parent=81 // pred_check_branch
          %804 = sbr.rel (%p802) target = $region94
        $region93: #{dist_layer_forward.12} parent=81 // pred_region
          %v805 = vld [vmem:[#allocation2] sm:$0xff]
          %v806 = vld [vmem:[#allocation2 + $0x8] sm:$0xff]
          %v807 = vld [vmem:[%s4] sm:$0x1]
          %v809 = vlaneseq
          %v810 = vshrl.u32 %v809, 7
          %v811 = vsub.s32 0, %v810
          %v812 = vrot.slane %v807, %v811
          %v814 = vadd.f32 %v805, %v812
          %v815 = vadd.f32 %v806, %v812
          %v816 = vadd.f32 %v814, %v450
          %v817 = vadd.f32 %v815, %v451
          %818 = vadd.xlane.f32.xlu0 %v816
          %v819 = vpop.xlane.xlu0 %818
          %820 = vadd.xlane.f32.xlu0 %v817
          %v821 = vpop.xlane.xlu0 %820
          %v822 = vrcp.pop 128.0
          %v823 = vmul.f32 %v819, %v822
          %v824 = vmul.f32 %v821, %v822
          %v825 = vmul.f32 %v816, %v816
          %v826 = vmul.f32 %v817, %v817
          %827 = vadd.xlane.f32.xlu0 %v825
          %v828 = vpop.xlane.xlu0 %827
          %829 = vadd.xlane.f32.xlu0 %v826
          %v830 = vpop.xlane.xlu0 %829
          %v831 = vmul.f32 %v828, %v822
          %v832 = vmul.f32 %v830, %v822
          %v833 = vsub.f32 %v816, %v823
          %v834 = vsub.f32 %v817, %v824
          %v835 = vmul.f32 %v823, %v823
          %v836 = vmul.f32 %v824, %v824
          %v837 = vsub.f32 %v831, %v835
          %v838 = vsub.f32 %v832, %v836
          %v839 = vadd.f32 %v837, 1e-12
          %v840 = vadd.f32 %v838, 1e-12
          %v841 = vrsqrt.pop %v839
          %v842 = vrsqrt.pop %v840
          %v843 = vmul.f32 %v833, %v841
          %v844 = vmul.f32 %v834, %v842
          %v845 = vld [vmem:[%s5] sm:$0x1]
          %v847 = vlaneseq
          %v848 = vshrl.u32 %v847, 7
          %v849 = vsub.s32 0, %v848
          %v850 = vrot.slane %v845, %v849
          %v852 = vmul.f32 %v850, %v843
          %v853 = vmul.f32 %v850, %v844
          %v854 = vld [vmem:[%s6] sm:$0x1]
          %v856 = vlaneseq
          %v857 = vshrl.u32 %v856, 7
          %v858 = vsub.s32 0, %v857
          %v859 = vrot.slane %v854, %v858
          %v861 = vadd.f32 %v852, %v859
          %v862 = vadd.f32 %v853, %v859
          %863 = vst [vmem:[#allocation4] sm:$0xff] %v861
          %864 = vst [vmem:[#allocation4 + $0x8] sm:$0xff] %v862
        $region94: #{dist_layer_forward.12} parent=81 // pred_fallthru
          _
        // Predicated region
        $region95: #{dist_layer_forward.12} parent=81 // pred_check
          %p865 = pneg %p216
        $region96: #{dist_layer_forward.12} parent=81 // pred_check_branch
          %867 = sbr.rel (%p865) target = $region98
        $region97: #{dist_layer_forward.12} parent=81 // pred_region
          %s868 = smul.u32 2, %s23
          %s870 = ssub.s32 256, 256
          %871 = vsyncadd [#allocation5], %s870
          %s872 = smul.addr %s868, 128
          %s873 = scalar_lea.hbm %s7, %s872
          %s874 = sshll.u32 [#allocation4], 4
          %s875 = int_to_ptr.vmem [resolvable:$true] %s874
          %880 = dma.vmem_to_hbm [thread:$0]  %s875, 256, %s873, [#allocation5], 128, 128, 8
        $region98: #{dist_layer_forward.12} parent=81 // pred_fallthru
          _
        // Predicated region
        $region99: #{dist_layer_forward.12} parent=81 // pred_check
          %p881 = pneg %p216
        $region100: #{dist_layer_forward.12} parent=81 // pred_check_branch
          %883 = sbr.rel (%p881) target = $region102
        $region101: #{dist_layer_forward.12} parent=81 // pred_region
          %884 = dma.done [#allocation5], 256
        $region102: #{dist_layer_forward.12} parent=81 // pred_fallthru
          _
      $region82: #{dist_layer_forward.12} parent=5 // pred_fallthru
        _
      %p885 = scmp.le.s32.totalorder 2, %s14
      // Predicated region
      $region103: #{dist_layer_forward.12} parent=5 // pred_check
        %p886 = pneg %p885
      $region104: #{dist_layer_forward.12} parent=5 // pred_check_branch
        %888 = sbr.rel (%p886) target = $region106
      $region105: #{dist_layer_forward.12} parent=5 // pred_region
        %s889 = ssub.s32 %s14, 2
      $region106: #{dist_layer_forward.12} parent=5 // pred_fallthru
        _
    $region6: #{dist_layer_forward.12} parent=1 // loop_footer
      %s18 = sadd.s32 1, %s14
    $region7: #{dist_layer_forward.12} parent=1 // loop_footer_branch
      %13 = sbr.rel target = $region3
    $region8: #{dist_layer_forward.12} parent=1 // loop_exit
      _
    %890 = vsyncpa [#allocation5], 1
    %s891 = scalar_lea.sflag [#allocation5], 1
    %892 = vsyncpa %s891, 1

</llo_original>
